<compile_context>
chip_gen: v5e
topology: v5e:2x2
jax: 0.10.0
libtpu: 0.0.40
codegen_flags: <defaults>
</compile_context>

<pallas_src>
import functools

import jax
import jax.numpy as jnp
from jax.experimental import pallas as pl
from jax.experimental.pallas import tpu as pltpu


_NT = (((1,), (1,)), ((), ()))   # dot_general dims: contract the last dim of both operands


# ----------------------------------------------------------------------------
# Fused kernel: upsample + concat + DoubleConv, one batch element.
# ----------------------------------------------------------------------------
def _upsample_block_kernel(xm_ref, xsk_ref, upmat_ref, cmask_ref,
                           w1_ref, s1_ref, b1_ref,
                           w2_ref, s2_ref, b2_ref,
                           o_ref, pad_ref, *, H, W, B, Cm, Cs, Cmid):
    """
    xm_ref    : (1, hm*wm, Cm)      decode input, NHWC-flattened
    xsk_ref   : (1, H*W, Cs)        skip input, NHWC-flattened
    upmat_ref : (H*W, hm*wm)        bilinear (align_corners=True) x2 matrix
    cmask_ref : (3, H*W, 1)         column-validity masks for kx = 0, 1, 2
    w1_ref    : (9, Cm+Cs, Cmid)    conv1 taps (input channels: decode then skip)
    w2_ref    : (9, Cout, Cmid)     conv2 taps
    s*/b*     : folded BatchNorm scale / shift
    o_ref     : (1, Cout, H*W)      output, channels-first (== NCHW, lane-dense)
    pad_ref   : (2B + H*W, Ccat)    VMEM staging buffer (zero borders = conv row pad)
    """
    f32 = jnp.float32
    M = H * W
    Ccat = Cm + Cs
    Cpad = pad_ref.shape[1]

    # Zero only the row borders of the staging buffer: they implement the 3x3
    # conv's zero padding along H; column wrap-around is handled by cmask.
    # The interior rows are always fully written below before being read.
    pad_ref[0:B, :] = jnp.zeros((B, Cpad), f32)
    pad_ref[B + M:2 * B + M, :] = jnp.zeros((B, Cpad), f32)

    # ---- bilinear x2 upsample (align_corners=True) as a single MXU matmul ---
    up = jnp.dot(upmat_ref[...], xm_ref[0], preferred_element_type=f32)   # (M, Cm)
    pad_ref[B:B + M, 0:Cm] = up

    # ---- channel concat: skip channels land next to the decode channels -----
    pad_ref[B:B + M, Cm:Ccat] = xsk_ref[0]

    # ---- conv1: 3x3 'same' over cat([decode, skip]) + BN + ReLU -------------
    acc = None
    for t in range(9):
        ky, kx = divmod(t, 3)
        off = (ky - 1) * W + (kx - 1)
        xt = pad_ref[B + off:B + off + M, 0:Ccat]        # shifted tap (M, Ccat)
        if kx != 1:                                      # kill column wrap-around
            xt = xt * cmask_ref[kx]
        y_t = jnp.dot(xt, w1_ref[t], preferred_element_type=f32)
        acc = y_t if acc is None else acc + y_t
    y1 = jnp.maximum(acc * s1_ref[...] + b1_ref[...], 0.0)               # (M, Cmid)

    pad_ref[B:B + M, 0:Cmid] = y1

    # ---- conv2: 3x3 'same' + BN + ReLU, computed transposed -----------------
    # so the result is channels-first: (Cout, M) with M on the lane axis
    # (dense stores, output already in NCHW order).
    acc = None
    for t in range(9):
        ky, kx = divmod(t, 3)
        off = (ky - 1) * W + (kx - 1)
        xt = pad_ref[B + off:B + off + M, 0:Cmid]
        if kx != 1:
            xt = xt * cmask_ref[kx]
        y_t = jax.lax.dot_general(w2_ref[t], xt, _NT, preferred_element_type=f32)
        acc = y_t if acc is None else acc + y_t
    y2 = jnp.maximum(acc * s2_ref[...] + b2_ref[...], 0.0)               # (Cout, M)

    o_ref[0] = y2.astype(o_ref.dtype)


# ----------------------------------------------------------------------------
# Static helpers (built once under jit; tiny)
# ----------------------------------------------------------------------------
def bilinear_matrix(n_in, n_out):
    """1-D matrix of torch.nn.Upsample(mode='bilinear', align_corners=True)."""
    if n_in == 1:
        return jnp.ones((n_out, 1), jnp.float32)
    src = jnp.arange(n_out, dtype=jnp.float32) * ((n_in - 1) / (n_out - 1))
    i0 = jnp.clip(jnp.floor(src).astype(jnp.int32), 0, n_in - 2)
    frac = src - i0.astype(jnp.float32)
    rows = jnp.arange(n_out)
    m = jnp.zeros((n_out, n_in), jnp.float32)
    m = m.at[rows, i0].add(1.0 - frac)
    m = m.at[rows, i0 + 1].add(frac)
    return m


def column_masks(H, W):
    """(3, H*W, 1): tap column kx is valid at flat pixel m iff 0 <= (m % W) + kx - 1 < W."""
    c = jnp.arange(H * W, dtype=jnp.int32) % W
    ms = []
    for kx in range(3):
        cs = c + (kx - 1)
        ms.append(((cs >= 0) & (cs < W)).astype(jnp.float32))
    return jnp.stack(ms).reshape(3, H * W, 1)


# ----------------------------------------------------------------------------
# Parameters (deterministic, synthetic) — matches UpSample.__init__ semantics
# ----------------------------------------------------------------------------
def init_upsample_params(key, num_main_channel, num_skip_channel, num_channel_out,
                         conv_kernel=3):
    assert conv_kernel == 3
    assert num_skip_channel > 0   # TODO(synk): num_skip_channel == 0 (no-skip) variant
    cin1 = num_main_channel + num_skip_channel
    mid = num_main_channel        # skip_connection == True  ->  mid = num_main_channel
    cout = num_channel_out

    def conv_bn(k, cin, cout_):
        k1, k2, k3, k4, k5, k6 = jax.random.split(k, 6)
        w = jax.random.normal(k1, (cout_, cin, 3, 3), jnp.float32) * 0.1   # OIHW
        b = jax.random.normal(k2, (cout_,), jnp.float32) * 0.1
        gamma = 1.0 + 0.1 * jax.random.normal(k3, (cout_,), jnp.float32)
        beta = 0.1 * jax.random.normal(k4, (cout_,), jnp.float32)
        mean = 0.1 * jax.random.normal(k5, (cout_,), jnp.float32)
        var = 0.5 + jax.random.uniform(k6, (cout_,), jnp.float32)
        eps = 1e-5
        scale = gamma / jnp.sqrt(var + eps)           # eval-mode BN folded into affine
        shift = beta + (b - mean) * scale
        return {"w_oihw": w, "scale": scale, "shift": shift}

    k1, k2 = jax.random.split(key)
    return {
        "num_main": num_main_channel, "num_skip": num_skip_channel,
        "mid": mid, "out": cout,
        "conv1": conv_bn(k1, cin1, mid),
        "conv2": conv_bn(k2, mid, cout),
    }


# ----------------------------------------------------------------------------
# Forward (NCHW in / NCHW out), Pallas
# ----------------------------------------------------------------------------
def upsample_forward(params, x_main, x_skip, pad_value=-1.0):
    """UpSample.forward(x, x_encode, PadValue) for dim='2d'."""
    N, Cm, hm, wm = x_main.shape
    Ns, Cs, H, W = x_skip.shape
    assert N == Ns and Cm == params["num_main"] and Cs == params["num_skip"]
    # TODO(synk): Resize_Padding with PadValue when 2*(hm, wm) != (H, W) (odd encoder
    # sizes); the fused kernel assumes the exact 2x match of standard UNet stages.
    assert (2 * hm, 2 * wm) == (H, W), (x_main.shape, x_skip.shape)

    M = H * W
    B = ((W + 1 + 7) // 8) * 8            # zero row-border >= W + 1, sublane aligned
    Cmid, Cout = params["mid"], params["out"]
    Ccat = Cm + Cs
    assert Cmid <= Ccat                   # holds for skip_connection == True (mid == Cm)

    # --- tiny static side inputs ---------------------------------------------
    upmat = jnp.kron(bilinear_matrix(hm, H), bilinear_matrix(wm, W))      # (M, hm*wm)
    cmask = column_masks(H, W)                                            # (3, M, 1)
    w1 = params["conv1"]["w_oihw"]                                        # (Cmid, Ccat, 3, 3)
    w2 = params["conv2"]["w_oihw"]                                        # (Cout, Cmid, 3, 3)
    w1t = jnp.transpose(w1, (2, 3, 1, 0)).reshape(9, Ccat, Cmid)          # cat order: decode first
    w2t = jnp.transpose(w2, (2, 3, 0, 1)).reshape(9, Cout, Cmid)
    s1 = params["conv1"]["scale"].reshape(1, Cmid)
    b1 = params["conv1"]["shift"].reshape(1, Cmid)
    s2 = params["conv2"]["scale"].reshape(Cout, 1)
    b2 = params["conv2"]["shift"].reshape(Cout, 1)

    # --- layout plumbing (tiny): NCHW -> NHWC-flat ----------------------------
    xm = jnp.transpose(x_main, (0, 2, 3, 1)).reshape(N, hm * wm, Cm).astype(jnp.float32)
    xsk = jnp.transpose(x_skip, (0, 2, 3, 1)).reshape(N, M, Cs).astype(jnp.float32)

    kern = functools.partial(_upsample_block_kernel,
                             H=H, W=W, B=B, Cm=Cm, Cs=Cs, Cmid=Cmid)
    out = pl.pallas_call(
        kern,
        out_shape=jax.ShapeDtypeStruct((N, Cout, M), jnp.float32),
        grid=(N,),
        in_specs=[
            pl.BlockSpec((1, hm * wm, Cm), lambda n: (n, 0, 0)),
            pl.BlockSpec((1, M, Cs), lambda n: (n, 0, 0)),
            pl.BlockSpec((M, hm * wm), lambda n: (0, 0)),
            pl.BlockSpec((3, M, 1), lambda n: (0, 0, 0)),
            pl.BlockSpec((9, Ccat, Cmid), lambda n: (0, 0, 0)),
            pl.BlockSpec((1, Cmid), lambda n: (0, 0)),
            pl.BlockSpec((1, Cmid), lambda n: (0, 0)),
            pl.BlockSpec((9, Cout, Cmid), lambda n: (0, 0, 0)),
            pl.BlockSpec((Cout, 1), lambda n: (0, 0)),
            pl.BlockSpec((Cout, 1), lambda n: (0, 0)),
        ],
        out_specs=pl.BlockSpec((1, Cout, M), lambda n: (n, 0, 0)),
        scratch_shapes=[pltpu.VMEM((2 * B + M, Ccat), jnp.float32)],
        compiler_params=pltpu.CompilerParams(dimension_semantics=("parallel",)),
        # TODO(synk): for real MRI resolutions (256^2+) add an H*W tile axis to the
        # grid (with halo rows) and set vmem_limit_bytes; at 16x16 one block is fine.
    )(xm, xsk, upmat, cmask, w1t, s1, b1, w2t, s2, b2)

    return out.reshape(N, Cout, H, W)     # channels-first result == NCHW already


# ----------------------------------------------------------------------------
# Pure-JAX (XLA) reference, for the in-script correctness check
# ----------------------------------------------------------------------------
def upsample_forward_ref(params, x_main, x_skip, pad_value=-1.0):
    N, Cm, hm, wm = x_main.shape
    H, W = x_skip.shape[2], x_skip.shape[3]
    Uh = bilinear_matrix(hm, 2 * hm)
    Uw = bilinear_matrix(wm, 2 * wm)
    up = jnp.einsum("ip,jq,ncpq->ncij", Uh, Uw, x_main,
                    precision=jax.lax.Precision.HIGHEST)
    if up.shape[2:] != x_skip.shape[2:]:
        up = jnp.pad(up, ((0, 0), (0, 0), (0, H - up.shape[2]), (0, W - up.shape[3])),
                     constant_values=pad_value)
    x = jnp.concatenate([up, x_skip], axis=1)

    def conv_bn_relu(x, p):
        y = jax.lax.conv_general_dilated(
            x, p["w_oihw"], (1, 1), "SAME",
            dimension_numbers=("NCHW", "OIHW", "NCHW"),
            precision=jax.lax.Precision.HIGHEST)
        y = y * p["scale"].reshape(1, -1, 1, 1) + p["shift"].reshape(1, -1, 1, 1)
        return jnp.maximum(y, 0.0)

    x = conv_bn_relu(x, params["conv1"])
    x = conv_bn_relu(x, params["conv2"])
    return x


# ----------------------------------------------------------------------------
if __name__ == "__main__":
    # One UNet decoder stage: num_main_channel=16, num_skip_channel=8, num_channel_out=8
    num_main, num_skip, num_out = 16, 8, 8
    key = jax.random.PRNGKey(0)
    kp, ka, kb = jax.random.split(key, 3)
    params = init_upsample_params(kp, num_main, num_skip, num_out)

    x_main = jax.random.normal(ka, (2, num_main, 8, 8), jnp.float32)     # decode path
    x_skip = jax.random.normal(kb, (2, num_skip, 16, 16), jnp.float32)   # encoder skip

    fwd = jax.jit(functools.partial(upsample_forward, params))
    out = jax.block_until_ready(fwd(x_main, x_skip, -1.0))

    ref = upsample_forward_ref(params, x_main, x_skip, -1.0)
    assert out.shape == (2, num_out, 16, 16), out.shape
    assert bool(jnp.all(jnp.isfinite(out)))
    err = float(jnp.max(jnp.abs(out - ref)))
    tol = 5e-2 * (1.0 + float(jnp.max(jnp.abs(ref))))
    assert err <= tol, (err, tol)
    print("KERNEL_OK")
</pallas_src>

<mosaic_0001>
module attributes {stable_mosaic.version = 11 : i64} {
  func.func @_upsample_block_kernel(%arg0: i32, %arg1: memref<1x64x16xf32, #tpu.memory_space<vmem>>, %arg2: memref<1x256x8xf32, #tpu.memory_space<vmem>>, %arg3: memref<256x64xf32, #tpu.memory_space<vmem>>, %arg4: memref<3x256x1xf32, #tpu.memory_space<vmem>>, %arg5: memref<9x24x16xf32, #tpu.memory_space<vmem>>, %arg6: memref<1x16xf32, #tpu.memory_space<vmem>>, %arg7: memref<1x16xf32, #tpu.memory_space<vmem>>, %arg8: memref<9x8x16xf32, #tpu.memory_space<vmem>>, %arg9: memref<8x1xf32, #tpu.memory_space<vmem>>, %arg10: memref<8x1xf32, #tpu.memory_space<vmem>>, %arg11: memref<1x8x256xf32, #tpu.memory_space<vmem>>, %arg12: memref<304x24xf32, #tpu.memory_space<vmem>>) attributes {dimension_semantics = [#tpu.dimension_semantics<parallel>], iteration_bounds = array<i64: 2>, scalar_prefetch = 0 : i64, scratch_operands = 1 : i64, tpu.core_type = #tpu.core_type<tc>, window_params = [{transform_indices = @transform_0, window_bounds = array<i64: 1, 64, 16>}, {transform_indices = @transform_1, window_bounds = array<i64: 1, 256, 8>}, {pipeline_mode = #tpu.pipeline_mode<synchronous>, transform_indices = @transform_2, window_bounds = array<i64: 256, 64>}, {pipeline_mode = #tpu.pipeline_mode<synchronous>, transform_indices = @transform_3, window_bounds = array<i64: 3, 256, 1>}, {pipeline_mode = #tpu.pipeline_mode<synchronous>, transform_indices = @transform_4, window_bounds = array<i64: 9, 24, 16>}, {pipeline_mode = #tpu.pipeline_mode<synchronous>, transform_indices = @transform_5, window_bounds = array<i64: 1, 16>}, {pipeline_mode = #tpu.pipeline_mode<synchronous>, transform_indices = @transform_6, window_bounds = array<i64: 1, 16>}, {pipeline_mode = #tpu.pipeline_mode<synchronous>, transform_indices = @transform_7, window_bounds = array<i64: 9, 8, 16>}, {pipeline_mode = #tpu.pipeline_mode<synchronous>, transform_indices = @transform_8, window_bounds = array<i64: 8, 1>}, {pipeline_mode = #tpu.pipeline_mode<synchronous>, transform_indices = @transform_9, window_bounds = array<i64: 8, 1>}, {transform_indices = @transform_10, window_bounds = array<i64: 1, 8, 256>}]} {
    %cst = arith.constant 0.000000e+00 : f32
    %0 = vector.broadcast %cst : f32 to vector<24x24xf32>
    %c0 = arith.constant 0 : index
    %c0_0 = arith.constant 0 : index
    %1 = vector.load %arg12[%c0, %c0_0] : memref<304x24xf32, #tpu.memory_space<vmem>>, vector<24x24xf32>
    tpu.vector_store %arg12[%c0, %c0_0], %0 {strides = array<i32>} : memref<304x24xf32, #tpu.memory_space<vmem>>, vector<24x24xf32>,
    %cst_1 = arith.constant 0.000000e+00 : f32
    %2 = vector.broadcast %cst_1 : f32 to vector<24x24xf32>
    %c280 = arith.constant 280 : index
    %c0_2 = arith.constant 0 : index
    %3 = vector.load %arg12[%c280, %c0_2] : memref<304x24xf32, #tpu.memory_space<vmem>>, vector<24x24xf32>
    tpu.vector_store %arg12[%c280, %c0_2], %2 {strides = array<i32>} : memref<304x24xf32, #tpu.memory_space<vmem>>, vector<24x24xf32>,
    %c0_3 = arith.constant 0 : index
    %c0_4 = arith.constant 0 : index
    %4 = vector.load %arg3[%c0_3, %c0_4] : memref<256x64xf32, #tpu.memory_space<vmem>>, vector<256x64xf32>
    %c0_5 = arith.constant 0 : index
    %c0_6 = arith.constant 0 : index
    %c0_7 = arith.constant 0 : index
    %5 = vector.load %arg1[%c0_5, %c0_6, %c0_7] : memref<1x64x16xf32, #tpu.memory_space<vmem>>, vector<1x64x16xf32>
    %6 = vector.shape_cast %5 : vector<1x64x16xf32> to vector<64x16xf32>
    %cst_8 = arith.constant dense<0.000000e+00> : vector<256x16xf32>
    %7 = tpu.matmul %4, %6, %cst_8 {dimension_numbers = #tpu.dot_dimension_numbers<[1], [0], [0], [1], [0, 0, 1, 1], [], []>} : vector<256x64xf32>, vector<64x16xf32>, vector<256x16xf32> -> vector<256x16xf32>
    %c24 = arith.constant 24 : index
    %c0_9 = arith.constant 0 : index
    %8 = vector.load %arg12[%c24, %c0_9] : memref<304x24xf32, #tpu.memory_space<vmem>>, vector<256x16xf32>
    tpu.vector_store %arg12[%c24, %c0_9], %7 {strides = array<i32>} : memref<304x24xf32, #tpu.memory_space<vmem>>, vector<256x16xf32>,
    %c0_10 = arith.constant 0 : index
    %c0_11 = arith.constant 0 : index
    %c0_12 = arith.constant 0 : index
    %9 = vector.load %arg2[%c0_10, %c0_11, %c0_12] : memref<1x256x8xf32, #tpu.memory_space<vmem>>, vector<1x256x8xf32>
    %10 = vector.shape_cast %9 : vector<1x256x8xf32> to vector<256x8xf32>
    %c24_13 = arith.constant 24 : index
    %c16 = arith.constant 16 : index
    %11 = vector.load %arg12[%c24_13, %c16] : memref<304x24xf32, #tpu.memory_space<vmem>>, vector<256x8xf32>
    tpu.vector_store %arg12[%c24_13, %c16], %10 {strides = array<i32>} : memref<304x24xf32, #tpu.memory_space<vmem>>, vector<256x8xf32>,
    %c7 = arith.constant 7 : index
    %c0_14 = arith.constant 0 : index
    %12 = vector.load %arg12[%c7, %c0_14] : memref<304x24xf32, #tpu.memory_space<vmem>>, vector<256x24xf32>
    %c0_15 = arith.constant 0 : index
    %c0_16 = arith.constant 0 : index
    %c0_17 = arith.constant 0 : index
    %13 = vector.load %arg4[%c0_15, %c0_16, %c0_17] : memref<3x256x1xf32, #tpu.memory_space<vmem>>, vector<1x256x1xf32>
    %14 = vector.shape_cast %13 : vector<1x256x1xf32> to vector<256x1xf32>
    %15 = vector.broadcast %14 : vector<256x1xf32> to vector<256x24xf32>
    %16 = arith.mulf %12, %15 : vector<256x24xf32>
    %c0_18 = arith.constant 0 : index
    %c0_19 = arith.constant 0 : index
    %c0_20 = arith.constant 0 : index
    %17 = vector.load %arg5[%c0_18, %c0_19, %c0_20] : memref<9x24x16xf32, #tpu.memory_space<vmem>>, vector<1x24x16xf32>
    %18 = vector.shape_cast %17 : vector<1x24x16xf32> to vector<24x16xf32>
    %cst_21 = arith.constant dense<0.000000e+00> : vector<256x16xf32>
    %19 = tpu.matmul %16, %18, %cst_21 {dimension_numbers = #tpu.dot_dimension_numbers<[1], [0], [0], [1], [0, 0, 1, 1], [], []>} : vector<256x24xf32>, vector<24x16xf32>, vector<256x16xf32> -> vector<256x16xf32>
    %c8 = arith.constant 8 : index
    %c0_22 = arith.constant 0 : index
    %20 = vector.load %arg12[%c8, %c0_22] : memref<304x24xf32, #tpu.memory_space<vmem>>, vector<256x24xf32>
    %c1 = arith.constant 1 : index
    %c0_23 = arith.constant 0 : index
    %c0_24 = arith.constant 0 : index
    %21 = vector.load %arg5[%c1, %c0_23, %c0_24] : memref<9x24x16xf32, #tpu.memory_space<vmem>>, vector<1x24x16xf32>
    %22 = vector.shape_cast %21 : vector<1x24x16xf32> to vector<24x16xf32>
    %cst_25 = arith.constant dense<0.000000e+00> : vector<256x16xf32>
    %23 = tpu.matmul %20, %22, %cst_25 {dimension_numbers = #tpu.dot_dimension_numbers<[1], [0], [0], [1], [0, 0, 1, 1], [], []>} : vector<256x24xf32>, vector<24x16xf32>, vector<256x16xf32> -> vector<256x16xf32>
    %24 = arith.addf %19, %23 : vector<256x16xf32>
    %c9 = arith.constant 9 : index
    %c0_26 = arith.constant 0 : index
    %25 = vector.load %arg12[%c9, %c0_26] : memref<304x24xf32, #tpu.memory_space<vmem>>, vector<256x24xf32>
    %c2 = arith.constant 2 : index
    %c0_27 = arith.constant 0 : index
    %c0_28 = arith.constant 0 : index
    %26 = vector.load %arg4[%c2, %c0_27, %c0_28] : memref<3x256x1xf32, #tpu.memory_space<vmem>>, vector<1x256x1xf32>
    %27 = vector.shape_cast %26 : vector<1x256x1xf32> to vector<256x1xf32>
    %28 = vector.broadcast %27 : vector<256x1xf32> to vector<256x24xf32>
    %29 = arith.mulf %25, %28 : vector<256x24xf32>
    %c2_29 = arith.constant 2 : index
    %c0_30 = arith.constant 0 : index
    %c0_31 = arith.constant 0 : index
    %30 = vector.load %arg5[%c2_29, %c0_30, %c0_31] : memref<9x24x16xf32, #tpu.memory_space<vmem>>, vector<1x24x16xf32>
    %31 = vector.shape_cast %30 : vector<1x24x16xf32> to vector<24x16xf32>
    %cst_32 = arith.constant dense<0.000000e+00> : vector<256x16xf32>
    %32 = tpu.matmul %29, %31, %cst_32 {dimension_numbers = #tpu.dot_dimension_numbers<[1], [0], [0], [1], [0, 0, 1, 1], [], []>} : vector<256x24xf32>, vector<24x16xf32>, vector<256x16xf32> -> vector<256x16xf32>
    %33 = arith.addf %24, %32 : vector<256x16xf32>
    %c23 = arith.constant 23 : index
    %c0_33 = arith.constant 0 : index
    %34 = vector.load %arg12[%c23, %c0_33] : memref<304x24xf32, #tpu.memory_space<vmem>>, vector<256x24xf32>
    %c0_34 = arith.constant 0 : index
    %c0_35 = arith.constant 0 : index
    %c0_36 = arith.constant 0 : index
    %35 = vector.load %arg4[%c0_34, %c0_35, %c0_36] : memref<3x256x1xf32, #tpu.memory_space<vmem>>, vector<1x256x1xf32>
    %36 = vector.shape_cast %35 : vector<1x256x1xf32> to vector<256x1xf32>
    %37 = vector.broadcast %36 : vector<256x1xf32> to vector<256x24xf32>
    %38 = arith.mulf %34, %37 : vector<256x24xf32>
    %c3 = arith.constant 3 : index
    %c0_37 = arith.constant 0 : index
    %c0_38 = arith.constant 0 : index
    %39 = vector.load %arg5[%c3, %c0_37, %c0_38] : memref<9x24x16xf32, #tpu.memory_space<vmem>>, vector<1x24x16xf32>
    %40 = vector.shape_cast %39 : vector<1x24x16xf32> to vector<24x16xf32>
    %cst_39 = arith.constant dense<0.000000e+00> : vector<256x16xf32>
    %41 = tpu.matmul %38, %40, %cst_39 {dimension_numbers = #tpu.dot_dimension_numbers<[1], [0], [0], [1], [0, 0, 1, 1], [], []>} : vector<256x24xf32>, vector<24x16xf32>, vector<256x16xf32> -> vector<256x16xf32>
    %42 = arith.addf %33, %41 : vector<256x16xf32>
    %c24_40 = arith.constant 24 : index
    %c0_41 = arith.constant 0 : index
    %43 = vector.load %arg12[%c24_40, %c0_41] : memref<304x24xf32, #tpu.memory_space<vmem>>, vector<256x24xf32>
    %c4 = arith.constant 4 : index
    %c0_42 = arith.constant 0 : index
    %c0_43 = arith.constant 0 : index
    %44 = vector.load %arg5[%c4, %c0_42, %c0_43] : memref<9x24x16xf32, #tpu.memory_space<vmem>>, vector<1x24x16xf32>
    %45 = vector.shape_cast %44 : vector<1x24x16xf32> to vector<24x16xf32>
    %cst_44 = arith.constant dense<0.000000e+00> : vector<256x16xf32>
    %46 = tpu.matmul %43, %45, %cst_44 {dimension_numbers = #tpu.dot_dimension_numbers<[1], [0], [0], [1], [0, 0, 1, 1], [], []>} : vector<256x24xf32>, vector<24x16xf32>, vector<256x16xf32> -> vector<256x16xf32>
    %47 = arith.addf %42, %46 : vector<256x16xf32>
    %c25 = arith.constant 25 : index
    %c0_45 = arith.constant 0 : index
    %48 = vector.load %arg12[%c25, %c0_45] : memref<304x24xf32, #tpu.memory_space<vmem>>, vector<256x24xf32>
    %c2_46 = arith.constant 2 : index
    %c0_47 = arith.constant 0 : index
    %c0_48 = arith.constant 0 : index
    %49 = vector.load %arg4[%c2_46, %c0_47, %c0_48] : memref<3x256x1xf32, #tpu.memory_space<vmem>>, vector<1x256x1xf32>
    %50 = vector.shape_cast %49 : vector<1x256x1xf32> to vector<256x1xf32>
    %51 = vector.broadcast %50 : vector<256x1xf32> to vector<256x24xf32>
    %52 = arith.mulf %48, %51 : vector<256x24xf32>
    %c5 = arith.constant 5 : index
    %c0_49 = arith.constant 0 : index
    %c0_50 = arith.constant 0 : index
    %53 = vector.load %arg5[%c5, %c0_49, %c0_50] : memref<9x24x16xf32, #tpu.memory_space<vmem>>, vector<1x24x16xf32>
    %54 = vector.shape_cast %53 : vector<1x24x16xf32> to vector<24x16xf32>
    %cst_51 = arith.constant dense<0.000000e+00> : vector<256x16xf32>
    %55 = tpu.matmul %52, %54, %cst_51 {dimension_numbers = #tpu.dot_dimension_numbers<[1], [0], [0], [1], [0, 0, 1, 1], [], []>} : vector<256x24xf32>, vector<24x16xf32>, vector<256x16xf32> -> vector<256x16xf32>
    %56 = arith.addf %47, %55 : vector<256x16xf32>
    %c39 = arith.constant 39 : index
    %c0_52 = arith.constant 0 : index
    %57 = vector.load %arg12[%c39, %c0_52] : memref<304x24xf32, #tpu.memory_space<vmem>>, vector<256x24xf32>
    %c0_53 = arith.constant 0 : index
    %c0_54 = arith.constant 0 : index
    %c0_55 = arith.constant 0 : index
    %58 = vector.load %arg4[%c0_53, %c0_54, %c0_55] : memref<3x256x1xf32, #tpu.memory_space<vmem>>, vector<1x256x1xf32>
    %59 = vector.shape_cast %58 : vector<1x256x1xf32> to vector<256x1xf32>
    %60 = vector.broadcast %59 : vector<256x1xf32> to vector<256x24xf32>
    %61 = arith.mulf %57, %60 : vector<256x24xf32>
    %c6 = arith.constant 6 : index
    %c0_56 = arith.constant 0 : index
    %c0_57 = arith.constant 0 : index
    %62 = vector.load %arg5[%c6, %c0_56, %c0_57] : memref<9x24x16xf32, #tpu.memory_space<vmem>>, vector<1x24x16xf32>
    %63 = vector.shape_cast %62 : vector<1x24x16xf32> to vector<24x16xf32>
    %cst_58 = arith.constant dense<0.000000e+00> : vector<256x16xf32>
    %64 = tpu.matmul %61, %63, %cst_58 {dimension_numbers = #tpu.dot_dimension_numbers<[1], [0], [0], [1], [0, 0, 1, 1], [], []>} : vector<256x24xf32>, vector<24x16xf32>, vector<256x16xf32> -> vector<256x16xf32>
    %65 = arith.addf %56, %64 : vector<256x16xf32>
    %c40 = arith.constant 40 : index
    %c0_59 = arith.constant 0 : index
    %66 = vector.load %arg12[%c40, %c0_59] : memref<304x24xf32, #tpu.memory_space<vmem>>, vector<256x24xf32>
    %c7_60 = arith.constant 7 : index
    %c0_61 = arith.constant 0 : index
    %c0_62 = arith.constant 0 : index
    %67 = vector.load %arg5[%c7_60, %c0_61, %c0_62] : memref<9x24x16xf32, #tpu.memory_space<vmem>>, vector<1x24x16xf32>
    %68 = vector.shape_cast %67 : vector<1x24x16xf32> to vector<24x16xf32>
    %cst_63 = arith.constant dense<0.000000e+00> : vector<256x16xf32>
    %69 = tpu.matmul %66, %68, %cst_63 {dimension_numbers = #tpu.dot_dimension_numbers<[1], [0], [0], [1], [0, 0, 1, 1], [], []>} : vector<256x24xf32>, vector<24x16xf32>, vector<256x16xf32> -> vector<256x16xf32>
    %70 = arith.addf %65, %69 : vector<256x16xf32>
    %c41 = arith.constant 41 : index
    %c0_64 = arith.constant 0 : index
    %71 = vector.load %arg12[%c41, %c0_64] : memref<304x24xf32, #tpu.memory_space<vmem>>, vector<256x24xf32>
    %c2_65 = arith.constant 2 : index
    %c0_66 = arith.constant 0 : index
    %c0_67 = arith.constant 0 : index
    %72 = vector.load %arg4[%c2_65, %c0_66, %c0_67] : memref<3x256x1xf32, #tpu.memory_space<vmem>>, vector<1x256x1xf32>
    %73 = vector.shape_cast %72 : vector<1x256x1xf32> to vector<256x1xf32>
    %74 = vector.broadcast %73 : vector<256x1xf32> to vector<256x24xf32>
    %75 = arith.mulf %71, %74 : vector<256x24xf32>
    %c8_68 = arith.constant 8 : index
    %c0_69 = arith.constant 0 : index
    %c0_70 = arith.constant 0 : index
    %76 = vector.load %arg5[%c8_68, %c0_69, %c0_70] : memref<9x24x16xf32, #tpu.memory_space<vmem>>, vector<1x24x16xf32>
    %77 = vector.shape_cast %76 : vector<1x24x16xf32> to vector<24x16xf32>
    %cst_71 = arith.constant dense<0.000000e+00> : vector<256x16xf32>
    %78 = tpu.matmul %75, %77, %cst_71 {dimension_numbers = #tpu.dot_dimension_numbers<[1], [0], [0], [1], [0, 0, 1, 1], [], []>} : vector<256x24xf32>, vector<24x16xf32>, vector<256x16xf32> -> vector<256x16xf32>
    %79 = arith.addf %70, %78 : vector<256x16xf32>
    %c0_72 = arith.constant 0 : index
    %c0_73 = arith.constant 0 : index
    %80 = vector.load %arg6[%c0_72, %c0_73] : memref<1x16xf32, #tpu.memory_space<vmem>>, vector<1x16xf32>
    %81 = vector.broadcast %80 : vector<1x16xf32> to vector<256x16xf32>
    %82 = arith.mulf %79, %81 : vector<256x16xf32>
    %c0_74 = arith.constant 0 : index
    %c0_75 = arith.constant 0 : index
    %83 = vector.load %arg7[%c0_74, %c0_75] : memref<1x16xf32, #tpu.memory_space<vmem>>, vector<1x16xf32>
    %84 = vector.broadcast %83 : vector<1x16xf32> to vector<256x16xf32>
    %85 = arith.addf %82, %84 : vector<256x16xf32>
    %cst_76 = arith.constant 0.000000e+00 : f32
    %86 = vector.broadcast %cst_76 : f32 to vector<256x16xf32>
    %87 = arith.maximumf %85, %86 : vector<256x16xf32>
    %c24_77 = arith.constant 24 : index
    %c0_78 = arith.constant 0 : index
    %88 = vector.load %arg12[%c24_77, %c0_78] : memref<304x24xf32, #tpu.memory_space<vmem>>, vector<256x16xf32>
    tpu.vector_store %arg12[%c24_77, %c0_78], %87 {strides = array<i32>} : memref<304x24xf32, #tpu.memory_space<vmem>>, vector<256x16xf32>,
    %c7_79 = arith.constant 7 : index
    %c0_80 = arith.constant 0 : index
    %89 = vector.load %arg12[%c7_79, %c0_80] : memref<304x24xf32, #tpu.memory_space<vmem>>, vector<256x16xf32>
    %c0_81 = arith.constant 0 : index
    %c0_82 = arith.constant 0 : index
    %c0_83 = arith.constant 0 : index
    %90 = vector.load %arg4[%c0_81, %c0_82, %c0_83] : memref<3x256x1xf32, #tpu.memory_space<vmem>>, vector<1x256x1xf32>
    %91 = vector.shape_cast %90 : vector<1x256x1xf32> to vector<256x1xf32>
    %92 = vector.broadcast %91 : vector<256x1xf32> to vector<256x16xf32>
    %93 = arith.mulf %89, %92 : vector<256x16xf32>
    %c0_84 = arith.constant 0 : index
    %c0_85 = arith.constant 0 : index
    %c0_86 = arith.constant 0 : index
    %94 = vector.load %arg8[%c0_84, %c0_85, %c0_86] : memref<9x8x16xf32, #tpu.memory_space<vmem>>, vector<1x8x16xf32>
    %95 = vector.shape_cast %94 : vector<1x8x16xf32> to vector<8x16xf32>
    %cst_87 = arith.constant dense<0.000000e+00> : vector<8x256xf32>
    %96 = tpu.matmul %95, %93, %cst_87 {dimension_numbers = #tpu.dot_dimension_numbers<[1], [1], [0], [0], [0, 0, 1, 0], [], []>} : vector<8x16xf32>, vector<256x16xf32>, vector<8x256xf32> -> vector<8x256xf32>
    %c8_88 = arith.constant 8 : index
    %c0_89 = arith.constant 0 : index
    %97 = vector.load %arg12[%c8_88, %c0_89] : memref<304x24xf32, #tpu.memory_space<vmem>>, vector<256x16xf32>
    %c1_90 = arith.constant 1 : index
    %c0_91 = arith.constant 0 : index
    %c0_92 = arith.constant 0 : index
    %98 = vector.load %arg8[%c1_90, %c0_91, %c0_92] : memref<9x8x16xf32, #tpu.memory_space<vmem>>, vector<1x8x16xf32>
    %99 = vector.shape_cast %98 : vector<1x8x16xf32> to vector<8x16xf32>
    %cst_93 = arith.constant dense<0.000000e+00> : vector<8x256xf32>
    %100 = tpu.matmul %99, %97, %cst_93 {dimension_numbers = #tpu.dot_dimension_numbers<[1], [1], [0], [0], [0, 0, 1, 0], [], []>} : vector<8x16xf32>, vector<256x16xf32>, vector<8x256xf32> -> vector<8x256xf32>
    %101 = arith.addf %96, %100 : vector<8x256xf32>
    %c9_94 = arith.constant 9 : index
    %c0_95 = arith.constant 0 : index
    %102 = vector.load %arg12[%c9_94, %c0_95] : memref<304x24xf32, #tpu.memory_space<vmem>>, vector<256x16xf32>
    %c2_96 = arith.constant 2 : index
    %c0_97 = arith.constant 0 : index
    %c0_98 = arith.constant 0 : index
    %103 = vector.load %arg4[%c2_96, %c0_97, %c0_98] : memref<3x256x1xf32, #tpu.memory_space<vmem>>, vector<1x256x1xf32>
    %104 = vector.shape_cast %103 : vector<1x256x1xf32> to vector<256x1xf32>
    %105 = vector.broadcast %104 : vector<256x1xf32> to vector<256x16xf32>
    %106 = arith.mulf %102, %105 : vector<256x16xf32>
    %c2_99 = arith.constant 2 : index
    %c0_100 = arith.constant 0 : index
    %c0_101 = arith.constant 0 : index
    %107 = vector.load %arg8[%c2_99, %c0_100, %c0_101] : memref<9x8x16xf32, #tpu.memory_space<vmem>>, vector<1x8x16xf32>
    %108 = vector.shape_cast %107 : vector<1x8x16xf32> to vector<8x16xf32>
    %cst_102 = arith.constant dense<0.000000e+00> : vector<8x256xf32>
    %109 = tpu.matmul %108, %106, %cst_102 {dimension_numbers = #tpu.dot_dimension_numbers<[1], [1], [0], [0], [0, 0, 1, 0], [], []>} : vector<8x16xf32>, vector<256x16xf32>, vector<8x256xf32> -> vector<8x256xf32>
    %110 = arith.addf %101, %109 : vector<8x256xf32>
    %c23_103 = arith.constant 23 : index
    %c0_104 = arith.constant 0 : index
    %111 = vector.load %arg12[%c23_103, %c0_104] : memref<304x24xf32, #tpu.memory_space<vmem>>, vector<256x16xf32>
    %c0_105 = arith.constant 0 : index
    %c0_106 = arith.constant 0 : index
    %c0_107 = arith.constant 0 : index
    %112 = vector.load %arg4[%c0_105, %c0_106, %c0_107] : memref<3x256x1xf32, #tpu.memory_space<vmem>>, vector<1x256x1xf32>
    %113 = vector.shape_cast %112 : vector<1x256x1xf32> to vector<256x1xf32>
    %114 = vector.broadcast %113 : vector<256x1xf32> to vector<256x16xf32>
    %115 = arith.mulf %111, %114 : vector<256x16xf32>
    %c3_108 = arith.constant 3 : index
    %c0_109 = arith.constant 0 : index
    %c0_110 = arith.constant 0 : index
    %116 = vector.load %arg8[%c3_108, %c0_109, %c0_110] : memref<9x8x16xf32, #tpu.memory_space<vmem>>, vector<1x8x16xf32>
    %117 = vector.shape_cast %116 : vector<1x8x16xf32> to vector<8x16xf32>
    %cst_111 = arith.constant dense<0.000000e+00> : vector<8x256xf32>
    %118 = tpu.matmul %117, %115, %cst_111 {dimension_numbers = #tpu.dot_dimension_numbers<[1], [1], [0], [0], [0, 0, 1, 0], [], []>} : vector<8x16xf32>, vector<256x16xf32>, vector<8x256xf32> -> vector<8x256xf32>
    %119 = arith.addf %110, %118 : vector<8x256xf32>
    %c24_112 = arith.constant 24 : index
    %c0_113 = arith.constant 0 : index
    %120 = vector.load %arg12[%c24_112, %c0_113] : memref<304x24xf32, #tpu.memory_space<vmem>>, vector<256x16xf32>
    %c4_114 = arith.constant 4 : index
    %c0_115 = arith.constant 0 : index
    %c0_116 = arith.constant 0 : index
    %121 = vector.load %arg8[%c4_114, %c0_115, %c0_116] : memref<9x8x16xf32, #tpu.memory_space<vmem>>, vector<1x8x16xf32>
    %122 = vector.shape_cast %121 : vector<1x8x16xf32> to vector<8x16xf32>
    %cst_117 = arith.constant dense<0.000000e+00> : vector<8x256xf32>
    %123 = tpu.matmul %122, %120, %cst_117 {dimension_numbers = #tpu.dot_dimension_numbers<[1], [1], [0], [0], [0, 0, 1, 0], [], []>} : vector<8x16xf32>, vector<256x16xf32>, vector<8x256xf32> -> vector<8x256xf32>
    %124 = arith.addf %119, %123 : vector<8x256xf32>
    %c25_118 = arith.constant 25 : index
    %c0_119 = arith.constant 0 : index
    %125 = vector.load %arg12[%c25_118, %c0_119] : memref<304x24xf32, #tpu.memory_space<vmem>>, vector<256x16xf32>
    %c2_120 = arith.constant 2 : index
    %c0_121 = arith.constant 0 : index
    %c0_122 = arith.constant 0 : index
    %126 = vector.load %arg4[%c2_120, %c0_121, %c0_122] : memref<3x256x1xf32, #tpu.memory_space<vmem>>, vector<1x256x1xf32>
    %127 = vector.shape_cast %126 : vector<1x256x1xf32> to vector<256x1xf32>
    %128 = vector.broadcast %127 : vector<256x1xf32> to vector<256x16xf32>
    %129 = arith.mulf %125, %128 : vector<256x16xf32>
    %c5_123 = arith.constant 5 : index
    %c0_124 = arith.constant 0 : index
    %c0_125 = arith.constant 0 : index
    %130 = vector.load %arg8[%c5_123, %c0_124, %c0_125] : memref<9x8x16xf32, #tpu.memory_space<vmem>>, vector<1x8x16xf32>
    %131 = vector.shape_cast %130 : vector<1x8x16xf32> to vector<8x16xf32>
    %cst_126 = arith.constant dense<0.000000e+00> : vector<8x256xf32>
    %132 = tpu.matmul %131, %129, %cst_126 {dimension_numbers = #tpu.dot_dimension_numbers<[1], [1], [0], [0], [0, 0, 1, 0], [], []>} : vector<8x16xf32>, vector<256x16xf32>, vector<8x256xf32> -> vector<8x256xf32>
    %133 = arith.addf %124, %132 : vector<8x256xf32>
    %c39_127 = arith.constant 39 : index
    %c0_128 = arith.constant 0 : index
    %134 = vector.load %arg12[%c39_127, %c0_128] : memref<304x24xf32, #tpu.memory_space<vmem>>, vector<256x16xf32>
    %c0_129 = arith.constant 0 : index
    %c0_130 = arith.constant 0 : index
    %c0_131 = arith.constant 0 : index
    %135 = vector.load %arg4[%c0_129, %c0_130, %c0_131] : memref<3x256x1xf32, #tpu.memory_space<vmem>>, vector<1x256x1xf32>
    %136 = vector.shape_cast %135 : vector<1x256x1xf32> to vector<256x1xf32>
    %137 = vector.broadcast %136 : vector<256x1xf32> to vector<256x16xf32>
    %138 = arith.mulf %134, %137 : vector<256x16xf32>
    %c6_132 = arith.constant 6 : index
    %c0_133 = arith.constant 0 : index
    %c0_134 = arith.constant 0 : index
    %139 = vector.load %arg8[%c6_132, %c0_133, %c0_134] : memref<9x8x16xf32, #tpu.memory_space<vmem>>, vector<1x8x16xf32>
    %140 = vector.shape_cast %139 : vector<1x8x16xf32> to vector<8x16xf32>
    %cst_135 = arith.constant dense<0.000000e+00> : vector<8x256xf32>
    %141 = tpu.matmul %140, %138, %cst_135 {dimension_numbers = #tpu.dot_dimension_numbers<[1], [1], [0], [0], [0, 0, 1, 0], [], []>} : vector<8x16xf32>, vector<256x16xf32>, vector<8x256xf32> -> vector<8x256xf32>
    %142 = arith.addf %133, %141 : vector<8x256xf32>
    %c40_136 = arith.constant 40 : index
    %c0_137 = arith.constant 0 : index
    %143 = vector.load %arg12[%c40_136, %c0_137] : memref<304x24xf32, #tpu.memory_space<vmem>>, vector<256x16xf32>
    %c7_138 = arith.constant 7 : index
    %c0_139 = arith.constant 0 : index
    %c0_140 = arith.constant 0 : index
    %144 = vector.load %arg8[%c7_138, %c0_139, %c0_140] : memref<9x8x16xf32, #tpu.memory_space<vmem>>, vector<1x8x16xf32>
    %145 = vector.shape_cast %144 : vector<1x8x16xf32> to vector<8x16xf32>
    %cst_141 = arith.constant dense<0.000000e+00> : vector<8x256xf32>
    %146 = tpu.matmul %145, %143, %cst_141 {dimension_numbers = #tpu.dot_dimension_numbers<[1], [1], [0], [0], [0, 0, 1, 0], [], []>} : vector<8x16xf32>, vector<256x16xf32>, vector<8x256xf32> -> vector<8x256xf32>
    %147 = arith.addf %142, %146 : vector<8x256xf32>
    %c41_142 = arith.constant 41 : index
    %c0_143 = arith.constant 0 : index
    %148 = vector.load %arg12[%c41_142, %c0_143] : memref<304x24xf32, #tpu.memory_space<vmem>>, vector<256x16xf32>
    %c2_144 = arith.constant 2 : index
    %c0_145 = arith.constant 0 : index
    %c0_146 = arith.constant 0 : index
    %149 = vector.load %arg4[%c2_144, %c0_145, %c0_146] : memref<3x256x1xf32, #tpu.memory_space<vmem>>, vector<1x256x1xf32>
    %150 = vector.shape_cast %149 : vector<1x256x1xf32> to vector<256x1xf32>
    %151 = vector.broadcast %150 : vector<256x1xf32> to vector<256x16xf32>
    %152 = arith.mulf %148, %151 : vector<256x16xf32>
    %c8_147 = arith.constant 8 : index
    %c0_148 = arith.constant 0 : index
    %c0_149 = arith.constant 0 : index
    %153 = vector.load %arg8[%c8_147, %c0_148, %c0_149] : memref<9x8x16xf32, #tpu.memory_space<vmem>>, vector<1x8x16xf32>
    %154 = vector.shape_cast %153 : vector<1x8x16xf32> to vector<8x16xf32>
    %cst_150 = arith.constant dense<0.000000e+00> : vector<8x256xf32>
    %155 = tpu.matmul %154, %152, %cst_150 {dimension_numbers = #tpu.dot_dimension_numbers<[1], [1], [0], [0], [0, 0, 1, 0], [], []>} : vector<8x16xf32>, vector<256x16xf32>, vector<8x256xf32> -> vector<8x256xf32>
    %156 = arith.addf %147, %155 : vector<8x256xf32>
    %c0_151 = arith.constant 0 : index
    %c0_152 = arith.constant 0 : index
    %157 = vector.load %arg9[%c0_151, %c0_152] : memref<8x1xf32, #tpu.memory_space<vmem>>, vector<8x1xf32>
    %158 = vector.broadcast %157 : vector<8x1xf32> to vector<8x256xf32>
    %159 = arith.mulf %156, %158 : vector<8x256xf32>
    %c0_153 = arith.constant 0 : index
    %c0_154 = arith.constant 0 : index
    %160 = vector.load %arg10[%c0_153, %c0_154] : memref<8x1xf32, #tpu.memory_space<vmem>>, vector<8x1xf32>
    %161 = vector.broadcast %160 : vector<8x1xf32> to vector<8x256xf32>
    %162 = arith.addf %159, %161 : vector<8x256xf32>
    %cst_155 = arith.constant 0.000000e+00 : f32
    %163 = vector.broadcast %cst_155 : f32 to vector<8x256xf32>
    %164 = arith.maximumf %162, %163 : vector<8x256xf32>
    %c0_156 = arith.constant 0 : index
    %c0_157 = arith.constant 0 : index
    %c0_158 = arith.constant 0 : index
    %165 = vector.load %arg11[%c0_156, %c0_157, %c0_158] : memref<1x8x256xf32, #tpu.memory_space<vmem>>, vector<1x8x256xf32>
    %166 = vector.shape_cast %165 : vector<1x8x256xf32> to vector<8x256xf32>
    %167 = vector.shape_cast %164 : vector<8x256xf32> to vector<1x8x256xf32>
    tpu.vector_store %arg11[%c0_156, %c0_157, %c0_158], %167 {strides = array<i32>} : memref<1x8x256xf32, #tpu.memory_space<vmem>>, vector<1x8x256xf32>,
    return
  }
  func.func @transform_0(%arg0: i32) -> (i32, i32, i32) {
    %c0_i32 = arith.constant 0 : i32
    %c0_i32_0 = arith.constant 0 : i32
    %c0_i32_1 = arith.constant 0 : i32
    return %arg0, %c0_i32, %c0_i32_0 : i32, i32, i32
  }
  func.func @transform_1(%arg0: i32) -> (i32, i32, i32) {
    %c0_i32 = arith.constant 0 : i32
    %c0_i32_0 = arith.constant 0 : i32
    %c0_i32_1 = arith.constant 0 : i32
    return %arg0, %c0_i32, %c0_i32_0 : i32, i32, i32
  }
  func.func @transform_2(%arg0: i32) -> (i32, i32) {
    %c0_i32 = arith.constant 0 : i32
    %c0_i32_0 = arith.constant 0 : i32
    %c0_i32_1 = arith.constant 0 : i32
    return %c0_i32, %c0_i32_0 : i32, i32
  }
  func.func @transform_3(%arg0: i32) -> (i32, i32, i32) {
    %c0_i32 = arith.constant 0 : i32
    %c0_i32_0 = arith.constant 0 : i32
    %c0_i32_1 = arith.constant 0 : i32
    %c0_i32_2 = arith.constant 0 : i32
    return %c0_i32, %c0_i32_0, %c0_i32_1 : i32, i32, i32
  }
  func.func @transform_4(%arg0: i32) -> (i32, i32, i32) {
    %c0_i32 = arith.constant 0 : i32
    %c0_i32_0 = arith.constant 0 : i32
    %c0_i32_1 = arith.constant 0 : i32
    %c0_i32_2 = arith.constant 0 : i32
    return %c0_i32, %c0_i32_0, %c0_i32_1 : i32, i32, i32
  }
  func.func @transform_5(%arg0: i32) -> (i32, i32) {
    %c0_i32 = arith.constant 0 : i32
    %c0_i32_0 = arith.constant 0 : i32
    %c0_i32_1 = arith.constant 0 : i32
    return %c0_i32, %c0_i32_0 : i32, i32
  }
  func.func @transform_6(%arg0: i32) -> (i32, i32) {
    %c0_i32 = arith.constant 0 : i32
    %c0_i32_0 = arith.constant 0 : i32
    %c0_i32_1 = arith.constant 0 : i32
    return %c0_i32, %c0_i32_0 : i32, i32
  }
  func.func @transform_7(%arg0: i32) -> (i32, i32, i32) {
    %c0_i32 = arith.constant 0 : i32
    %c0_i32_0 = arith.constant 0 : i32
    %c0_i32_1 = arith.constant 0 : i32
    %c0_i32_2 = arith.constant 0 : i32
    return %c0_i32, %c0_i32_0, %c0_i32_1 : i32, i32, i32
  }
  func.func @transform_8(%arg0: i32) -> (i32, i32) {
    %c0_i32 = arith.constant 0 : i32
    %c0_i32_0 = arith.constant 0 : i32
    %c0_i32_1 = arith.constant 0 : i32
    return %c0_i32, %c0_i32_0 : i32, i32
  }
  func.func @transform_9(%arg0: i32) -> (i32, i32) {
    %c0_i32 = arith.constant 0 : i32
    %c0_i32_0 = arith.constant 0 : i32
    %c0_i32_1 = arith.constant 0 : i32
    return %c0_i32, %c0_i32_0 : i32, i32
  }
  func.func @transform_10(%arg0: i32) -> (i32, i32, i32) {
    %c0_i32 = arith.constant 0 : i32
    %c0_i32_0 = arith.constant 0 : i32
    %c0_i32_1 = arith.constant 0 : i32
    return %arg0, %c0_i32, %c0_i32_0 : i32, i32, i32
  }
}

</mosaic_0001>

<llo_original>
// kernel: upsample_forward.1
$region0: #{upsample_forward.1}
  #allocation0 [shape = 'u32[]', space=smem, size = 0x4, offset = 0x4, fixed_abs, tag = 'smem constant byte address 0x4 - core index']
  #allocation1 [shape = 'u32[72,128]{1,0:T(1,128)}', space=vmem, size = 0x9000, scoped, tag = 'internal scratch']
  #allocation2 [shape = 'f32[304,24]{1,0:T(8,128)}', space=vmem, size = 0x26000, scoped, tag = 'scratch operand']
  %s0 = inlined_call_operand.vmem [shape: f32[2,64,16], index: 0, kind: input, shape index: {}]
  %s1 = inlined_call_operand.vmem [shape: f32[2,256,8], index: 1, kind: input, shape index: {}]
  %s2 = inlined_call_operand.vmem [shape: f32[256,64], index: 2, kind: input, shape index: {}]
  %s3 = inlined_call_operand.vmem [shape: f32[3,256,1], index: 3, kind: input, shape index: {}]
  %s4 = inlined_call_operand.vmem [shape: f32[9,24,16], index: 4, kind: input, shape index: {}]
  %s5 = inlined_call_operand.vmem [shape: f32[1,16], index: 5, kind: input, shape index: {}]
  %s6 = inlined_call_operand.vmem [shape: f32[1,16], index: 6, kind: input, shape index: {}]
  %s7 = inlined_call_operand.vmem [shape: f32[9,8,16], index: 7, kind: input, shape index: {}]
  %s8 = inlined_call_operand.vmem [shape: f32[8,1], index: 8, kind: input, shape index: {}]
  %s9 = inlined_call_operand.vmem [shape: f32[8,1], index: 9, kind: input, shape index: {}]
  %s10 = inlined_call_operand.vmem [shape: f32[2,8,256], index: 10, kind: output, shape index: {}]
  %s11 = sld [smem:[#allocation0]]
  $region73: #{upsample_forward.1} parent=0
    _
  %s13 = ssub.s32 1, %s11
  %s14 = scalar_select 0, %s13, %s11
  loop: start=0, step=1, limit=4
  $region2: #{upsample_forward.1} parent=0 // loop_pre_header
    _
  $region3: #{upsample_forward.1} parent=0 // loop_header
    %s16 = sphi 0, %s20
    %p17 = scmp.ge.s32.totalorder %s16, 4
    %s26 = sphi 0, %s28
    %s29 = sphi 0, %s26
    %s30 = sphi 0, %s29
    %s46 = sphi 0, %s30
    %s52 = sphi 0, %s54
    %s55 = sphi 0, %s52
    %s56 = sphi 0, %s55
    %s72 = sphi 0, %s56
    %s76 = sphi 0, %s76
    %s78 = sphi 0, %s76
    %s79 = sphi 0, %s78
    %s93 = sphi 0, %s79
    %s97 = sphi 0, %s97
    %s99 = sphi 0, %s97
    %s100 = sphi 0, %s99
    %s114 = sphi 0, %s100
    %s118 = sphi 0, %s118
    %s120 = sphi 0, %s118
    %s121 = sphi 0, %s120
    %s135 = sphi 0, %s121
    %s139 = sphi 0, %s139
    %s141 = sphi 0, %s139
    %s142 = sphi 0, %s141
    %s156 = sphi 0, %s142
    %s160 = sphi 0, %s160
    %s162 = sphi 0, %s160
    %s163 = sphi 0, %s162
    %s177 = sphi 0, %s163
    %s181 = sphi 0, %s181
    %s183 = sphi 0, %s181
    %s184 = sphi 0, %s183
    %s198 = sphi 0, %s184
    %s202 = sphi 0, %s202
    %s204 = sphi 0, %s202
    %s205 = sphi 0, %s204
    %s219 = sphi 0, %s205
    %s223 = sphi 0, %s223
    %s225 = sphi 0, %s223
    %s226 = sphi 0, %s225
    %s240 = sphi 0, %s226
    %s246 = sphi 0, %s248
    %s249 = sphi 0, %s246
    %s250 = sphi 0, %s249
    %s266 = sphi 0, %s250
  $region4: #{upsample_forward.1} parent=0 // loop_header_branch
    %19 = sbr.rel (%p17) target = $region8
  $region5: #{upsample_forward.1} parent=0 // loop_body
    %s21 = ssub.s32 %s16, 1
    %s22 = ssub.s32 %s16, 2
    %s23 = sadd.s32 %s16, 1
    %s24 = ssub.s32 %s16, %s23
    %p25 = scmp.eq.s32.totalorder %s24, 0
    %s27 = sadd.s32 %s26, 1
    %s28 = scalar_select %p25, %s26, %s27
    %p31 = pneg %p25
    %p32 = scmp.eq.s32.totalorder %s16, 1
    %p33 = por %p31, %p32
    %p34 = scmp.ne.s32.totalorder %s26, %s29
    %p35 = scmp.eq.s32.totalorder %s16, 0
    %p36 = por %p34, %p35
    %p37 = scmp.ne.s32.totalorder %s26, %s29
    %p38 = scmp.eq.s32.totalorder %s21, 1
    %p39 = por %p37, %p38
    %p40 = scmp.ne.s32.totalorder %s29, %s30
    %p41 = scmp.eq.s32.totalorder %s21, 0
    %p42 = por %p40, %p41
    %p43 = scmp.ne.s32.totalorder %s29, %s30
    %p44 = scmp.eq.s32.totalorder %s22, 1
    %p45 = por %p43, %p44
    %p47 = scmp.ne.s32.totalorder %s30, %s46
    %p48 = scmp.eq.s32.totalorder %s22, 0
    %p49 = por %p47, %p48
    %s50 = ssub.s32 %s16, %s23
    %p51 = scmp.eq.s32.totalorder %s50, 0
    %s53 = sadd.s32 %s52, 1
    %s54 = scalar_select %p51, %s52, %s53
    %p57 = pneg %p51
    %p58 = scmp.eq.s32.totalorder %s16, 1
    %p59 = por %p57, %p58
    %p60 = scmp.ne.s32.totalorder %s52, %s55
    %p61 = scmp.eq.s32.totalorder %s16, 0
    %p62 = por %p60, %p61
    %p63 = scmp.ne.s32.totalorder %s52, %s55
    %p64 = scmp.eq.s32.totalorder %s21, 1
    %p65 = por %p63, %p64
    %p66 = scmp.ne.s32.totalorder %s55, %s56
    %p67 = scmp.eq.s32.totalorder %s21, 0
    %p68 = por %p66, %p67
    %p69 = scmp.ne.s32.totalorder %s55, %s56
    %p70 = scmp.eq.s32.totalorder %s22, 1
    %p71 = por %p69, %p70
    %p73 = scmp.ne.s32.totalorder %s56, %s72
    %p74 = scmp.eq.s32.totalorder %s22, 0
    %p75 = por %p73, %p74
    %s77 = sadd.s32 %s76, 1
    %p80 = scmp.eq.s32.totalorder %s16, 1
    %p81 = scmp.ne.s32.totalorder %s76, %s78
    %p82 = scmp.eq.s32.totalorder %s16, 0
    %p83 = por %p81, %p82
    %p84 = scmp.ne.s32.totalorder %s76, %s78
    %p85 = scmp.eq.s32.totalorder %s21, 1
    %p86 = por %p84, %p85
    %p87 = scmp.ne.s32.totalorder %s78, %s79
    %p88 = scmp.eq.s32.totalorder %s21, 0
    %p89 = por %p87, %p88
    %p90 = scmp.ne.s32.totalorder %s78, %s79
    %p91 = scmp.eq.s32.totalorder %s22, 1
    %p92 = por %p90, %p91
    %p94 = scmp.ne.s32.totalorder %s79, %s93
    %p95 = scmp.eq.s32.totalorder %s22, 0
    %p96 = por %p94, %p95
    %s98 = sadd.s32 %s97, 1
    %p101 = scmp.eq.s32.totalorder %s16, 1
    %p102 = scmp.ne.s32.totalorder %s97, %s99
    %p103 = scmp.eq.s32.totalorder %s16, 0
    %p104 = por %p102, %p103
    %p105 = scmp.ne.s32.totalorder %s97, %s99
    %p106 = scmp.eq.s32.totalorder %s21, 1
    %p107 = por %p105, %p106
    %p108 = scmp.ne.s32.totalorder %s99, %s100
    %p109 = scmp.eq.s32.totalorder %s21, 0
    %p110 = por %p108, %p109
    %p111 = scmp.ne.s32.totalorder %s99, %s100
    %p112 = scmp.eq.s32.totalorder %s22, 1
    %p113 = por %p111, %p112
    %p115 = scmp.ne.s32.totalorder %s100, %s114
    %p116 = scmp.eq.s32.totalorder %s22, 0
    %p117 = por %p115, %p116
    %s119 = sadd.s32 %s118, 1
    %p122 = scmp.eq.s32.totalorder %s16, 1
    %p123 = scmp.ne.s32.totalorder %s118, %s120
    %p124 = scmp.eq.s32.totalorder %s16, 0
    %p125 = por %p123, %p124
    %p126 = scmp.ne.s32.totalorder %s118, %s120
    %p127 = scmp.eq.s32.totalorder %s21, 1
    %p128 = por %p126, %p127
    %p129 = scmp.ne.s32.totalorder %s120, %s121
    %p130 = scmp.eq.s32.totalorder %s21, 0
    %p131 = por %p129, %p130
    %p132 = scmp.ne.s32.totalorder %s120, %s121
    %p133 = scmp.eq.s32.totalorder %s22, 1
    %p134 = por %p132, %p133
    %p136 = scmp.ne.s32.totalorder %s121, %s135
    %p137 = scmp.eq.s32.totalorder %s22, 0
    %p138 = por %p136, %p137
    %s140 = sadd.s32 %s139, 1
    %p143 = scmp.eq.s32.totalorder %s16, 1
    %p144 = scmp.ne.s32.totalorder %s139, %s141
    %p145 = scmp.eq.s32.totalorder %s16, 0
    %p146 = por %p144, %p145
    %p147 = scmp.ne.s32.totalorder %s139, %s141
    %p148 = scmp.eq.s32.totalorder %s21, 1
    %p149 = por %p147, %p148
    %p150 = scmp.ne.s32.totalorder %s141, %s142
    %p151 = scmp.eq.s32.totalorder %s21, 0
    %p152 = por %p150, %p151
    %p153 = scmp.ne.s32.totalorder %s141, %s142
    %p154 = scmp.eq.s32.totalorder %s22, 1
    %p155 = por %p153, %p154
    %p157 = scmp.ne.s32.totalorder %s142, %s156
    %p158 = scmp.eq.s32.totalorder %s22, 0
    %p159 = por %p157, %p158
    %s161 = sadd.s32 %s160, 1
    %p164 = scmp.eq.s32.totalorder %s16, 1
    %p165 = scmp.ne.s32.totalorder %s160, %s162
    %p166 = scmp.eq.s32.totalorder %s16, 0
    %p167 = por %p165, %p166
    %p168 = scmp.ne.s32.totalorder %s160, %s162
    %p169 = scmp.eq.s32.totalorder %s21, 1
    %p170 = por %p168, %p169
    %p171 = scmp.ne.s32.totalorder %s162, %s163
    %p172 = scmp.eq.s32.totalorder %s21, 0
    %p173 = por %p171, %p172
    %p174 = scmp.ne.s32.totalorder %s162, %s163
    %p175 = scmp.eq.s32.totalorder %s22, 1
    %p176 = por %p174, %p175
    %p178 = scmp.ne.s32.totalorder %s163, %s177
    %p179 = scmp.eq.s32.totalorder %s22, 0
    %p180 = por %p178, %p179
    %s182 = sadd.s32 %s181, 1
    %p185 = scmp.eq.s32.totalorder %s16, 1
    %p186 = scmp.ne.s32.totalorder %s181, %s183
    %p187 = scmp.eq.s32.totalorder %s16, 0
    %p188 = por %p186, %p187
    %p189 = scmp.ne.s32.totalorder %s181, %s183
    %p190 = scmp.eq.s32.totalorder %s21, 1
    %p191 = por %p189, %p190
    %p192 = scmp.ne.s32.totalorder %s183, %s184
    %p193 = scmp.eq.s32.totalorder %s21, 0
    %p194 = por %p192, %p193
    %p195 = scmp.ne.s32.totalorder %s183, %s184
    %p196 = scmp.eq.s32.totalorder %s22, 1
    %p197 = por %p195, %p196
    %p199 = scmp.ne.s32.totalorder %s184, %s198
    %p200 = scmp.eq.s32.totalorder %s22, 0
    %p201 = por %p199, %p200
    %s203 = sadd.s32 %s202, 1
    %p206 = scmp.eq.s32.totalorder %s16, 1
    %p207 = scmp.ne.s32.totalorder %s202, %s204
    %p208 = scmp.eq.s32.totalorder %s16, 0
    %p209 = por %p207, %p208
    %p210 = scmp.ne.s32.totalorder %s202, %s204
    %p211 = scmp.eq.s32.totalorder %s21, 1
    %p212 = por %p210, %p211
    %p213 = scmp.ne.s32.totalorder %s204, %s205
    %p214 = scmp.eq.s32.totalorder %s21, 0
    %p215 = por %p213, %p214
    %p216 = scmp.ne.s32.totalorder %s204, %s205
    %p217 = scmp.eq.s32.totalorder %s22, 1
    %p218 = por %p216, %p217
    %p220 = scmp.ne.s32.totalorder %s205, %s219
    %p221 = scmp.eq.s32.totalorder %s22, 0
    %p222 = por %p220, %p221
    %s224 = sadd.s32 %s223, 1
    %p227 = scmp.eq.s32.totalorder %s16, 1
    %p228 = scmp.ne.s32.totalorder %s223, %s225
    %p229 = scmp.eq.s32.totalorder %s16, 0
    %p230 = por %p228, %p229
    %p231 = scmp.ne.s32.totalorder %s223, %s225
    %p232 = scmp.eq.s32.totalorder %s21, 1
    %p233 = por %p231, %p232
    %p234 = scmp.ne.s32.totalorder %s225, %s226
    %p235 = scmp.eq.s32.totalorder %s21, 0
    %p236 = por %p234, %p235
    %p237 = scmp.ne.s32.totalorder %s225, %s226
    %p238 = scmp.eq.s32.totalorder %s22, 1
    %p239 = por %p237, %p238
    %p241 = scmp.ne.s32.totalorder %s226, %s240
    %p242 = scmp.eq.s32.totalorder %s22, 0
    %p243 = por %p241, %p242
    %s244 = ssub.s32 %s16, %s23
    %p245 = scmp.eq.s32.totalorder %s244, 0
    %s247 = sadd.s32 %s246, 1
    %s248 = scalar_select %p245, %s246, %s247
    %p251 = pneg %p245
    %p252 = scmp.eq.s32.totalorder %s16, 1
    %p253 = por %p251, %p252
    %p254 = scmp.ne.s32.totalorder %s246, %s249
    %p255 = scmp.eq.s32.totalorder %s16, 0
    %p256 = por %p254, %p255
    %p257 = scmp.ne.s32.totalorder %s246, %s249
    %p258 = scmp.eq.s32.totalorder %s21, 1
    %p259 = por %p257, %p258
    %p260 = scmp.ne.s32.totalorder %s249, %s250
    %p261 = scmp.eq.s32.totalorder %s21, 0
    %p262 = por %p260, %p261
    %p263 = scmp.ne.s32.totalorder %s249, %s250
    %p264 = scmp.eq.s32.totalorder %s22, 1
    %p265 = por %p263, %p264
    %p267 = scmp.ne.s32.totalorder %s250, %s266
    %p268 = scmp.eq.s32.totalorder %s22, 0
    %p269 = por %p267, %p268
    %p270 = scmp.le.s32.totalorder 1, %s16
    %p271 = scmp.lt.s32.totalorder %s16, 3
    %p272 = pnand %p270, %p271
    %p273 = pneg %p272
    // Predicated region
    $region9: #{upsample_forward.1} parent=5 // pred_check
      _
    $region10: #{upsample_forward.1} parent=5 // pred_check_branch
      %275 = sbr.rel (%p272) target = $region12
    $region11: #{upsample_forward.1} parent=5 // pred_region
      %s276 = ssub.s32 %s16, 1
      // Predicated region
      $region13: #{upsample_forward.1} parent=11 // pred_check
        %p277 = pneg %p89
      $region14: #{upsample_forward.1} parent=11 // pred_check_branch
        %279 = sbr.rel (%p277) target = $region16
      $region15: #{upsample_forward.1} parent=11 // pred_region
        _
      $region16: #{upsample_forward.1} parent=11 // pred_fallthru
        _
      // Predicated region
      $region17: #{upsample_forward.1} parent=11 // pred_check
        %p280 = pneg %p110
      $region18: #{upsample_forward.1} parent=11 // pred_check_branch
        %282 = sbr.rel (%p280) target = $region20
      $region19: #{upsample_forward.1} parent=11 // pred_region
        _
      $region20: #{upsample_forward.1} parent=11 // pred_fallthru
        _
      // Predicated region
      $region21: #{upsample_forward.1} parent=11 // pred_check
        %p283 = pneg %p131
      $region22: #{upsample_forward.1} parent=11 // pred_check_branch
        %285 = sbr.rel (%p283) target = $region24
      $region23: #{upsample_forward.1} parent=11 // pred_region
        _
      $region24: #{upsample_forward.1} parent=11 // pred_fallthru
        _
      // Predicated region
      $region25: #{upsample_forward.1} parent=11 // pred_check
        %p286 = pneg %p152
      $region26: #{upsample_forward.1} parent=11 // pred_check_branch
        %288 = sbr.rel (%p286) target = $region28
      $region27: #{upsample_forward.1} parent=11 // pred_region
        _
      $region28: #{upsample_forward.1} parent=11 // pred_fallthru
        _
      // Predicated region
      $region29: #{upsample_forward.1} parent=11 // pred_check
        %p289 = pneg %p173
      $region30: #{upsample_forward.1} parent=11 // pred_check_branch
        %291 = sbr.rel (%p289) target = $region32
      $region31: #{upsample_forward.1} parent=11 // pred_region
        _
      $region32: #{upsample_forward.1} parent=11 // pred_fallthru
        _
      // Predicated region
      $region33: #{upsample_forward.1} parent=11 // pred_check
        %p292 = pneg %p194
      $region34: #{upsample_forward.1} parent=11 // pred_check_branch
        %294 = sbr.rel (%p292) target = $region36
      $region35: #{upsample_forward.1} parent=11 // pred_region
        _
      $region36: #{upsample_forward.1} parent=11 // pred_fallthru
        _
      // Predicated region
      $region37: #{upsample_forward.1} parent=11 // pred_check
        %p295 = pneg %p215
      $region38: #{upsample_forward.1} parent=11 // pred_check_branch
        %297 = sbr.rel (%p295) target = $region40
      $region39: #{upsample_forward.1} parent=11 // pred_region
        _
      $region40: #{upsample_forward.1} parent=11 // pred_fallthru
        _
      // Predicated region
      $region41: #{upsample_forward.1} parent=11 // pred_check
        %p298 = pneg %p236
      $region42: #{upsample_forward.1} parent=11 // pred_check_branch
        %300 = sbr.rel (%p298) target = $region44
      $region43: #{upsample_forward.1} parent=11 // pred_region
        _
      $region44: #{upsample_forward.1} parent=11 // pred_fallthru
        _
    $region12: #{upsample_forward.1} parent=5 // pred_fallthru
      _
    %p301 = scmp.lt.s32.totalorder %s16, 2
    // Predicated region
    $region45: #{upsample_forward.1} parent=5 // pred_check
      %p302 = pneg %p301
    $region46: #{upsample_forward.1} parent=5 // pred_check_branch
      %304 = sbr.rel (%p302) target = $region48
    $region47: #{upsample_forward.1} parent=5 // pred_region
      // Predicated region
      $region49: #{upsample_forward.1} parent=47 // pred_check
        %p305 = pneg %p36
      $region50: #{upsample_forward.1} parent=47 // pred_check_branch
        %307 = sbr.rel (%p305) target = $region52
      $region51: #{upsample_forward.1} parent=47 // pred_region
        %p308 = scmp.lt.s32.totalorder %s16, 1
        %s309 = scalar_select %p308, %s16, 1
        %s310 = smul.addr %s309, 8
        %s311 = smul.addr %s310, 8
        %s312 = scalar_lea.vmem %s0, %s311
      $region52: #{upsample_forward.1} parent=47 // pred_fallthru
        _
      // Predicated region
      $region53: #{upsample_forward.1} parent=47 // pred_check
        %p313 = pneg %p62
      $region54: #{upsample_forward.1} parent=47 // pred_check_branch
        %315 = sbr.rel (%p313) target = $region56
      $region55: #{upsample_forward.1} parent=47 // pred_region
        %p316 = scmp.lt.s32.totalorder %s16, 1
        %s317 = scalar_select %p316, %s16, 1
        %s318 = smul.addr %s317, 32
        %s319 = smul.addr %s318, 8
        %s320 = scalar_lea.vmem %s1, %s319
      $region56: #{upsample_forward.1} parent=47 // pred_fallthru
        _
    $region48: #{upsample_forward.1} parent=5 // pred_fallthru
      _
    %p321 = scmp.le.s32.totalorder 1, %s16
    %p322 = scmp.lt.s32.totalorder %s16, 3
    %p323 = pnand %p321, %p322
    %p324 = pneg %p323
    // Predicated region
    $region57: #{upsample_forward.1} parent=5 // pred_check
      _
    $region58: #{upsample_forward.1} parent=5 // pred_check_branch
      %326 = sbr.rel (%p323) target = $region60
    $region59: #{upsample_forward.1} parent=5 // pred_region
      %s327 = ssub.s32 %s16, 1
      %p328 = scmp.lt.s32.totalorder %s21, 1
      %s329 = scalar_select %p328, %s21, 1
      %s330 = smul.addr %s329, 8
      %s331 = smul.addr %s330, 8
      %s332 = scalar_lea.vmem %s0, %s331
      %p333 = pneg %p42
      %p334 = pneg %p39
      %p335 = scmp.lt.s32.totalorder %s21, 1
      %s336 = scalar_select %p335, %s21, 1
      %s337 = smul.addr %s336, 32
      %s338 = smul.addr %s337, 8
      %s339 = scalar_lea.vmem %s1, %s338
      %p340 = pneg %p68
      %p341 = pneg %p65
      %p342 = pneg %p89
      %p343 = pneg %p86
      %p344 = pneg %p110
      %p345 = pneg %p107
      %p346 = pneg %p131
      %p347 = pneg %p128
      %p348 = pneg %p152
      %p349 = pneg %p149
      %p350 = pneg %p173
      %p351 = pneg %p170
      %p352 = pneg %p194
      %p353 = pneg %p191
      %p354 = pneg %p215
      %p355 = pneg %p212
      %p356 = pneg %p236
      %p357 = pneg %p233
      %p358 = pneg %p262
      %p359 = pneg %p259
      %p360 = scmp.lt.s32.totalorder %s21, 1
      %s361 = scalar_select %p360, %s21, 1
      %s362 = smul.addr %s361, 2
      %s363 = smul.addr %s362, 8
      %s364 = scalar_lea.vmem %s10, %s363
      %p365 = scmp.lt.s32.totalorder %s21, 1
      %s366 = scalar_select %p365, %s21, 1
      %s367 = smul.addr %s366, 8
      %s368 = smul.addr %s367, 8
      %s369 = scalar_lea.vmem %s0, %s368
      %p370 = scmp.lt.s32.totalorder %s21, 1
      %s371 = scalar_select %p370, %s21, 1
      %s372 = smul.addr %s371, 32
      %s373 = smul.addr %s372, 8
      %s374 = scalar_lea.vmem %s1, %s373
      %p375 = scmp.lt.s32.totalorder %s21, 1
      %s376 = scalar_select %p375, %s21, 1
      %s377 = smul.addr %s376, 2
      %s378 = smul.addr %s377, 8
      %s379 = scalar_lea.vmem %s10, %s378
      %vm380 = vcmask 195584
      %381 = vst.msk [vmem:[#allocation2] sm:$0xff] %vm380, 0.0
      %382 = vst.msk [vmem:[#allocation2 + $0x8] sm:$0xff] %vm380, 0.0
      %383 = vst.msk [vmem:[#allocation2 + $0x10] sm:$0xff] %vm380, 0.0
      %384 = vst.msk [vmem:[#allocation2 + $0x118] sm:$0xff] %vm380, 0.0
      %385 = vst.msk [vmem:[#allocation2 + $0x120] sm:$0xff] %vm380, 0.0
      %386 = vst.msk [vmem:[#allocation2 + $0x128] sm:$0xff] %vm380, 0.0
      %v387 = vld [vmem:[%s2] sm:$0xff]
      %v388 = vld [vmem:[%s2 + $0x8] sm:$0xff]
      %v389 = vld [vmem:[%s2 + $0x10] sm:$0xff]
      %v390 = vld [vmem:[%s2 + $0x18] sm:$0xff]
      %v391 = vld [vmem:[%s2 + $0x20] sm:$0xff]
      %v392 = vld [vmem:[%s2 + $0x28] sm:$0xff]
      %v393 = vld [vmem:[%s2 + $0x30] sm:$0xff]
      %v394 = vld [vmem:[%s2 + $0x38] sm:$0xff]
      %v395 = vld [vmem:[%s2 + $0x40] sm:$0xff]
      %v396 = vld [vmem:[%s2 + $0x48] sm:$0xff]
      %v397 = vld [vmem:[%s2 + $0x50] sm:$0xff]
      %v398 = vld [vmem:[%s2 + $0x58] sm:$0xff]
      %v399 = vld [vmem:[%s2 + $0x60] sm:$0xff]
      %v400 = vld [vmem:[%s2 + $0x68] sm:$0xff]
      %v401 = vld [vmem:[%s2 + $0x70] sm:$0xff]
      %v402 = vld [vmem:[%s2 + $0x78] sm:$0xff]
      %v403 = vld [vmem:[%s2 + $0x80] sm:$0xff]
      %v404 = vld [vmem:[%s2 + $0x88] sm:$0xff]
      %v405 = vld [vmem:[%s2 + $0x90] sm:$0xff]
      %v406 = vld [vmem:[%s2 + $0x98] sm:$0xff]
      %v407 = vld [vmem:[%s2 + $0xa0] sm:$0xff]
      %v408 = vld [vmem:[%s2 + $0xa8] sm:$0xff]
      %v409 = vld [vmem:[%s2 + $0xb0] sm:$0xff]
      %v410 = vld [vmem:[%s2 + $0xb8] sm:$0xff]
      %v411 = vld [vmem:[%s2 + $0xc0] sm:$0xff]
      %v412 = vld [vmem:[%s2 + $0xc8] sm:$0xff]
      %v413 = vld [vmem:[%s2 + $0xd0] sm:$0xff]
      %v414 = vld [vmem:[%s2 + $0xd8] sm:$0xff]
      %v415 = vld [vmem:[%s2 + $0xe0] sm:$0xff]
      %v416 = vld [vmem:[%s2 + $0xe8] sm:$0xff]
      %v417 = vld [vmem:[%s2 + $0xf0] sm:$0xff]
      %v418 = vld [vmem:[%s2 + $0xf8] sm:$0xff]
      %v419 = vld [vmem:[%s369] sm:$0xff]
      %v420 = vld [vmem:[%s369 + $0x8] sm:$0xff]
      %v421 = vld [vmem:[%s369 + $0x10] sm:$0xff]
      %v422 = vld [vmem:[%s369 + $0x18] sm:$0xff]
      %v423 = vld [vmem:[%s369 + $0x20] sm:$0xff]
      %v424 = vld [vmem:[%s369 + $0x28] sm:$0xff]
      %v425 = vld [vmem:[%s369 + $0x30] sm:$0xff]
      %v426 = vld [vmem:[%s369 + $0x38] sm:$0xff]
      %vm427 = vcmask 523264
      %v429 = vsel %vm427, %v387, 0
      %v432 = vsel %vm427, %v388, 0
      %v435 = vsel %vm427, %v389, 0
      %v438 = vsel %vm427, %v390, 0
      %v441 = vsel %vm427, %v391, 0
      %v444 = vsel %vm427, %v392, 0
      %v447 = vsel %vm427, %v393, 0
      %v450 = vsel %vm427, %v394, 0
      %v453 = vsel %vm427, %v395, 0
      %v456 = vsel %vm427, %v396, 0
      %v459 = vsel %vm427, %v397, 0
      %v462 = vsel %vm427, %v398, 0
      %v465 = vsel %vm427, %v399, 0
      %v468 = vsel %vm427, %v400, 0
      %v471 = vsel %vm427, %v401, 0
      %v474 = vsel %vm427, %v402, 0
      %v477 = vsel %vm427, %v403, 0
      %v480 = vsel %vm427, %v404, 0
      %v483 = vsel %vm427, %v405, 0
      %v486 = vsel %vm427, %v406, 0
      %v489 = vsel %vm427, %v407, 0
      %v492 = vsel %vm427, %v408, 0
      %v495 = vsel %vm427, %v409, 0
      %v498 = vsel %vm427, %v410, 0
      %v501 = vsel %vm427, %v411, 0
      %v504 = vsel %vm427, %v412, 0
      %v507 = vsel %vm427, %v413, 0
      %v510 = vsel %vm427, %v414, 0
      %v513 = vsel %vm427, %v415, 0
      %v516 = vsel %vm427, %v416, 0
      %v519 = vsel %vm427, %v417, 0
      %v522 = vsel %vm427, %v418, 0
      %524 = vmatpush.msra.mxu0 0.0
      %525 = vmatpush.msra.mxu0 0.0
      %526 = vmatpush.msra.mxu0 0.0
      %527 = vmatpush.msra.mxu0 0.0
      %528 = vmatpush.msra.mxu0 0.0
      %529 = vmatpush.msra.mxu0 0.0
      %530 = vmatpush.msra.mxu0 0.0
      %531 = vmatpush.msra.mxu0 0.0
      %532 = vmatpush.msra.mxu0 %v426
      %533 = vmatpush.msra.mxu0 %v425
      %534 = vmatpush.msra.mxu0 %v424
      %535 = vmatpush.msra.mxu0 %v423
      %536 = vmatpush.msra.mxu0 %v422
      %537 = vmatpush.msra.mxu0 %v421
      %538 = vmatpush.msra.mxu0 %v420
      %539 = vmatpush.msra.mxu0 %v419
      %540 = vmatmul.f32.gmra.mxu0 %v429
      %v541 = vpop.f32.mrf.mxu0
      %v542 = vadd.f32 0.0, %v541
      %543 = vmatmul.f32.gmra.mxu0 %v432
      %v544 = vpop.f32.mrf.mxu0
      %v545 = vadd.f32 0.0, %v544
      %546 = vmatmul.f32.gmra.mxu0 %v435
      %v547 = vpop.f32.mrf.mxu0
      %v548 = vadd.f32 0.0, %v547
      %549 = vmatmul.f32.gmra.mxu0 %v438
      %v550 = vpop.f32.mrf.mxu0
      %v551 = vadd.f32 0.0, %v550
      %552 = vmatmul.f32.gmra.mxu0 %v441
      %v553 = vpop.f32.mrf.mxu0
      %v554 = vadd.f32 0.0, %v553
      %555 = vmatmul.f32.gmra.mxu0 %v444
      %v556 = vpop.f32.mrf.mxu0
      %v557 = vadd.f32 0.0, %v556
      %558 = vmatmul.f32.gmra.mxu0 %v447
      %v559 = vpop.f32.mrf.mxu0
      %v560 = vadd.f32 0.0, %v559
      %561 = vmatmul.f32.gmra.mxu0 %v450
      %v562 = vpop.f32.mrf.mxu0
      %v563 = vadd.f32 0.0, %v562
      %564 = vmatmul.f32.gmra.mxu0 %v453
      %v565 = vpop.f32.mrf.mxu0
      %v566 = vadd.f32 0.0, %v565
      %567 = vmatmul.f32.gmra.mxu0 %v456
      %v568 = vpop.f32.mrf.mxu0
      %v569 = vadd.f32 0.0, %v568
      %570 = vmatmul.f32.gmra.mxu0 %v459
      %v571 = vpop.f32.mrf.mxu0
      %v572 = vadd.f32 0.0, %v571
      %573 = vmatmul.f32.gmra.mxu0 %v462
      %v574 = vpop.f32.mrf.mxu0
      %v575 = vadd.f32 0.0, %v574
      %576 = vmatmul.f32.gmra.mxu0 %v465
      %v577 = vpop.f32.mrf.mxu0
      %v578 = vadd.f32 0.0, %v577
      %579 = vmatmul.f32.gmra.mxu0 %v468
      %v580 = vpop.f32.mrf.mxu0
      %v581 = vadd.f32 0.0, %v580
      %582 = vmatmul.f32.gmra.mxu0 %v471
      %v583 = vpop.f32.mrf.mxu0
      %v584 = vadd.f32 0.0, %v583
      %585 = vmatmul.f32.gmra.mxu0 %v474
      %v586 = vpop.f32.mrf.mxu0
      %v587 = vadd.f32 0.0, %v586
      %588 = vmatmul.f32.gmra.mxu0 %v477
      %v589 = vpop.f32.mrf.mxu0
      %v590 = vadd.f32 0.0, %v589
      %591 = vmatmul.f32.gmra.mxu0 %v480
      %v592 = vpop.f32.mrf.mxu0
      %v593 = vadd.f32 0.0, %v592
      %594 = vmatmul.f32.gmra.mxu0 %v483
      %v595 = vpop.f32.mrf.mxu0
      %v596 = vadd.f32 0.0, %v595
      %597 = vmatmul.f32.gmra.mxu0 %v486
      %v598 = vpop.f32.mrf.mxu0
      %v599 = vadd.f32 0.0, %v598
      %600 = vmatmul.f32.gmra.mxu0 %v489
      %v601 = vpop.f32.mrf.mxu0
      %v602 = vadd.f32 0.0, %v601
      %603 = vmatmul.f32.gmra.mxu0 %v492
      %v604 = vpop.f32.mrf.mxu0
      %v605 = vadd.f32 0.0, %v604
      %606 = vmatmul.f32.gmra.mxu0 %v495
      %v607 = vpop.f32.mrf.mxu0
      %v608 = vadd.f32 0.0, %v607
      %609 = vmatmul.f32.gmra.mxu0 %v498
      %v610 = vpop.f32.mrf.mxu0
      %v611 = vadd.f32 0.0, %v610
      %612 = vmatmul.f32.gmra.mxu0 %v501
      %v613 = vpop.f32.mrf.mxu0
      %v614 = vadd.f32 0.0, %v613
      %615 = vmatmul.f32.gmra.mxu0 %v504
      %v616 = vpop.f32.mrf.mxu0
      %v617 = vadd.f32 0.0, %v616
      %618 = vmatmul.f32.gmra.mxu0 %v507
      %v619 = vpop.f32.mrf.mxu0
      %v620 = vadd.f32 0.0, %v619
      %621 = vmatmul.f32.gmra.mxu0 %v510
      %v622 = vpop.f32.mrf.mxu0
      %v623 = vadd.f32 0.0, %v622
      %624 = vmatmul.f32.gmra.mxu0 %v513
      %v625 = vpop.f32.mrf.mxu0
      %v626 = vadd.f32 0.0, %v625
      %627 = vmatmul.f32.gmra.mxu0 %v516
      %v628 = vpop.f32.mrf.mxu0
      %v629 = vadd.f32 0.0, %v628
      %630 = vmatmul.f32.gmra.mxu0 %v519
      %v631 = vpop.f32.mrf.mxu0
      %v632 = vadd.f32 0.0, %v631
      %633 = vmatmul.f32.gmra.mxu0 %v522
      %v634 = vpop.f32.mrf.mxu0
      %v635 = vadd.f32 0.0, %v634
      %636 = vdwg.mxu0
      %vm637 = vcmask 130048
      %638 = vst.msk [vmem:[#allocation2 + $0x18] sm:$0xff] %vm637, %v542
      %639 = vst.msk [vmem:[#allocation2 + $0x20] sm:$0xff] %vm637, %v545
      %640 = vst.msk [vmem:[#allocation2 + $0x28] sm:$0xff] %vm637, %v548
      %641 = vst.msk [vmem:[#allocation2 + $0x30] sm:$0xff] %vm637, %v551
      %642 = vst.msk [vmem:[#allocation2 + $0x38] sm:$0xff] %vm637, %v554
      %643 = vst.msk [vmem:[#allocation2 + $0x40] sm:$0xff] %vm637, %v557
      %644 = vst.msk [vmem:[#allocation2 + $0x48] sm:$0xff] %vm637, %v560
      %645 = vst.msk [vmem:[#allocation2 + $0x50] sm:$0xff] %vm637, %v563
      %646 = vst.msk [vmem:[#allocation2 + $0x58] sm:$0xff] %vm637, %v566
      %647 = vst.msk [vmem:[#allocation2 + $0x60] sm:$0xff] %vm637, %v569
      %648 = vst.msk [vmem:[#allocation2 + $0x68] sm:$0xff] %vm637, %v572
      %649 = vst.msk [vmem:[#allocation2 + $0x70] sm:$0xff] %vm637, %v575
      %650 = vst.msk [vmem:[#allocation2 + $0x78] sm:$0xff] %vm637, %v578
      %651 = vst.msk [vmem:[#allocation2 + $0x80] sm:$0xff] %vm637, %v581
      %652 = vst.msk [vmem:[#allocation2 + $0x88] sm:$0xff] %vm637, %v584
      %653 = vst.msk [vmem:[#allocation2 + $0x90] sm:$0xff] %vm637, %v587
      %654 = vst.msk [vmem:[#allocation2 + $0x98] sm:$0xff] %vm637, %v590
      %655 = vst.msk [vmem:[#allocation2 + $0xa0] sm:$0xff] %vm637, %v593
      %656 = vst.msk [vmem:[#allocation2 + $0xa8] sm:$0xff] %vm637, %v596
      %657 = vst.msk [vmem:[#allocation2 + $0xb0] sm:$0xff] %vm637, %v599
      %658 = vst.msk [vmem:[#allocation2 + $0xb8] sm:$0xff] %vm637, %v602
      %659 = vst.msk [vmem:[#allocation2 + $0xc0] sm:$0xff] %vm637, %v605
      %660 = vst.msk [vmem:[#allocation2 + $0xc8] sm:$0xff] %vm637, %v608
      %661 = vst.msk [vmem:[#allocation2 + $0xd0] sm:$0xff] %vm637, %v611
      %662 = vst.msk [vmem:[#allocation2 + $0xd8] sm:$0xff] %vm637, %v614
      %663 = vst.msk [vmem:[#allocation2 + $0xe0] sm:$0xff] %vm637, %v617
      %664 = vst.msk [vmem:[#allocation2 + $0xe8] sm:$0xff] %vm637, %v620
      %665 = vst.msk [vmem:[#allocation2 + $0xf0] sm:$0xff] %vm637, %v623
      %666 = vst.msk [vmem:[#allocation2 + $0xf8] sm:$0xff] %vm637, %v626
      %667 = vst.msk [vmem:[#allocation2 + $0x100] sm:$0xff] %vm637, %v629
      %668 = vst.msk [vmem:[#allocation2 + $0x108] sm:$0xff] %vm637, %v632
      %669 = vst.msk [vmem:[#allocation2 + $0x110] sm:$0xff] %vm637, %v635
      %v670 = vld [vmem:[%s374] sm:$0xff]
      %v671 = vld [vmem:[%s374 + $0x8] sm:$0xff]
      %v672 = vld [vmem:[%s374 + $0x10] sm:$0xff]
      %v673 = vld [vmem:[%s374 + $0x18] sm:$0xff]
      %v674 = vld [vmem:[%s374 + $0x20] sm:$0xff]
      %v675 = vld [vmem:[%s374 + $0x28] sm:$0xff]
      %v676 = vld [vmem:[%s374 + $0x30] sm:$0xff]
      %v677 = vld [vmem:[%s374 + $0x38] sm:$0xff]
      %v678 = vld [vmem:[%s374 + $0x40] sm:$0xff]
      %v679 = vld [vmem:[%s374 + $0x48] sm:$0xff]
      %v680 = vld [vmem:[%s374 + $0x50] sm:$0xff]
      %v681 = vld [vmem:[%s374 + $0x58] sm:$0xff]
      %v682 = vld [vmem:[%s374 + $0x60] sm:$0xff]
      %v683 = vld [vmem:[%s374 + $0x68] sm:$0xff]
      %v684 = vld [vmem:[%s374 + $0x70] sm:$0xff]
      %v685 = vld [vmem:[%s374 + $0x78] sm:$0xff]
      %v686 = vld [vmem:[%s374 + $0x80] sm:$0xff]
      %v687 = vld [vmem:[%s374 + $0x88] sm:$0xff]
      %v688 = vld [vmem:[%s374 + $0x90] sm:$0xff]
      %v689 = vld [vmem:[%s374 + $0x98] sm:$0xff]
      %v690 = vld [vmem:[%s374 + $0xa0] sm:$0xff]
      %v691 = vld [vmem:[%s374 + $0xa8] sm:$0xff]
      %v692 = vld [vmem:[%s374 + $0xb0] sm:$0xff]
      %v693 = vld [vmem:[%s374 + $0xb8] sm:$0xff]
      %v694 = vld [vmem:[%s374 + $0xc0] sm:$0xff]
      %v695 = vld [vmem:[%s374 + $0xc8] sm:$0xff]
      %v696 = vld [vmem:[%s374 + $0xd0] sm:$0xff]
      %v697 = vld [vmem:[%s374 + $0xd8] sm:$0xff]
      %v698 = vld [vmem:[%s374 + $0xe0] sm:$0xff]
      %v699 = vld [vmem:[%s374 + $0xe8] sm:$0xff]
      %v700 = vld [vmem:[%s374 + $0xf0] sm:$0xff]
      %v701 = vld [vmem:[%s374 + $0xf8] sm:$0xff]
      %734 = vrot.lane.b32.xlu0 %v670, 16
      %v735 = vpop.permute.xlu0 %734
      %736 = vrot.lane.b32.xlu0 %v671, 16
      %v737 = vpop.permute.xlu0 %736
      %738 = vrot.lane.b32.xlu0 %v672, 16
      %v739 = vpop.permute.xlu0 %738
      %740 = vrot.lane.b32.xlu0 %v673, 16
      %v741 = vpop.permute.xlu0 %740
      %742 = vrot.lane.b32.xlu0 %v674, 16
      %v743 = vpop.permute.xlu0 %742
      %744 = vrot.lane.b32.xlu0 %v675, 16
      %v745 = vpop.permute.xlu0 %744
      %746 = vrot.lane.b32.xlu0 %v676, 16
      %v747 = vpop.permute.xlu0 %746
      %748 = vrot.lane.b32.xlu0 %v677, 16
      %v749 = vpop.permute.xlu0 %748
      %750 = vrot.lane.b32.xlu0 %v678, 16
      %v751 = vpop.permute.xlu0 %750
      %752 = vrot.lane.b32.xlu0 %v679, 16
      %v753 = vpop.permute.xlu0 %752
      %754 = vrot.lane.b32.xlu0 %v680, 16
      %v755 = vpop.permute.xlu0 %754
      %756 = vrot.lane.b32.xlu0 %v681, 16
      %v757 = vpop.permute.xlu0 %756
      %758 = vrot.lane.b32.xlu0 %v682, 16
      %v759 = vpop.permute.xlu0 %758
      %760 = vrot.lane.b32.xlu0 %v683, 16
      %v761 = vpop.permute.xlu0 %760
      %762 = vrot.lane.b32.xlu0 %v684, 16
      %v763 = vpop.permute.xlu0 %762
      %764 = vrot.lane.b32.xlu0 %v685, 16
      %v765 = vpop.permute.xlu0 %764
      %766 = vrot.lane.b32.xlu0 %v686, 16
      %v767 = vpop.permute.xlu0 %766
      %768 = vrot.lane.b32.xlu0 %v687, 16
      %v769 = vpop.permute.xlu0 %768
      %770 = vrot.lane.b32.xlu0 %v688, 16
      %v771 = vpop.permute.xlu0 %770
      %772 = vrot.lane.b32.xlu0 %v689, 16
      %v773 = vpop.permute.xlu0 %772
      %774 = vrot.lane.b32.xlu0 %v690, 16
      %v775 = vpop.permute.xlu0 %774
      %776 = vrot.lane.b32.xlu0 %v691, 16
      %v777 = vpop.permute.xlu0 %776
      %778 = vrot.lane.b32.xlu0 %v692, 16
      %v779 = vpop.permute.xlu0 %778
      %780 = vrot.lane.b32.xlu0 %v693, 16
      %v781 = vpop.permute.xlu0 %780
      %782 = vrot.lane.b32.xlu0 %v694, 16
      %v783 = vpop.permute.xlu0 %782
      %784 = vrot.lane.b32.xlu0 %v695, 16
      %v785 = vpop.permute.xlu0 %784
      %786 = vrot.lane.b32.xlu0 %v696, 16
      %v787 = vpop.permute.xlu0 %786
      %788 = vrot.lane.b32.xlu0 %v697, 16
      %v789 = vpop.permute.xlu0 %788
      %790 = vrot.lane.b32.xlu0 %v698, 16
      %v791 = vpop.permute.xlu0 %790
      %792 = vrot.lane.b32.xlu0 %v699, 16
      %v793 = vpop.permute.xlu0 %792
      %794 = vrot.lane.b32.xlu0 %v700, 16
      %v795 = vpop.permute.xlu0 %794
      %796 = vrot.lane.b32.xlu0 %v701, 16
      %v797 = vpop.permute.xlu0 %796
      %vm830 = vcmask 195712
      %831 = vst.msk [vmem:[#allocation2 + $0x18] sm:$0xff] %vm830, %v735
      %832 = vst.msk [vmem:[#allocation2 + $0x20] sm:$0xff] %vm830, %v737
      %833 = vst.msk [vmem:[#allocation2 + $0x28] sm:$0xff] %vm830, %v739
      %834 = vst.msk [vmem:[#allocation2 + $0x30] sm:$0xff] %vm830, %v741
      %835 = vst.msk [vmem:[#allocation2 + $0x38] sm:$0xff] %vm830, %v743
      %836 = vst.msk [vmem:[#allocation2 + $0x40] sm:$0xff] %vm830, %v745
      %837 = vst.msk [vmem:[#allocation2 + $0x48] sm:$0xff] %vm830, %v747
      %838 = vst.msk [vmem:[#allocation2 + $0x50] sm:$0xff] %vm830, %v749
      %839 = vst.msk [vmem:[#allocation2 + $0x58] sm:$0xff] %vm830, %v751
      %840 = vst.msk [vmem:[#allocation2 + $0x60] sm:$0xff] %vm830, %v753
      %841 = vst.msk [vmem:[#allocation2 + $0x68] sm:$0xff] %vm830, %v755
      %842 = vst.msk [vmem:[#allocation2 + $0x70] sm:$0xff] %vm830, %v757
      %843 = vst.msk [vmem:[#allocation2 + $0x78] sm:$0xff] %vm830, %v759
      %844 = vst.msk [vmem:[#allocation2 + $0x80] sm:$0xff] %vm830, %v761
      %845 = vst.msk [vmem:[#allocation2 + $0x88] sm:$0xff] %vm830, %v763
      %846 = vst.msk [vmem:[#allocation2 + $0x90] sm:$0xff] %vm830, %v765
      %847 = vst.msk [vmem:[#allocation2 + $0x98] sm:$0xff] %vm830, %v767
      %848 = vst.msk [vmem:[#allocation2 + $0xa0] sm:$0xff] %vm830, %v769
      %849 = vst.msk [vmem:[#allocation2 + $0xa8] sm:$0xff] %vm830, %v771
      %850 = vst.msk [vmem:[#allocation2 + $0xb0] sm:$0xff] %vm830, %v773
      %851 = vst.msk [vmem:[#allocation2 + $0xb8] sm:$0xff] %vm830, %v775
      %852 = vst.msk [vmem:[#allocation2 + $0xc0] sm:$0xff] %vm830, %v777
      %853 = vst.msk [vmem:[#allocation2 + $0xc8] sm:$0xff] %vm830, %v779
      %854 = vst.msk [vmem:[#allocation2 + $0xd0] sm:$0xff] %vm830, %v781
      %855 = vst.msk [vmem:[#allocation2 + $0xd8] sm:$0xff] %vm830, %v783
      %856 = vst.msk [vmem:[#allocation2 + $0xe0] sm:$0xff] %vm830, %v785
      %857 = vst.msk [vmem:[#allocation2 + $0xe8] sm:$0xff] %vm830, %v787
      %858 = vst.msk [vmem:[#allocation2 + $0xf0] sm:$0xff] %vm830, %v789
      %859 = vst.msk [vmem:[#allocation2 + $0xf8] sm:$0xff] %vm830, %v791
      %860 = vst.msk [vmem:[#allocation2 + $0x100] sm:$0xff] %vm830, %v793
      %861 = vst.msk [vmem:[#allocation2 + $0x108] sm:$0xff] %vm830, %v795
      %862 = vst.msk [vmem:[#allocation2 + $0x110] sm:$0xff] %vm830, %v797
      %v863 = vld [vmem:[#allocation2 + $0x7] sm:$0xff]
      %v864 = vld [vmem:[#allocation2 + $0xf] sm:$0xff]
      %v865 = vld [vmem:[#allocation2 + $0x17] sm:$0xff]
      %v866 = vld [vmem:[#allocation2 + $0x1f] sm:$0xff]
      %v867 = vld [vmem:[#allocation2 + $0x27] sm:$0xff]
      %v868 = vld [vmem:[#allocation2 + $0x2f] sm:$0xff]
      %v869 = vld [vmem:[#allocation2 + $0x37] sm:$0xff]
      %v870 = vld [vmem:[#allocation2 + $0x3f] sm:$0xff]
      %v871 = vld [vmem:[#allocation2 + $0x47] sm:$0xff]
      %v872 = vld [vmem:[#allocation2 + $0x4f] sm:$0xff]
      %v873 = vld [vmem:[#allocation2 + $0x57] sm:$0xff]
      %v874 = vld [vmem:[#allocation2 + $0x5f] sm:$0xff]
      %v875 = vld [vmem:[#allocation2 + $0x67] sm:$0xff]
      %v876 = vld [vmem:[#allocation2 + $0x6f] sm:$0xff]
      %v877 = vld [vmem:[#allocation2 + $0x77] sm:$0xff]
      %v878 = vld [vmem:[#allocation2 + $0x7f] sm:$0xff]
      %v879 = vld [vmem:[#allocation2 + $0x87] sm:$0xff]
      %v880 = vld [vmem:[#allocation2 + $0x8f] sm:$0xff]
      %v881 = vld [vmem:[#allocation2 + $0x97] sm:$0xff]
      %v882 = vld [vmem:[#allocation2 + $0x9f] sm:$0xff]
      %v883 = vld [vmem:[#allocation2 + $0xa7] sm:$0xff]
      %v884 = vld [vmem:[#allocation2 + $0xaf] sm:$0xff]
      %v885 = vld [vmem:[#allocation2 + $0xb7] sm:$0xff]
      %v886 = vld [vmem:[#allocation2 + $0xbf] sm:$0xff]
      %v887 = vld [vmem:[#allocation2 + $0xc7] sm:$0xff]
      %v888 = vld [vmem:[#allocation2 + $0xcf] sm:$0xff]
      %v889 = vld [vmem:[#allocation2 + $0xd7] sm:$0xff]
      %v890 = vld [vmem:[#allocation2 + $0xdf] sm:$0xff]
      %v891 = vld [vmem:[#allocation2 + $0xe7] sm:$0xff]
      %v892 = vld [vmem:[#allocation2 + $0xef] sm:$0xff]
      %v893 = vld [vmem:[#allocation2 + $0xf7] sm:$0xff]
      %v894 = vld [vmem:[#allocation2 + $0xff] sm:$0xff]
      %v895 = vld [vmem:[%s3] sm:$0xff]
      %v896 = vld [vmem:[%s3 + $0x8] sm:$0xff]
      %v897 = vld [vmem:[%s3 + $0x10] sm:$0xff]
      %v898 = vld [vmem:[%s3 + $0x18] sm:$0xff]
      %v899 = vld [vmem:[%s3 + $0x20] sm:$0xff]
      %v900 = vld [vmem:[%s3 + $0x28] sm:$0xff]
      %v901 = vld [vmem:[%s3 + $0x30] sm:$0xff]
      %v902 = vld [vmem:[%s3 + $0x38] sm:$0xff]
      %v903 = vld [vmem:[%s3 + $0x40] sm:$0xff]
      %v904 = vld [vmem:[%s3 + $0x48] sm:$0xff]
      %v905 = vld [vmem:[%s3 + $0x50] sm:$0xff]
      %v906 = vld [vmem:[%s3 + $0x58] sm:$0xff]
      %v907 = vld [vmem:[%s3 + $0x60] sm:$0xff]
      %v908 = vld [vmem:[%s3 + $0x68] sm:$0xff]
      %v909 = vld [vmem:[%s3 + $0x70] sm:$0xff]
      %v910 = vld [vmem:[%s3 + $0x78] sm:$0xff]
      %v911 = vld [vmem:[%s3 + $0x80] sm:$0xff]
      %v912 = vld [vmem:[%s3 + $0x88] sm:$0xff]
      %v913 = vld [vmem:[%s3 + $0x90] sm:$0xff]
      %v914 = vld [vmem:[%s3 + $0x98] sm:$0xff]
      %v915 = vld [vmem:[%s3 + $0xa0] sm:$0xff]
      %v916 = vld [vmem:[%s3 + $0xa8] sm:$0xff]
      %v917 = vld [vmem:[%s3 + $0xb0] sm:$0xff]
      %v918 = vld [vmem:[%s3 + $0xb8] sm:$0xff]
      %v919 = vld [vmem:[%s3 + $0xc0] sm:$0xff]
      %v920 = vld [vmem:[%s3 + $0xc8] sm:$0xff]
      %v921 = vld [vmem:[%s3 + $0xd0] sm:$0xff]
      %v922 = vld [vmem:[%s3 + $0xd8] sm:$0xff]
      %v923 = vld [vmem:[%s3 + $0xe0] sm:$0xff]
      %v924 = vld [vmem:[%s3 + $0xe8] sm:$0xff]
      %v925 = vld [vmem:[%s3 + $0xf0] sm:$0xff]
      %v926 = vld [vmem:[%s3 + $0xf8] sm:$0xff]
      %928 = vset.pattern.permute.xlu0 0
      %929 = vperm.xlu0 %928, %v895
      %v930 = vpop.permute.xlu0 %929
      %933 = vset.pattern.permute.xlu0 0
      %934 = vperm.xlu0 %933, %v896
      %v935 = vpop.permute.xlu0 %934
      %938 = vset.pattern.permute.xlu0 0
      %939 = vperm.xlu0 %938, %v897
      %v940 = vpop.permute.xlu0 %939
      %943 = vset.pattern.permute.xlu0 0
      %944 = vperm.xlu0 %943, %v898
      %v945 = vpop.permute.xlu0 %944
      %948 = vset.pattern.permute.xlu0 0
      %949 = vperm.xlu0 %948, %v899
      %v950 = vpop.permute.xlu0 %949
      %953 = vset.pattern.permute.xlu0 0
      %954 = vperm.xlu0 %953, %v900
      %v955 = vpop.permute.xlu0 %954
      %958 = vset.pattern.permute.xlu0 0
      %959 = vperm.xlu0 %958, %v901
      %v960 = vpop.permute.xlu0 %959
      %963 = vset.pattern.permute.xlu0 0
      %964 = vperm.xlu0 %963, %v902
      %v965 = vpop.permute.xlu0 %964
      %968 = vset.pattern.permute.xlu0 0
      %969 = vperm.xlu0 %968, %v903
      %v970 = vpop.permute.xlu0 %969
      %973 = vset.pattern.permute.xlu0 0
      %974 = vperm.xlu0 %973, %v904
      %v975 = vpop.permute.xlu0 %974
      %978 = vset.pattern.permute.xlu0 0
      %979 = vperm.xlu0 %978, %v905
      %v980 = vpop.permute.xlu0 %979
      %983 = vset.pattern.permute.xlu0 0
      %984 = vperm.xlu0 %983, %v906
      %v985 = vpop.permute.xlu0 %984
      %988 = vset.pattern.permute.xlu0 0
      %989 = vperm.xlu0 %988, %v907
      %v990 = vpop.permute.xlu0 %989
      %993 = vset.pattern.permute.xlu0 0
      %994 = vperm.xlu0 %993, %v908
      %v995 = vpop.permute.xlu0 %994
      %998 = vset.pattern.permute.xlu0 0
      %999 = vperm.xlu0 %998, %v909
      %v1000 = vpop.permute.xlu0 %999
      %1003 = vset.pattern.permute.xlu0 0
      %1004 = vperm.xlu0 %1003, %v910
      %v1005 = vpop.permute.xlu0 %1004
      %1008 = vset.pattern.permute.xlu0 0
      %1009 = vperm.xlu0 %1008, %v911
      %v1010 = vpop.permute.xlu0 %1009
      %1013 = vset.pattern.permute.xlu0 0
      %1014 = vperm.xlu0 %1013, %v912
      %v1015 = vpop.permute.xlu0 %1014
      %1018 = vset.pattern.permute.xlu0 0
      %1019 = vperm.xlu0 %1018, %v913
      %v1020 = vpop.permute.xlu0 %1019
      %1023 = vset.pattern.permute.xlu0 0
      %1024 = vperm.xlu0 %1023, %v914
      %v1025 = vpop.permute.xlu0 %1024
      %1028 = vset.pattern.permute.xlu0 0
      %1029 = vperm.xlu0 %1028, %v915
      %v1030 = vpop.permute.xlu0 %1029
      %1033 = vset.pattern.permute.xlu0 0
      %1034 = vperm.xlu0 %1033, %v916
      %v1035 = vpop.permute.xlu0 %1034
      %1038 = vset.pattern.permute.xlu0 0
      %1039 = vperm.xlu0 %1038, %v917
      %v1040 = vpop.permute.xlu0 %1039
      %1043 = vset.pattern.permute.xlu0 0
      %1044 = vperm.xlu0 %1043, %v918
      %v1045 = vpop.permute.xlu0 %1044
      %1048 = vset.pattern.permute.xlu0 0
      %1049 = vperm.xlu0 %1048, %v919
      %v1050 = vpop.permute.xlu0 %1049
      %1053 = vset.pattern.permute.xlu0 0
      %1054 = vperm.xlu0 %1053, %v920
      %v1055 = vpop.permute.xlu0 %1054
      %1058 = vset.pattern.permute.xlu0 0
      %1059 = vperm.xlu0 %1058, %v921
      %v1060 = vpop.permute.xlu0 %1059
      %1063 = vset.pattern.permute.xlu0 0
      %1064 = vperm.xlu0 %1063, %v922
      %v1065 = vpop.permute.xlu0 %1064
      %1068 = vset.pattern.permute.xlu0 0
      %1069 = vperm.xlu0 %1068, %v923
      %v1070 = vpop.permute.xlu0 %1069
      %1073 = vset.pattern.permute.xlu0 0
      %1074 = vperm.xlu0 %1073, %v924
      %v1075 = vpop.permute.xlu0 %1074
      %1078 = vset.pattern.permute.xlu0 0
      %1079 = vperm.xlu0 %1078, %v925
      %v1080 = vpop.permute.xlu0 %1079
      %1083 = vset.pattern.permute.xlu0 0
      %1084 = vperm.xlu0 %1083, %v926
      %v1085 = vpop.permute.xlu0 %1084
      %v1087 = vmul.f32 %v863, %v930
      %v1088 = vmul.f32 %v864, %v935
      %v1089 = vmul.f32 %v865, %v940
      %v1090 = vmul.f32 %v866, %v945
      %v1091 = vmul.f32 %v867, %v950
      %v1092 = vmul.f32 %v868, %v955
      %v1093 = vmul.f32 %v869, %v960
      %v1094 = vmul.f32 %v870, %v965
      %v1095 = vmul.f32 %v871, %v970
      %v1096 = vmul.f32 %v872, %v975
      %v1097 = vmul.f32 %v873, %v980
      %v1098 = vmul.f32 %v874, %v985
      %v1099 = vmul.f32 %v875, %v990
      %v1100 = vmul.f32 %v876, %v995
      %v1101 = vmul.f32 %v877, %v1000
      %v1102 = vmul.f32 %v878, %v1005
      %v1103 = vmul.f32 %v879, %v1010
      %v1104 = vmul.f32 %v880, %v1015
      %v1105 = vmul.f32 %v881, %v1020
      %v1106 = vmul.f32 %v882, %v1025
      %v1107 = vmul.f32 %v883, %v1030
      %v1108 = vmul.f32 %v884, %v1035
      %v1109 = vmul.f32 %v885, %v1040
      %v1110 = vmul.f32 %v886, %v1045
      %v1111 = vmul.f32 %v887, %v1050
      %v1112 = vmul.f32 %v888, %v1055
      %v1113 = vmul.f32 %v889, %v1060
      %v1114 = vmul.f32 %v890, %v1065
      %v1115 = vmul.f32 %v891, %v1070
      %v1116 = vmul.f32 %v892, %v1075
      %v1117 = vmul.f32 %v893, %v1080
      %v1118 = vmul.f32 %v894, %v1085
      %v1119 = vld [vmem:[%s4] sm:$0xff]
      %v1120 = vld [vmem:[%s4 + $0x8] sm:$0xff]
      %v1121 = vld [vmem:[%s4 + $0x10] sm:$0xff]
      %v1122 = vld [vmem:[#allocation2 + $0x8] sm:$0xff]
      %v1123 = vld [vmem:[#allocation2 + $0x10] sm:$0xff]
      %v1124 = vld [vmem:[#allocation2 + $0x18] sm:$0xff]
      %v1125 = vld [vmem:[#allocation2 + $0x20] sm:$0xff]
      %v1126 = vld [vmem:[#allocation2 + $0x28] sm:$0xff]
      %v1127 = vld [vmem:[#allocation2 + $0x30] sm:$0xff]
      %v1128 = vld [vmem:[#allocation2 + $0x38] sm:$0xff]
      %v1129 = vld [vmem:[#allocation2 + $0x40] sm:$0xff]
      %v1130 = vld [vmem:[#allocation2 + $0x48] sm:$0xff]
      %v1131 = vld [vmem:[#allocation2 + $0x50] sm:$0xff]
      %v1132 = vld [vmem:[#allocation2 + $0x58] sm:$0xff]
      %v1133 = vld [vmem:[#allocation2 + $0x60] sm:$0xff]
      %v1134 = vld [vmem:[#allocation2 + $0x68] sm:$0xff]
      %v1135 = vld [vmem:[#allocation2 + $0x70] sm:$0xff]
      %v1136 = vld [vmem:[#allocation2 + $0x78] sm:$0xff]
      %v1137 = vld [vmem:[#allocation2 + $0x80] sm:$0xff]
      %v1138 = vld [vmem:[#allocation2 + $0x88] sm:$0xff]
      %v1139 = vld [vmem:[#allocation2 + $0x90] sm:$0xff]
      %v1140 = vld [vmem:[#allocation2 + $0x98] sm:$0xff]
      %v1141 = vld [vmem:[#allocation2 + $0xa0] sm:$0xff]
      %v1142 = vld [vmem:[#allocation2 + $0xa8] sm:$0xff]
      %v1143 = vld [vmem:[#allocation2 + $0xb0] sm:$0xff]
      %v1144 = vld [vmem:[#allocation2 + $0xb8] sm:$0xff]
      %v1145 = vld [vmem:[#allocation2 + $0xc0] sm:$0xff]
      %v1146 = vld [vmem:[#allocation2 + $0xc8] sm:$0xff]
      %v1147 = vld [vmem:[#allocation2 + $0xd0] sm:$0xff]
      %v1148 = vld [vmem:[#allocation2 + $0xd8] sm:$0xff]
      %v1149 = vld [vmem:[#allocation2 + $0xe0] sm:$0xff]
      %v1150 = vld [vmem:[#allocation2 + $0xe8] sm:$0xff]
      %v1151 = vld [vmem:[#allocation2 + $0xf0] sm:$0xff]
      %v1152 = vld [vmem:[#allocation2 + $0xf8] sm:$0xff]
      %v1153 = vld [vmem:[#allocation2 + $0x100] sm:$0xff]
      %s1154 = scalar_lea.vmem %s4, 24
      %v1155 = vld [vmem:[%s1154] sm:$0xff]
      %v1156 = vld [vmem:[%s1154 + $0x8] sm:$0xff]
      %v1157 = vld [vmem:[%s1154 + $0x10] sm:$0xff]
      %v1159 = vsel %vm380, %v1122, 0
      %v1162 = vsel %vm380, %v1123, 0
      %v1165 = vsel %vm380, %v1124, 0
      %v1168 = vsel %vm380, %v1125, 0
      %v1171 = vsel %vm380, %v1126, 0
      %v1174 = vsel %vm380, %v1127, 0
      %v1177 = vsel %vm380, %v1128, 0
      %v1180 = vsel %vm380, %v1129, 0
      %v1183 = vsel %vm380, %v1130, 0
      %v1186 = vsel %vm380, %v1131, 0
      %v1189 = vsel %vm380, %v1132, 0
      %v1192 = vsel %vm380, %v1133, 0
      %v1195 = vsel %vm380, %v1134, 0
      %v1198 = vsel %vm380, %v1135, 0
      %v1201 = vsel %vm380, %v1136, 0
      %v1204 = vsel %vm380, %v1137, 0
      %v1207 = vsel %vm380, %v1138, 0
      %v1210 = vsel %vm380, %v1139, 0
      %v1213 = vsel %vm380, %v1140, 0
      %v1216 = vsel %vm380, %v1141, 0
      %v1219 = vsel %vm380, %v1142, 0
      %v1222 = vsel %vm380, %v1143, 0
      %v1225 = vsel %vm380, %v1144, 0
      %v1228 = vsel %vm380, %v1145, 0
      %v1231 = vsel %vm380, %v1146, 0
      %v1234 = vsel %vm380, %v1147, 0
      %v1237 = vsel %vm380, %v1148, 0
      %v1240 = vsel %vm380, %v1149, 0
      %v1243 = vsel %vm380, %v1150, 0
      %v1246 = vsel %vm380, %v1151, 0
      %v1249 = vsel %vm380, %v1152, 0
      %v1252 = vsel %vm380, %v1153, 0
      %1254 = vmatpush.msra.mxu0 0.0
      %1255 = vmatpush.msra.mxu0 0.0
      %1256 = vmatpush.msra.mxu0 0.0
      %1257 = vmatpush.msra.mxu0 0.0
      %1258 = vmatpush.msra.mxu0 0.0
      %1259 = vmatpush.msra.mxu0 0.0
      %1260 = vmatpush.msra.mxu0 0.0
      %1261 = vmatpush.msra.mxu0 0.0
      %1262 = vmatpush.msra.mxu0 0.0
      %1263 = vmatpush.msra.mxu0 0.0
      %1264 = vmatpush.msra.mxu0 0.0
      %1265 = vmatpush.msra.mxu0 0.0
      %1266 = vmatpush.msra.mxu0 0.0
      %1267 = vmatpush.msra.mxu0 %v1157
      %1268 = vmatpush.msra.mxu0 %v1156
      %1269 = vmatpush.msra.mxu0 %v1155
      %1270 = vmatmul.f32.gmra.mxu0 %v1159
      %v1271 = vpop.f32.mrf.mxu0
      %v1272 = vadd.f32 0.0, %v1271
      %1273 = vmatmul.f32.gmra.mxu0 %v1162
      %v1274 = vpop.f32.mrf.mxu0
      %v1275 = vadd.f32 0.0, %v1274
      %1276 = vmatmul.f32.gmra.mxu0 %v1165
      %v1277 = vpop.f32.mrf.mxu0
      %v1278 = vadd.f32 0.0, %v1277
      %1279 = vmatmul.f32.gmra.mxu0 %v1168
      %v1280 = vpop.f32.mrf.mxu0
      %v1281 = vadd.f32 0.0, %v1280
      %1282 = vmatmul.f32.gmra.mxu0 %v1171
      %v1283 = vpop.f32.mrf.mxu0
      %v1284 = vadd.f32 0.0, %v1283
      %1285 = vmatmul.f32.gmra.mxu0 %v1174
      %v1286 = vpop.f32.mrf.mxu0
      %v1287 = vadd.f32 0.0, %v1286
      %1288 = vmatmul.f32.gmra.mxu0 %v1177
      %v1289 = vpop.f32.mrf.mxu0
      %v1290 = vadd.f32 0.0, %v1289
      %1291 = vmatmul.f32.gmra.mxu0 %v1180
      %v1292 = vpop.f32.mrf.mxu0
      %v1293 = vadd.f32 0.0, %v1292
      %1294 = vmatmul.f32.gmra.mxu0 %v1183
      %v1295 = vpop.f32.mrf.mxu0
      %v1296 = vadd.f32 0.0, %v1295
      %1297 = vmatmul.f32.gmra.mxu0 %v1186
      %v1298 = vpop.f32.mrf.mxu0
      %v1299 = vadd.f32 0.0, %v1298
      %1300 = vmatmul.f32.gmra.mxu0 %v1189
      %v1301 = vpop.f32.mrf.mxu0
      %v1302 = vadd.f32 0.0, %v1301
      %1303 = vmatmul.f32.gmra.mxu0 %v1192
      %v1304 = vpop.f32.mrf.mxu0
      %v1305 = vadd.f32 0.0, %v1304
      %1306 = vmatmul.f32.gmra.mxu0 %v1195
      %v1307 = vpop.f32.mrf.mxu0
      %v1308 = vadd.f32 0.0, %v1307
      %1309 = vmatmul.f32.gmra.mxu0 %v1198
      %v1310 = vpop.f32.mrf.mxu0
      %v1311 = vadd.f32 0.0, %v1310
      %1312 = vmatmul.f32.gmra.mxu0 %v1201
      %v1313 = vpop.f32.mrf.mxu0
      %v1314 = vadd.f32 0.0, %v1313
      %1315 = vmatmul.f32.gmra.mxu0 %v1204
      %v1316 = vpop.f32.mrf.mxu0
      %v1317 = vadd.f32 0.0, %v1316
      %1318 = vmatmul.f32.gmra.mxu0 %v1207
      %v1319 = vpop.f32.mrf.mxu0
      %v1320 = vadd.f32 0.0, %v1319
      %1321 = vmatmul.f32.gmra.mxu0 %v1210
      %v1322 = vpop.f32.mrf.mxu0
      %v1323 = vadd.f32 0.0, %v1322
      %1324 = vmatmul.f32.gmra.mxu0 %v1213
      %v1325 = vpop.f32.mrf.mxu0
      %v1326 = vadd.f32 0.0, %v1325
      %1327 = vmatmul.f32.gmra.mxu0 %v1216
      %v1328 = vpop.f32.mrf.mxu0
      %v1329 = vadd.f32 0.0, %v1328
      %1330 = vmatmul.f32.gmra.mxu0 %v1219
      %v1331 = vpop.f32.mrf.mxu0
      %v1332 = vadd.f32 0.0, %v1331
      %1333 = vmatmul.f32.gmra.mxu0 %v1222
      %v1334 = vpop.f32.mrf.mxu0
      %v1335 = vadd.f32 0.0, %v1334
      %1336 = vmatmul.f32.gmra.mxu0 %v1225
      %v1337 = vpop.f32.mrf.mxu0
      %v1338 = vadd.f32 0.0, %v1337
      %1339 = vmatmul.f32.gmra.mxu0 %v1228
      %v1340 = vpop.f32.mrf.mxu0
      %v1341 = vadd.f32 0.0, %v1340
      %1342 = vmatmul.f32.gmra.mxu0 %v1231
      %v1343 = vpop.f32.mrf.mxu0
      %v1344 = vadd.f32 0.0, %v1343
      %1345 = vmatmul.f32.gmra.mxu0 %v1234
      %v1346 = vpop.f32.mrf.mxu0
      %v1347 = vadd.f32 0.0, %v1346
      %1348 = vmatmul.f32.gmra.mxu0 %v1237
      %v1349 = vpop.f32.mrf.mxu0
      %v1350 = vadd.f32 0.0, %v1349
      %1351 = vmatmul.f32.gmra.mxu0 %v1240
      %v1352 = vpop.f32.mrf.mxu0
      %v1353 = vadd.f32 0.0, %v1352
      %1354 = vmatmul.f32.gmra.mxu0 %v1243
      %v1355 = vpop.f32.mrf.mxu0
      %v1356 = vadd.f32 0.0, %v1355
      %1357 = vmatmul.f32.gmra.mxu0 %v1246
      %v1358 = vpop.f32.mrf.mxu0
      %v1359 = vadd.f32 0.0, %v1358
      %1360 = vmatmul.f32.gmra.mxu0 %v1249
      %v1361 = vpop.f32.mrf.mxu0
      %v1362 = vadd.f32 0.0, %v1361
      %1363 = vmatmul.f32.gmra.mxu0 %v1252
      %v1364 = vpop.f32.mrf.mxu0
      %v1365 = vadd.f32 0.0, %v1364
      %1366 = vdwg.mxu0
      %v1368 = vsel %vm380, %v1087, 0
      %v1371 = vsel %vm380, %v1088, 0
      %v1374 = vsel %vm380, %v1089, 0
      %v1377 = vsel %vm380, %v1090, 0
      %v1380 = vsel %vm380, %v1091, 0
      %v1383 = vsel %vm380, %v1092, 0
      %v1386 = vsel %vm380, %v1093, 0
      %v1389 = vsel %vm380, %v1094, 0
      %v1392 = vsel %vm380, %v1095, 0
      %v1395 = vsel %vm380, %v1096, 0
      %v1398 = vsel %vm380, %v1097, 0
      %v1401 = vsel %vm380, %v1098, 0
      %v1404 = vsel %vm380, %v1099, 0
      %v1407 = vsel %vm380, %v1100, 0
      %v1410 = vsel %vm380, %v1101, 0
      %v1413 = vsel %vm380, %v1102, 0
      %v1416 = vsel %vm380, %v1103, 0
      %v1419 = vsel %vm380, %v1104, 0
      %v1422 = vsel %vm380, %v1105, 0
      %v1425 = vsel %vm380, %v1106, 0
      %v1428 = vsel %vm380, %v1107, 0
      %v1431 = vsel %vm380, %v1108, 0
      %v1434 = vsel %vm380, %v1109, 0
      %v1437 = vsel %vm380, %v1110, 0
      %v1440 = vsel %vm380, %v1111, 0
      %v1443 = vsel %vm380, %v1112, 0
      %v1446 = vsel %vm380, %v1113, 0
      %v1449 = vsel %vm380, %v1114, 0
      %v1452 = vsel %vm380, %v1115, 0
      %v1455 = vsel %vm380, %v1116, 0
      %v1458 = vsel %vm380, %v1117, 0
      %v1461 = vsel %vm380, %v1118, 0
      %1463 = vmatpush.msra.mxu0 0.0
      %1464 = vmatpush.msra.mxu0 0.0
      %1465 = vmatpush.msra.mxu0 0.0
      %1466 = vmatpush.msra.mxu0 0.0
      %1467 = vmatpush.msra.mxu0 0.0
      %1468 = vmatpush.msra.mxu0 0.0
      %1469 = vmatpush.msra.mxu0 0.0
      %1470 = vmatpush.msra.mxu0 0.0
      %1471 = vmatpush.msra.mxu0 0.0
      %1472 = vmatpush.msra.mxu0 0.0
      %1473 = vmatpush.msra.mxu0 0.0
      %1474 = vmatpush.msra.mxu0 0.0
      %1475 = vmatpush.msra.mxu0 0.0
      %1476 = vmatpush.msra.mxu0 %v1121
      %1477 = vmatpush.msra.mxu0 %v1120
      %1478 = vmatpush.msra.mxu0 %v1119
      %1479 = vmatmul.f32.gmra.mxu0 %v1368
      %v1480 = vpop.f32.mrf.mxu0
      %v1481 = vadd.f32 %v1272, %v1480
      %1482 = vmatmul.f32.gmra.mxu0 %v1371
      %v1483 = vpop.f32.mrf.mxu0
      %v1484 = vadd.f32 %v1275, %v1483
      %1485 = vmatmul.f32.gmra.mxu0 %v1374
      %v1486 = vpop.f32.mrf.mxu0
      %v1487 = vadd.f32 %v1278, %v1486
      %1488 = vmatmul.f32.gmra.mxu0 %v1377
      %v1489 = vpop.f32.mrf.mxu0
      %v1490 = vadd.f32 %v1281, %v1489
      %1491 = vmatmul.f32.gmra.mxu0 %v1380
      %v1492 = vpop.f32.mrf.mxu0
      %v1493 = vadd.f32 %v1284, %v1492
      %1494 = vmatmul.f32.gmra.mxu0 %v1383
      %v1495 = vpop.f32.mrf.mxu0
      %v1496 = vadd.f32 %v1287, %v1495
      %1497 = vmatmul.f32.gmra.mxu0 %v1386
      %v1498 = vpop.f32.mrf.mxu0
      %v1499 = vadd.f32 %v1290, %v1498
      %1500 = vmatmul.f32.gmra.mxu0 %v1389
      %v1501 = vpop.f32.mrf.mxu0
      %v1502 = vadd.f32 %v1293, %v1501
      %1503 = vmatmul.f32.gmra.mxu0 %v1392
      %v1504 = vpop.f32.mrf.mxu0
      %v1505 = vadd.f32 %v1296, %v1504
      %1506 = vmatmul.f32.gmra.mxu0 %v1395
      %v1507 = vpop.f32.mrf.mxu0
      %v1508 = vadd.f32 %v1299, %v1507
      %1509 = vmatmul.f32.gmra.mxu0 %v1398
      %v1510 = vpop.f32.mrf.mxu0
      %v1511 = vadd.f32 %v1302, %v1510
      %1512 = vmatmul.f32.gmra.mxu0 %v1401
      %v1513 = vpop.f32.mrf.mxu0
      %v1514 = vadd.f32 %v1305, %v1513
      %1515 = vmatmul.f32.gmra.mxu0 %v1404
      %v1516 = vpop.f32.mrf.mxu0
      %v1517 = vadd.f32 %v1308, %v1516
      %1518 = vmatmul.f32.gmra.mxu0 %v1407
      %v1519 = vpop.f32.mrf.mxu0
      %v1520 = vadd.f32 %v1311, %v1519
      %1521 = vmatmul.f32.gmra.mxu0 %v1410
      %v1522 = vpop.f32.mrf.mxu0
      %v1523 = vadd.f32 %v1314, %v1522
      %1524 = vmatmul.f32.gmra.mxu0 %v1413
      %v1525 = vpop.f32.mrf.mxu0
      %v1526 = vadd.f32 %v1317, %v1525
      %1527 = vmatmul.f32.gmra.mxu0 %v1416
      %v1528 = vpop.f32.mrf.mxu0
      %v1529 = vadd.f32 %v1320, %v1528
      %1530 = vmatmul.f32.gmra.mxu0 %v1419
      %v1531 = vpop.f32.mrf.mxu0
      %v1532 = vadd.f32 %v1323, %v1531
      %1533 = vmatmul.f32.gmra.mxu0 %v1422
      %v1534 = vpop.f32.mrf.mxu0
      %v1535 = vadd.f32 %v1326, %v1534
      %1536 = vmatmul.f32.gmra.mxu0 %v1425
      %v1537 = vpop.f32.mrf.mxu0
      %v1538 = vadd.f32 %v1329, %v1537
      %1539 = vmatmul.f32.gmra.mxu0 %v1428
      %v1540 = vpop.f32.mrf.mxu0
      %v1541 = vadd.f32 %v1332, %v1540
      %1542 = vmatmul.f32.gmra.mxu0 %v1431
      %v1543 = vpop.f32.mrf.mxu0
      %v1544 = vadd.f32 %v1335, %v1543
      %1545 = vmatmul.f32.gmra.mxu0 %v1434
      %v1546 = vpop.f32.mrf.mxu0
      %v1547 = vadd.f32 %v1338, %v1546
      %1548 = vmatmul.f32.gmra.mxu0 %v1437
      %v1549 = vpop.f32.mrf.mxu0
      %v1550 = vadd.f32 %v1341, %v1549
      %1551 = vmatmul.f32.gmra.mxu0 %v1440
      %v1552 = vpop.f32.mrf.mxu0
      %v1553 = vadd.f32 %v1344, %v1552
      %1554 = vmatmul.f32.gmra.mxu0 %v1443
      %v1555 = vpop.f32.mrf.mxu0
      %v1556 = vadd.f32 %v1347, %v1555
      %1557 = vmatmul.f32.gmra.mxu0 %v1446
      %v1558 = vpop.f32.mrf.mxu0
      %v1559 = vadd.f32 %v1350, %v1558
      %1560 = vmatmul.f32.gmra.mxu0 %v1449
      %v1561 = vpop.f32.mrf.mxu0
      %v1562 = vadd.f32 %v1353, %v1561
      %1563 = vmatmul.f32.gmra.mxu0 %v1452
      %v1564 = vpop.f32.mrf.mxu0
      %v1565 = vadd.f32 %v1356, %v1564
      %1566 = vmatmul.f32.gmra.mxu0 %v1455
      %v1567 = vpop.f32.mrf.mxu0
      %v1568 = vadd.f32 %v1359, %v1567
      %1569 = vmatmul.f32.gmra.mxu0 %v1458
      %v1570 = vpop.f32.mrf.mxu0
      %v1571 = vadd.f32 %v1362, %v1570
      %1572 = vmatmul.f32.gmra.mxu0 %v1461
      %v1573 = vpop.f32.mrf.mxu0
      %v1574 = vadd.f32 %v1365, %v1573
      %1575 = vdwg.mxu0
      %v1576 = vld [vmem:[#allocation2 + $0x9] sm:$0xff]
      %v1577 = vld [vmem:[#allocation2 + $0x11] sm:$0xff]
      %v1578 = vld [vmem:[#allocation2 + $0x19] sm:$0xff]
      %v1579 = vld [vmem:[#allocation2 + $0x21] sm:$0xff]
      %v1580 = vld [vmem:[#allocation2 + $0x29] sm:$0xff]
      %v1581 = vld [vmem:[#allocation2 + $0x31] sm:$0xff]
      %v1582 = vld [vmem:[#allocation2 + $0x39] sm:$0xff]
      %v1583 = vld [vmem:[#allocation2 + $0x41] sm:$0xff]
      %v1584 = vld [vmem:[#allocation2 + $0x49] sm:$0xff]
      %v1585 = vld [vmem:[#allocation2 + $0x51] sm:$0xff]
      %v1586 = vld [vmem:[#allocation2 + $0x59] sm:$0xff]
      %v1587 = vld [vmem:[#allocation2 + $0x61] sm:$0xff]
      %v1588 = vld [vmem:[#allocation2 + $0x69] sm:$0xff]
      %v1589 = vld [vmem:[#allocation2 + $0x71] sm:$0xff]
      %v1590 = vld [vmem:[#allocation2 + $0x79] sm:$0xff]
      %v1591 = vld [vmem:[#allocation2 + $0x81] sm:$0xff]
      %v1592 = vld [vmem:[#allocation2 + $0x89] sm:$0xff]
      %v1593 = vld [vmem:[#allocation2 + $0x91] sm:$0xff]
      %v1594 = vld [vmem:[#allocation2 + $0x99] sm:$0xff]
      %v1595 = vld [vmem:[#allocation2 + $0xa1] sm:$0xff]
      %v1596 = vld [vmem:[#allocation2 + $0xa9] sm:$0xff]
      %v1597 = vld [vmem:[#allocation2 + $0xb1] sm:$0xff]
      %v1598 = vld [vmem:[#allocation2 + $0xb9] sm:$0xff]
      %v1599 = vld [vmem:[#allocation2 + $0xc1] sm:$0xff]
      %v1600 = vld [vmem:[#allocation2 + $0xc9] sm:$0xff]
      %v1601 = vld [vmem:[#allocation2 + $0xd1] sm:$0xff]
      %v1602 = vld [vmem:[#allocation2 + $0xd9] sm:$0xff]
      %v1603 = vld [vmem:[#allocation2 + $0xe1] sm:$0xff]
      %v1604 = vld [vmem:[#allocation2 + $0xe9] sm:$0xff]
      %v1605 = vld [vmem:[#allocation2 + $0xf1] sm:$0xff]
      %v1606 = vld [vmem:[#allocation2 + $0xf9] sm:$0xff]
      %v1607 = vld [vmem:[#allocation2 + $0x101] sm:$0xff]
      %s1608 = scalar_lea.vmem %s3, 512
      %v1609 = vld [vmem:[%s1608] sm:$0xff]
      %v1610 = vld [vmem:[%s1608 + $0x8] sm:$0xff]
      %v1611 = vld [vmem:[%s1608 + $0x10] sm:$0xff]
      %v1612 = vld [vmem:[%s1608 + $0x18] sm:$0xff]
      %v1613 = vld [vmem:[%s1608 + $0x20] sm:$0xff]
      %v1614 = vld [vmem:[%s1608 + $0x28] sm:$0xff]
      %v1615 = vld [vmem:[%s1608 + $0x30] sm:$0xff]
      %v1616 = vld [vmem:[%s1608 + $0x38] sm:$0xff]
      %v1617 = vld [vmem:[%s1608 + $0x40] sm:$0xff]
      %v1618 = vld [vmem:[%s1608 + $0x48] sm:$0xff]
      %v1619 = vld [vmem:[%s1608 + $0x50] sm:$0xff]
      %v1620 = vld [vmem:[%s1608 + $0x58] sm:$0xff]
      %v1621 = vld [vmem:[%s1608 + $0x60] sm:$0xff]
      %v1622 = vld [vmem:[%s1608 + $0x68] sm:$0xff]
      %v1623 = vld [vmem:[%s1608 + $0x70] sm:$0xff]
      %v1624 = vld [vmem:[%s1608 + $0x78] sm:$0xff]
      %v1625 = vld [vmem:[%s1608 + $0x80] sm:$0xff]
      %v1626 = vld [vmem:[%s1608 + $0x88] sm:$0xff]
      %v1627 = vld [vmem:[%s1608 + $0x90] sm:$0xff]
      %v1628 = vld [vmem:[%s1608 + $0x98] sm:$0xff]
      %v1629 = vld [vmem:[%s1608 + $0xa0] sm:$0xff]
      %v1630 = vld [vmem:[%s1608 + $0xa8] sm:$0xff]
      %v1631 = vld [vmem:[%s1608 + $0xb0] sm:$0xff]
      %v1632 = vld [vmem:[%s1608 + $0xb8] sm:$0xff]
      %v1633 = vld [vmem:[%s1608 + $0xc0] sm:$0xff]
      %v1634 = vld [vmem:[%s1608 + $0xc8] sm:$0xff]
      %v1635 = vld [vmem:[%s1608 + $0xd0] sm:$0xff]
      %v1636 = vld [vmem:[%s1608 + $0xd8] sm:$0xff]
      %v1637 = vld [vmem:[%s1608 + $0xe0] sm:$0xff]
      %v1638 = vld [vmem:[%s1608 + $0xe8] sm:$0xff]
      %v1639 = vld [vmem:[%s1608 + $0xf0] sm:$0xff]
      %v1640 = vld [vmem:[%s1608 + $0xf8] sm:$0xff]
      %1642 = vset.pattern.permute.xlu0 0
      %1643 = vperm.xlu0 %1642, %v1609
      %v1644 = vpop.permute.xlu0 %1643
      %1647 = vset.pattern.permute.xlu0 0
      %1648 = vperm.xlu0 %1647, %v1610
      %v1649 = vpop.permute.xlu0 %1648
      %1652 = vset.pattern.permute.xlu0 0
      %1653 = vperm.xlu0 %1652, %v1611
      %v1654 = vpop.permute.xlu0 %1653
      %1657 = vset.pattern.permute.xlu0 0
      %1658 = vperm.xlu0 %1657, %v1612
      %v1659 = vpop.permute.xlu0 %1658
      %1662 = vset.pattern.permute.xlu0 0
      %1663 = vperm.xlu0 %1662, %v1613
      %v1664 = vpop.permute.xlu0 %1663
      %1667 = vset.pattern.permute.xlu0 0
      %1668 = vperm.xlu0 %1667, %v1614
      %v1669 = vpop.permute.xlu0 %1668
      %1672 = vset.pattern.permute.xlu0 0
      %1673 = vperm.xlu0 %1672, %v1615
      %v1674 = vpop.permute.xlu0 %1673
      %1677 = vset.pattern.permute.xlu0 0
      %1678 = vperm.xlu0 %1677, %v1616
      %v1679 = vpop.permute.xlu0 %1678
      %1682 = vset.pattern.permute.xlu0 0
      %1683 = vperm.xlu0 %1682, %v1617
      %v1684 = vpop.permute.xlu0 %1683
      %1687 = vset.pattern.permute.xlu0 0
      %1688 = vperm.xlu0 %1687, %v1618
      %v1689 = vpop.permute.xlu0 %1688
      %1692 = vset.pattern.permute.xlu0 0
      %1693 = vperm.xlu0 %1692, %v1619
      %v1694 = vpop.permute.xlu0 %1693
      %1697 = vset.pattern.permute.xlu0 0
      %1698 = vperm.xlu0 %1697, %v1620
      %v1699 = vpop.permute.xlu0 %1698
      %1702 = vset.pattern.permute.xlu0 0
      %1703 = vperm.xlu0 %1702, %v1621
      %v1704 = vpop.permute.xlu0 %1703
      %1707 = vset.pattern.permute.xlu0 0
      %1708 = vperm.xlu0 %1707, %v1622
      %v1709 = vpop.permute.xlu0 %1708
      %1712 = vset.pattern.permute.xlu0 0
      %1713 = vperm.xlu0 %1712, %v1623
      %v1714 = vpop.permute.xlu0 %1713
      %1717 = vset.pattern.permute.xlu0 0
      %1718 = vperm.xlu0 %1717, %v1624
      %v1719 = vpop.permute.xlu0 %1718
      %1722 = vset.pattern.permute.xlu0 0
      %1723 = vperm.xlu0 %1722, %v1625
      %v1724 = vpop.permute.xlu0 %1723
      %1727 = vset.pattern.permute.xlu0 0
      %1728 = vperm.xlu0 %1727, %v1626
      %v1729 = vpop.permute.xlu0 %1728
      %1732 = vset.pattern.permute.xlu0 0
      %1733 = vperm.xlu0 %1732, %v1627
      %v1734 = vpop.permute.xlu0 %1733
      %1737 = vset.pattern.permute.xlu0 0
      %1738 = vperm.xlu0 %1737, %v1628
      %v1739 = vpop.permute.xlu0 %1738
      %1742 = vset.pattern.permute.xlu0 0
      %1743 = vperm.xlu0 %1742, %v1629
      %v1744 = vpop.permute.xlu0 %1743
      %1747 = vset.pattern.permute.xlu0 0
      %1748 = vperm.xlu0 %1747, %v1630
      %v1749 = vpop.permute.xlu0 %1748
      %1752 = vset.pattern.permute.xlu0 0
      %1753 = vperm.xlu0 %1752, %v1631
      %v1754 = vpop.permute.xlu0 %1753
      %1757 = vset.pattern.permute.xlu0 0
      %1758 = vperm.xlu0 %1757, %v1632
      %v1759 = vpop.permute.xlu0 %1758
      %1762 = vset.pattern.permute.xlu0 0
      %1763 = vperm.xlu0 %1762, %v1633
      %v1764 = vpop.permute.xlu0 %1763
      %1767 = vset.pattern.permute.xlu0 0
      %1768 = vperm.xlu0 %1767, %v1634
      %v1769 = vpop.permute.xlu0 %1768
      %1772 = vset.pattern.permute.xlu0 0
      %1773 = vperm.xlu0 %1772, %v1635
      %v1774 = vpop.permute.xlu0 %1773
      %1777 = vset.pattern.permute.xlu0 0
      %1778 = vperm.xlu0 %1777, %v1636
      %v1779 = vpop.permute.xlu0 %1778
      %1782 = vset.pattern.permute.xlu0 0
      %1783 = vperm.xlu0 %1782, %v1637
      %v1784 = vpop.permute.xlu0 %1783
      %1787 = vset.pattern.permute.xlu0 0
      %1788 = vperm.xlu0 %1787, %v1638
      %v1789 = vpop.permute.xlu0 %1788
      %1792 = vset.pattern.permute.xlu0 0
      %1793 = vperm.xlu0 %1792, %v1639
      %v1794 = vpop.permute.xlu0 %1793
      %1797 = vset.pattern.permute.xlu0 0
      %1798 = vperm.xlu0 %1797, %v1640
      %v1799 = vpop.permute.xlu0 %1798
      %v1801 = vmul.f32 %v1576, %v1644
      %v1802 = vmul.f32 %v1577, %v1649
      %v1803 = vmul.f32 %v1578, %v1654
      %v1804 = vmul.f32 %v1579, %v1659
      %v1805 = vmul.f32 %v1580, %v1664
      %v1806 = vmul.f32 %v1581, %v1669
      %v1807 = vmul.f32 %v1582, %v1674
      %v1808 = vmul.f32 %v1583, %v1679
      %v1809 = vmul.f32 %v1584, %v1684
      %v1810 = vmul.f32 %v1585, %v1689
      %v1811 = vmul.f32 %v1586, %v1694
      %v1812 = vmul.f32 %v1587, %v1699
      %v1813 = vmul.f32 %v1588, %v1704
      %v1814 = vmul.f32 %v1589, %v1709
      %v1815 = vmul.f32 %v1590, %v1714
      %v1816 = vmul.f32 %v1591, %v1719
      %v1817 = vmul.f32 %v1592, %v1724
      %v1818 = vmul.f32 %v1593, %v1729
      %v1819 = vmul.f32 %v1594, %v1734
      %v1820 = vmul.f32 %v1595, %v1739
      %v1821 = vmul.f32 %v1596, %v1744
      %v1822 = vmul.f32 %v1597, %v1749
      %v1823 = vmul.f32 %v1598, %v1754
      %v1824 = vmul.f32 %v1599, %v1759
      %v1825 = vmul.f32 %v1600, %v1764
      %v1826 = vmul.f32 %v1601, %v1769
      %v1827 = vmul.f32 %v1602, %v1774
      %v1828 = vmul.f32 %v1603, %v1779
      %v1829 = vmul.f32 %v1604, %v1784
      %v1830 = vmul.f32 %v1605, %v1789
      %v1831 = vmul.f32 %v1606, %v1794
      %v1832 = vmul.f32 %v1607, %v1799
      %s1833 = scalar_lea.vmem %s4, 48
      %v1834 = vld [vmem:[%s1833] sm:$0xff]
      %v1835 = vld [vmem:[%s1833 + $0x8] sm:$0xff]
      %v1836 = vld [vmem:[%s1833 + $0x10] sm:$0xff]
      %v1838 = vsel %vm380, %v1801, 0
      %v1841 = vsel %vm380, %v1802, 0
      %v1844 = vsel %vm380, %v1803, 0
      %v1847 = vsel %vm380, %v1804, 0
      %v1850 = vsel %vm380, %v1805, 0
      %v1853 = vsel %vm380, %v1806, 0
      %v1856 = vsel %vm380, %v1807, 0
      %v1859 = vsel %vm380, %v1808, 0
      %v1862 = vsel %vm380, %v1809, 0
      %v1865 = vsel %vm380, %v1810, 0
      %v1868 = vsel %vm380, %v1811, 0
      %v1871 = vsel %vm380, %v1812, 0
      %v1874 = vsel %vm380, %v1813, 0
      %v1877 = vsel %vm380, %v1814, 0
      %v1880 = vsel %vm380, %v1815, 0
      %v1883 = vsel %vm380, %v1816, 0
      %v1886 = vsel %vm380, %v1817, 0
      %v1889 = vsel %vm380, %v1818, 0
      %v1892 = vsel %vm380, %v1819, 0
      %v1895 = vsel %vm380, %v1820, 0
      %v1898 = vsel %vm380, %v1821, 0
      %v1901 = vsel %vm380, %v1822, 0
      %v1904 = vsel %vm380, %v1823, 0
      %v1907 = vsel %vm380, %v1824, 0
      %v1910 = vsel %vm380, %v1825, 0
      %v1913 = vsel %vm380, %v1826, 0
      %v1916 = vsel %vm380, %v1827, 0
      %v1919 = vsel %vm380, %v1828, 0
      %v1922 = vsel %vm380, %v1829, 0
      %v1925 = vsel %vm380, %v1830, 0
      %v1928 = vsel %vm380, %v1831, 0
      %v1931 = vsel %vm380, %v1832, 0
      %1933 = vmatpush.msra.mxu0 0.0
      %1934 = vmatpush.msra.mxu0 0.0
      %1935 = vmatpush.msra.mxu0 0.0
      %1936 = vmatpush.msra.mxu0 0.0
      %1937 = vmatpush.msra.mxu0 0.0
      %1938 = vmatpush.msra.mxu0 0.0
      %1939 = vmatpush.msra.mxu0 0.0
      %1940 = vmatpush.msra.mxu0 0.0
      %1941 = vmatpush.msra.mxu0 0.0
      %1942 = vmatpush.msra.mxu0 0.0
      %1943 = vmatpush.msra.mxu0 0.0
      %1944 = vmatpush.msra.mxu0 0.0
      %1945 = vmatpush.msra.mxu0 0.0
      %1946 = vmatpush.msra.mxu0 %v1836
      %1947 = vmatpush.msra.mxu0 %v1835
      %1948 = vmatpush.msra.mxu0 %v1834
      %1949 = vmatmul.f32.gmra.mxu0 %v1838
      %v1950 = vpop.f32.mrf.mxu0
      %v1951 = vadd.f32 0.0, %v1950
      %1952 = vmatmul.f32.gmra.mxu0 %v1841
      %v1953 = vpop.f32.mrf.mxu0
      %v1954 = vadd.f32 0.0, %v1953
      %1955 = vmatmul.f32.gmra.mxu0 %v1844
      %v1956 = vpop.f32.mrf.mxu0
      %v1957 = vadd.f32 0.0, %v1956
      %1958 = vmatmul.f32.gmra.mxu0 %v1847
      %v1959 = vpop.f32.mrf.mxu0
      %v1960 = vadd.f32 0.0, %v1959
      %1961 = vmatmul.f32.gmra.mxu0 %v1850
      %v1962 = vpop.f32.mrf.mxu0
      %v1963 = vadd.f32 0.0, %v1962
      %1964 = vmatmul.f32.gmra.mxu0 %v1853
      %v1965 = vpop.f32.mrf.mxu0
      %v1966 = vadd.f32 0.0, %v1965
      %1967 = vmatmul.f32.gmra.mxu0 %v1856
      %v1968 = vpop.f32.mrf.mxu0
      %v1969 = vadd.f32 0.0, %v1968
      %1970 = vmatmul.f32.gmra.mxu0 %v1859
      %v1971 = vpop.f32.mrf.mxu0
      %v1972 = vadd.f32 0.0, %v1971
      %1973 = vmatmul.f32.gmra.mxu0 %v1862
      %v1974 = vpop.f32.mrf.mxu0
      %v1975 = vadd.f32 0.0, %v1974
      %1976 = vmatmul.f32.gmra.mxu0 %v1865
      %v1977 = vpop.f32.mrf.mxu0
      %v1978 = vadd.f32 0.0, %v1977
      %1979 = vmatmul.f32.gmra.mxu0 %v1868
      %v1980 = vpop.f32.mrf.mxu0
      %v1981 = vadd.f32 0.0, %v1980
      %1982 = vmatmul.f32.gmra.mxu0 %v1871
      %v1983 = vpop.f32.mrf.mxu0
      %v1984 = vadd.f32 0.0, %v1983
      %1985 = vmatmul.f32.gmra.mxu0 %v1874
      %v1986 = vpop.f32.mrf.mxu0
      %v1987 = vadd.f32 0.0, %v1986
      %1988 = vmatmul.f32.gmra.mxu0 %v1877
      %v1989 = vpop.f32.mrf.mxu0
      %v1990 = vadd.f32 0.0, %v1989
      %1991 = vmatmul.f32.gmra.mxu0 %v1880
      %v1992 = vpop.f32.mrf.mxu0
      %v1993 = vadd.f32 0.0, %v1992
      %1994 = vmatmul.f32.gmra.mxu0 %v1883
      %v1995 = vpop.f32.mrf.mxu0
      %v1996 = vadd.f32 0.0, %v1995
      %1997 = vmatmul.f32.gmra.mxu0 %v1886
      %v1998 = vpop.f32.mrf.mxu0
      %v1999 = vadd.f32 0.0, %v1998
      %2000 = vmatmul.f32.gmra.mxu0 %v1889
      %v2001 = vpop.f32.mrf.mxu0
      %v2002 = vadd.f32 0.0, %v2001
      %2003 = vmatmul.f32.gmra.mxu0 %v1892
      %v2004 = vpop.f32.mrf.mxu0
      %v2005 = vadd.f32 0.0, %v2004
      %2006 = vmatmul.f32.gmra.mxu0 %v1895
      %v2007 = vpop.f32.mrf.mxu0
      %v2008 = vadd.f32 0.0, %v2007
      %2009 = vmatmul.f32.gmra.mxu0 %v1898
      %v2010 = vpop.f32.mrf.mxu0
      %v2011 = vadd.f32 0.0, %v2010
      %2012 = vmatmul.f32.gmra.mxu0 %v1901
      %v2013 = vpop.f32.mrf.mxu0
      %v2014 = vadd.f32 0.0, %v2013
      %2015 = vmatmul.f32.gmra.mxu0 %v1904
      %v2016 = vpop.f32.mrf.mxu0
      %v2017 = vadd.f32 0.0, %v2016
      %2018 = vmatmul.f32.gmra.mxu0 %v1907
      %v2019 = vpop.f32.mrf.mxu0
      %v2020 = vadd.f32 0.0, %v2019
      %2021 = vmatmul.f32.gmra.mxu0 %v1910
      %v2022 = vpop.f32.mrf.mxu0
      %v2023 = vadd.f32 0.0, %v2022
      %2024 = vmatmul.f32.gmra.mxu0 %v1913
      %v2025 = vpop.f32.mrf.mxu0
      %v2026 = vadd.f32 0.0, %v2025
      %2027 = vmatmul.f32.gmra.mxu0 %v1916
      %v2028 = vpop.f32.mrf.mxu0
      %v2029 = vadd.f32 0.0, %v2028
      %2030 = vmatmul.f32.gmra.mxu0 %v1919
      %v2031 = vpop.f32.mrf.mxu0
      %v2032 = vadd.f32 0.0, %v2031
      %2033 = vmatmul.f32.gmra.mxu0 %v1922
      %v2034 = vpop.f32.mrf.mxu0
      %v2035 = vadd.f32 0.0, %v2034
      %2036 = vmatmul.f32.gmra.mxu0 %v1925
      %v2037 = vpop.f32.mrf.mxu0
      %v2038 = vadd.f32 0.0, %v2037
      %2039 = vmatmul.f32.gmra.mxu0 %v1928
      %v2040 = vpop.f32.mrf.mxu0
      %v2041 = vadd.f32 0.0, %v2040
      %2042 = vmatmul.f32.gmra.mxu0 %v1931
      %v2043 = vpop.f32.mrf.mxu0
      %v2044 = vadd.f32 0.0, %v2043
      %2045 = vdwg.mxu0
      %v2046 = vadd.f32 %v1481, %v1951
      %v2047 = vadd.f32 %v1484, %v1954
      %v2048 = vadd.f32 %v1487, %v1957
      %v2049 = vadd.f32 %v1490, %v1960
      %v2050 = vadd.f32 %v1493, %v1963
      %v2051 = vadd.f32 %v1496, %v1966
      %v2052 = vadd.f32 %v1499, %v1969
      %v2053 = vadd.f32 %v1502, %v1972
      %v2054 = vadd.f32 %v1505, %v1975
      %v2055 = vadd.f32 %v1508, %v1978
      %v2056 = vadd.f32 %v1511, %v1981
      %v2057 = vadd.f32 %v1514, %v1984
      %v2058 = vadd.f32 %v1517, %v1987
      %v2059 = vadd.f32 %v1520, %v1990
      %v2060 = vadd.f32 %v1523, %v1993
      %v2061 = vadd.f32 %v1526, %v1996
      %v2062 = vadd.f32 %v1529, %v1999
      %v2063 = vadd.f32 %v1532, %v2002
      %v2064 = vadd.f32 %v1535, %v2005
      %v2065 = vadd.f32 %v1538, %v2008
      %v2066 = vadd.f32 %v1541, %v2011
      %v2067 = vadd.f32 %v1544, %v2014
      %v2068 = vadd.f32 %v1547, %v2017
      %v2069 = vadd.f32 %v1550, %v2020
      %v2070 = vadd.f32 %v1553, %v2023
      %v2071 = vadd.f32 %v1556, %v2026
      %v2072 = vadd.f32 %v1559, %v2029
      %v2073 = vadd.f32 %v1562, %v2032
      %v2074 = vadd.f32 %v1565, %v2035
      %v2075 = vadd.f32 %v1568, %v2038
      %v2076 = vadd.f32 %v1571, %v2041
      %v2077 = vadd.f32 %v1574, %v2044
      %v2078 = vld [vmem:[#allocation2 + $0x17] sm:$0xff]
      %v2079 = vld [vmem:[#allocation2 + $0x1f] sm:$0xff]
      %v2080 = vld [vmem:[#allocation2 + $0x27] sm:$0xff]
      %v2081 = vld [vmem:[#allocation2 + $0x2f] sm:$0xff]
      %v2082 = vld [vmem:[#allocation2 + $0x37] sm:$0xff]
      %v2083 = vld [vmem:[#allocation2 + $0x3f] sm:$0xff]
      %v2084 = vld [vmem:[#allocation2 + $0x47] sm:$0xff]
      %v2085 = vld [vmem:[#allocation2 + $0x4f] sm:$0xff]
      %v2086 = vld [vmem:[#allocation2 + $0x57] sm:$0xff]
      %v2087 = vld [vmem:[#allocation2 + $0x5f] sm:$0xff]
      %v2088 = vld [vmem:[#allocation2 + $0x67] sm:$0xff]
      %v2089 = vld [vmem:[#allocation2 + $0x6f] sm:$0xff]
      %v2090 = vld [vmem:[#allocation2 + $0x77] sm:$0xff]
      %v2091 = vld [vmem:[#allocation2 + $0x7f] sm:$0xff]
      %v2092 = vld [vmem:[#allocation2 + $0x87] sm:$0xff]
      %v2093 = vld [vmem:[#allocation2 + $0x8f] sm:$0xff]
      %v2094 = vld [vmem:[#allocation2 + $0x97] sm:$0xff]
      %v2095 = vld [vmem:[#allocation2 + $0x9f] sm:$0xff]
      %v2096 = vld [vmem:[#allocation2 + $0xa7] sm:$0xff]
      %v2097 = vld [vmem:[#allocation2 + $0xaf] sm:$0xff]
      %v2098 = vld [vmem:[#allocation2 + $0xb7] sm:$0xff]
      %v2099 = vld [vmem:[#allocation2 + $0xbf] sm:$0xff]
      %v2100 = vld [vmem:[#allocation2 + $0xc7] sm:$0xff]
      %v2101 = vld [vmem:[#allocation2 + $0xcf] sm:$0xff]
      %v2102 = vld [vmem:[#allocation2 + $0xd7] sm:$0xff]
      %v2103 = vld [vmem:[#allocation2 + $0xdf] sm:$0xff]
      %v2104 = vld [vmem:[#allocation2 + $0xe7] sm:$0xff]
      %v2105 = vld [vmem:[#allocation2 + $0xef] sm:$0xff]
      %v2106 = vld [vmem:[#allocation2 + $0xf7] sm:$0xff]
      %v2107 = vld [vmem:[#allocation2 + $0xff] sm:$0xff]
      %v2108 = vld [vmem:[#allocation2 + $0x107] sm:$0xff]
      %v2109 = vld [vmem:[#allocation2 + $0x10f] sm:$0xff]
      %v2110 = vmul.f32 %v2078, %v930
      %v2111 = vmul.f32 %v2079, %v935
      %v2112 = vmul.f32 %v2080, %v940
      %v2113 = vmul.f32 %v2081, %v945
      %v2114 = vmul.f32 %v2082, %v950
      %v2115 = vmul.f32 %v2083, %v955
      %v2116 = vmul.f32 %v2084, %v960
      %v2117 = vmul.f32 %v2085, %v965
      %v2118 = vmul.f32 %v2086, %v970
      %v2119 = vmul.f32 %v2087, %v975
      %v2120 = vmul.f32 %v2088, %v980
      %v2121 = vmul.f32 %v2089, %v985
      %v2122 = vmul.f32 %v2090, %v990
      %v2123 = vmul.f32 %v2091, %v995
      %v2124 = vmul.f32 %v2092, %v1000
      %v2125 = vmul.f32 %v2093, %v1005
      %v2126 = vmul.f32 %v2094, %v1010
      %v2127 = vmul.f32 %v2095, %v1015
      %v2128 = vmul.f32 %v2096, %v1020
      %v2129 = vmul.f32 %v2097, %v1025
      %v2130 = vmul.f32 %v2098, %v1030
      %v2131 = vmul.f32 %v2099, %v1035
      %v2132 = vmul.f32 %v2100, %v1040
      %v2133 = vmul.f32 %v2101, %v1045
      %v2134 = vmul.f32 %v2102, %v1050
      %v2135 = vmul.f32 %v2103, %v1055
      %v2136 = vmul.f32 %v2104, %v1060
      %v2137 = vmul.f32 %v2105, %v1065
      %v2138 = vmul.f32 %v2106, %v1070
      %v2139 = vmul.f32 %v2107, %v1075
      %v2140 = vmul.f32 %v2108, %v1080
      %v2141 = vmul.f32 %v2109, %v1085
      %s2142 = scalar_lea.vmem %s4, 72
      %v2143 = vld [vmem:[%s2142] sm:$0xff]
      %v2144 = vld [vmem:[%s2142 + $0x8] sm:$0xff]
      %v2145 = vld [vmem:[%s2142 + $0x10] sm:$0xff]
      %v2147 = vsel %vm380, %v2110, 0
      %v2150 = vsel %vm380, %v2111, 0
      %v2153 = vsel %vm380, %v2112, 0
      %v2156 = vsel %vm380, %v2113, 0
      %v2159 = vsel %vm380, %v2114, 0
      %v2162 = vsel %vm380, %v2115, 0
      %v2165 = vsel %vm380, %v2116, 0
      %v2168 = vsel %vm380, %v2117, 0
      %v2171 = vsel %vm380, %v2118, 0
      %v2174 = vsel %vm380, %v2119, 0
      %v2177 = vsel %vm380, %v2120, 0
      %v2180 = vsel %vm380, %v2121, 0
      %v2183 = vsel %vm380, %v2122, 0
      %v2186 = vsel %vm380, %v2123, 0
      %v2189 = vsel %vm380, %v2124, 0
      %v2192 = vsel %vm380, %v2125, 0
      %v2195 = vsel %vm380, %v2126, 0
      %v2198 = vsel %vm380, %v2127, 0
      %v2201 = vsel %vm380, %v2128, 0
      %v2204 = vsel %vm380, %v2129, 0
      %v2207 = vsel %vm380, %v2130, 0
      %v2210 = vsel %vm380, %v2131, 0
      %v2213 = vsel %vm380, %v2132, 0
      %v2216 = vsel %vm380, %v2133, 0
      %v2219 = vsel %vm380, %v2134, 0
      %v2222 = vsel %vm380, %v2135, 0
      %v2225 = vsel %vm380, %v2136, 0
      %v2228 = vsel %vm380, %v2137, 0
      %v2231 = vsel %vm380, %v2138, 0
      %v2234 = vsel %vm380, %v2139, 0
      %v2237 = vsel %vm380, %v2140, 0
      %v2240 = vsel %vm380, %v2141, 0
      %2242 = vmatpush.msra.mxu0 0.0
      %2243 = vmatpush.msra.mxu0 0.0
      %2244 = vmatpush.msra.mxu0 0.0
      %2245 = vmatpush.msra.mxu0 0.0
      %2246 = vmatpush.msra.mxu0 0.0
      %2247 = vmatpush.msra.mxu0 0.0
      %2248 = vmatpush.msra.mxu0 0.0
      %2249 = vmatpush.msra.mxu0 0.0
      %2250 = vmatpush.msra.mxu0 0.0
      %2251 = vmatpush.msra.mxu0 0.0
      %2252 = vmatpush.msra.mxu0 0.0
      %2253 = vmatpush.msra.mxu0 0.0
      %2254 = vmatpush.msra.mxu0 0.0
      %2255 = vmatpush.msra.mxu0 %v2145
      %2256 = vmatpush.msra.mxu0 %v2144
      %2257 = vmatpush.msra.mxu0 %v2143
      %2258 = vmatmul.f32.gmra.mxu0 %v2147
      %v2259 = vpop.f32.mrf.mxu0
      %v2260 = vadd.f32 0.0, %v2259
      %2261 = vmatmul.f32.gmra.mxu0 %v2150
      %v2262 = vpop.f32.mrf.mxu0
      %v2263 = vadd.f32 0.0, %v2262
      %2264 = vmatmul.f32.gmra.mxu0 %v2153
      %v2265 = vpop.f32.mrf.mxu0
      %v2266 = vadd.f32 0.0, %v2265
      %2267 = vmatmul.f32.gmra.mxu0 %v2156
      %v2268 = vpop.f32.mrf.mxu0
      %v2269 = vadd.f32 0.0, %v2268
      %2270 = vmatmul.f32.gmra.mxu0 %v2159
      %v2271 = vpop.f32.mrf.mxu0
      %v2272 = vadd.f32 0.0, %v2271
      %2273 = vmatmul.f32.gmra.mxu0 %v2162
      %v2274 = vpop.f32.mrf.mxu0
      %v2275 = vadd.f32 0.0, %v2274
      %2276 = vmatmul.f32.gmra.mxu0 %v2165
      %v2277 = vpop.f32.mrf.mxu0
      %v2278 = vadd.f32 0.0, %v2277
      %2279 = vmatmul.f32.gmra.mxu0 %v2168
      %v2280 = vpop.f32.mrf.mxu0
      %v2281 = vadd.f32 0.0, %v2280
      %2282 = vmatmul.f32.gmra.mxu0 %v2171
      %v2283 = vpop.f32.mrf.mxu0
      %v2284 = vadd.f32 0.0, %v2283
      %2285 = vmatmul.f32.gmra.mxu0 %v2174
      %v2286 = vpop.f32.mrf.mxu0
      %v2287 = vadd.f32 0.0, %v2286
      %2288 = vmatmul.f32.gmra.mxu0 %v2177
      %v2289 = vpop.f32.mrf.mxu0
      %v2290 = vadd.f32 0.0, %v2289
      %2291 = vmatmul.f32.gmra.mxu0 %v2180
      %v2292 = vpop.f32.mrf.mxu0
      %v2293 = vadd.f32 0.0, %v2292
      %2294 = vmatmul.f32.gmra.mxu0 %v2183
      %v2295 = vpop.f32.mrf.mxu0
      %v2296 = vadd.f32 0.0, %v2295
      %2297 = vmatmul.f32.gmra.mxu0 %v2186
      %v2298 = vpop.f32.mrf.mxu0
      %v2299 = vadd.f32 0.0, %v2298
      %2300 = vmatmul.f32.gmra.mxu0 %v2189
      %v2301 = vpop.f32.mrf.mxu0
      %v2302 = vadd.f32 0.0, %v2301
      %2303 = vmatmul.f32.gmra.mxu0 %v2192
      %v2304 = vpop.f32.mrf.mxu0
      %v2305 = vadd.f32 0.0, %v2304
      %2306 = vmatmul.f32.gmra.mxu0 %v2195
      %v2307 = vpop.f32.mrf.mxu0
      %v2308 = vadd.f32 0.0, %v2307
      %2309 = vmatmul.f32.gmra.mxu0 %v2198
      %v2310 = vpop.f32.mrf.mxu0
      %v2311 = vadd.f32 0.0, %v2310
      %2312 = vmatmul.f32.gmra.mxu0 %v2201
      %v2313 = vpop.f32.mrf.mxu0
      %v2314 = vadd.f32 0.0, %v2313
      %2315 = vmatmul.f32.gmra.mxu0 %v2204
      %v2316 = vpop.f32.mrf.mxu0
      %v2317 = vadd.f32 0.0, %v2316
      %2318 = vmatmul.f32.gmra.mxu0 %v2207
      %v2319 = vpop.f32.mrf.mxu0
      %v2320 = vadd.f32 0.0, %v2319
      %2321 = vmatmul.f32.gmra.mxu0 %v2210
      %v2322 = vpop.f32.mrf.mxu0
      %v2323 = vadd.f32 0.0, %v2322
      %2324 = vmatmul.f32.gmra.mxu0 %v2213
      %v2325 = vpop.f32.mrf.mxu0
      %v2326 = vadd.f32 0.0, %v2325
      %2327 = vmatmul.f32.gmra.mxu0 %v2216
      %v2328 = vpop.f32.mrf.mxu0
      %v2329 = vadd.f32 0.0, %v2328
      %2330 = vmatmul.f32.gmra.mxu0 %v2219
      %v2331 = vpop.f32.mrf.mxu0
      %v2332 = vadd.f32 0.0, %v2331
      %2333 = vmatmul.f32.gmra.mxu0 %v2222
      %v2334 = vpop.f32.mrf.mxu0
      %v2335 = vadd.f32 0.0, %v2334
      %2336 = vmatmul.f32.gmra.mxu0 %v2225
      %v2337 = vpop.f32.mrf.mxu0
      %v2338 = vadd.f32 0.0, %v2337
      %2339 = vmatmul.f32.gmra.mxu0 %v2228
      %v2340 = vpop.f32.mrf.mxu0
      %v2341 = vadd.f32 0.0, %v2340
      %2342 = vmatmul.f32.gmra.mxu0 %v2231
      %v2343 = vpop.f32.mrf.mxu0
      %v2344 = vadd.f32 0.0, %v2343
      %2345 = vmatmul.f32.gmra.mxu0 %v2234
      %v2346 = vpop.f32.mrf.mxu0
      %v2347 = vadd.f32 0.0, %v2346
      %2348 = vmatmul.f32.gmra.mxu0 %v2237
      %v2349 = vpop.f32.mrf.mxu0
      %v2350 = vadd.f32 0.0, %v2349
      %2351 = vmatmul.f32.gmra.mxu0 %v2240
      %v2352 = vpop.f32.mrf.mxu0
      %v2353 = vadd.f32 0.0, %v2352
      %2354 = vdwg.mxu0
      %v2355 = vadd.f32 %v2046, %v2260
      %v2356 = vadd.f32 %v2047, %v2263
      %v2357 = vadd.f32 %v2048, %v2266
      %v2358 = vadd.f32 %v2049, %v2269
      %v2359 = vadd.f32 %v2050, %v2272
      %v2360 = vadd.f32 %v2051, %v2275
      %v2361 = vadd.f32 %v2052, %v2278
      %v2362 = vadd.f32 %v2053, %v2281
      %v2363 = vadd.f32 %v2054, %v2284
      %v2364 = vadd.f32 %v2055, %v2287
      %v2365 = vadd.f32 %v2056, %v2290
      %v2366 = vadd.f32 %v2057, %v2293
      %v2367 = vadd.f32 %v2058, %v2296
      %v2368 = vadd.f32 %v2059, %v2299
      %v2369 = vadd.f32 %v2060, %v2302
      %v2370 = vadd.f32 %v2061, %v2305
      %v2371 = vadd.f32 %v2062, %v2308
      %v2372 = vadd.f32 %v2063, %v2311
      %v2373 = vadd.f32 %v2064, %v2314
      %v2374 = vadd.f32 %v2065, %v2317
      %v2375 = vadd.f32 %v2066, %v2320
      %v2376 = vadd.f32 %v2067, %v2323
      %v2377 = vadd.f32 %v2068, %v2326
      %v2378 = vadd.f32 %v2069, %v2329
      %v2379 = vadd.f32 %v2070, %v2332
      %v2380 = vadd.f32 %v2071, %v2335
      %v2381 = vadd.f32 %v2072, %v2338
      %v2382 = vadd.f32 %v2073, %v2341
      %v2383 = vadd.f32 %v2074, %v2344
      %v2384 = vadd.f32 %v2075, %v2347
      %v2385 = vadd.f32 %v2076, %v2350
      %v2386 = vadd.f32 %v2077, %v2353
      %v2387 = vld [vmem:[#allocation2 + $0x18] sm:$0xff]
      %v2388 = vld [vmem:[#allocation2 + $0x20] sm:$0xff]
      %v2389 = vld [vmem:[#allocation2 + $0x28] sm:$0xff]
      %v2390 = vld [vmem:[#allocation2 + $0x30] sm:$0xff]
      %v2391 = vld [vmem:[#allocation2 + $0x38] sm:$0xff]
      %v2392 = vld [vmem:[#allocation2 + $0x40] sm:$0xff]
      %v2393 = vld [vmem:[#allocation2 + $0x48] sm:$0xff]
      %v2394 = vld [vmem:[#allocation2 + $0x50] sm:$0xff]
      %v2395 = vld [vmem:[#allocation2 + $0x58] sm:$0xff]
      %v2396 = vld [vmem:[#allocation2 + $0x60] sm:$0xff]
      %v2397 = vld [vmem:[#allocation2 + $0x68] sm:$0xff]
      %v2398 = vld [vmem:[#allocation2 + $0x70] sm:$0xff]
      %v2399 = vld [vmem:[#allocation2 + $0x78] sm:$0xff]
      %v2400 = vld [vmem:[#allocation2 + $0x80] sm:$0xff]
      %v2401 = vld [vmem:[#allocation2 + $0x88] sm:$0xff]
      %v2402 = vld [vmem:[#allocation2 + $0x90] sm:$0xff]
      %v2403 = vld [vmem:[#allocation2 + $0x98] sm:$0xff]
      %v2404 = vld [vmem:[#allocation2 + $0xa0] sm:$0xff]
      %v2405 = vld [vmem:[#allocation2 + $0xa8] sm:$0xff]
      %v2406 = vld [vmem:[#allocation2 + $0xb0] sm:$0xff]
      %v2407 = vld [vmem:[#allocation2 + $0xb8] sm:$0xff]
      %v2408 = vld [vmem:[#allocation2 + $0xc0] sm:$0xff]
      %v2409 = vld [vmem:[#allocation2 + $0xc8] sm:$0xff]
      %v2410 = vld [vmem:[#allocation2 + $0xd0] sm:$0xff]
      %v2411 = vld [vmem:[#allocation2 + $0xd8] sm:$0xff]
      %v2412 = vld [vmem:[#allocation2 + $0xe0] sm:$0xff]
      %v2413 = vld [vmem:[#allocation2 + $0xe8] sm:$0xff]
      %v2414 = vld [vmem:[#allocation2 + $0xf0] sm:$0xff]
      %v2415 = vld [vmem:[#allocation2 + $0xf8] sm:$0xff]
      %v2416 = vld [vmem:[#allocation2 + $0x100] sm:$0xff]
      %v2417 = vld [vmem:[#allocation2 + $0x108] sm:$0xff]
      %v2418 = vld [vmem:[#allocation2 + $0x110] sm:$0xff]
      %s2419 = scalar_lea.vmem %s4, 96
      %v2420 = vld [vmem:[%s2419] sm:$0xff]
      %v2421 = vld [vmem:[%s2419 + $0x8] sm:$0xff]
      %v2422 = vld [vmem:[%s2419 + $0x10] sm:$0xff]
      %v2424 = vsel %vm380, %v2387, 0
      %v2427 = vsel %vm380, %v2388, 0
      %v2430 = vsel %vm380, %v2389, 0
      %v2433 = vsel %vm380, %v2390, 0
      %v2436 = vsel %vm380, %v2391, 0
      %v2439 = vsel %vm380, %v2392, 0
      %v2442 = vsel %vm380, %v2393, 0
      %v2445 = vsel %vm380, %v2394, 0
      %v2448 = vsel %vm380, %v2395, 0
      %v2451 = vsel %vm380, %v2396, 0
      %v2454 = vsel %vm380, %v2397, 0
      %v2457 = vsel %vm380, %v2398, 0
      %v2460 = vsel %vm380, %v2399, 0
      %v2463 = vsel %vm380, %v2400, 0
      %v2466 = vsel %vm380, %v2401, 0
      %v2469 = vsel %vm380, %v2402, 0
      %v2472 = vsel %vm380, %v2403, 0
      %v2475 = vsel %vm380, %v2404, 0
      %v2478 = vsel %vm380, %v2405, 0
      %v2481 = vsel %vm380, %v2406, 0
      %v2484 = vsel %vm380, %v2407, 0
      %v2487 = vsel %vm380, %v2408, 0
      %v2490 = vsel %vm380, %v2409, 0
      %v2493 = vsel %vm380, %v2410, 0
      %v2496 = vsel %vm380, %v2411, 0
      %v2499 = vsel %vm380, %v2412, 0
      %v2502 = vsel %vm380, %v2413, 0
      %v2505 = vsel %vm380, %v2414, 0
      %v2508 = vsel %vm380, %v2415, 0
      %v2511 = vsel %vm380, %v2416, 0
      %v2514 = vsel %vm380, %v2417, 0
      %v2517 = vsel %vm380, %v2418, 0
      %2519 = vmatpush.msra.mxu0 0.0
      %2520 = vmatpush.msra.mxu0 0.0
      %2521 = vmatpush.msra.mxu0 0.0
      %2522 = vmatpush.msra.mxu0 0.0
      %2523 = vmatpush.msra.mxu0 0.0
      %2524 = vmatpush.msra.mxu0 0.0
      %2525 = vmatpush.msra.mxu0 0.0
      %2526 = vmatpush.msra.mxu0 0.0
      %2527 = vmatpush.msra.mxu0 0.0
      %2528 = vmatpush.msra.mxu0 0.0
      %2529 = vmatpush.msra.mxu0 0.0
      %2530 = vmatpush.msra.mxu0 0.0
      %2531 = vmatpush.msra.mxu0 0.0
      %2532 = vmatpush.msra.mxu0 %v2422
      %2533 = vmatpush.msra.mxu0 %v2421
      %2534 = vmatpush.msra.mxu0 %v2420
      %2535 = vmatmul.f32.gmra.mxu0 %v2424
      %v2536 = vpop.f32.mrf.mxu0
      %v2537 = vadd.f32 0.0, %v2536
      %2538 = vmatmul.f32.gmra.mxu0 %v2427
      %v2539 = vpop.f32.mrf.mxu0
      %v2540 = vadd.f32 0.0, %v2539
      %2541 = vmatmul.f32.gmra.mxu0 %v2430
      %v2542 = vpop.f32.mrf.mxu0
      %v2543 = vadd.f32 0.0, %v2542
      %2544 = vmatmul.f32.gmra.mxu0 %v2433
      %v2545 = vpop.f32.mrf.mxu0
      %v2546 = vadd.f32 0.0, %v2545
      %2547 = vmatmul.f32.gmra.mxu0 %v2436
      %v2548 = vpop.f32.mrf.mxu0
      %v2549 = vadd.f32 0.0, %v2548
      %2550 = vmatmul.f32.gmra.mxu0 %v2439
      %v2551 = vpop.f32.mrf.mxu0
      %v2552 = vadd.f32 0.0, %v2551
      %2553 = vmatmul.f32.gmra.mxu0 %v2442
      %v2554 = vpop.f32.mrf.mxu0
      %v2555 = vadd.f32 0.0, %v2554
      %2556 = vmatmul.f32.gmra.mxu0 %v2445
      %v2557 = vpop.f32.mrf.mxu0
      %v2558 = vadd.f32 0.0, %v2557
      %2559 = vmatmul.f32.gmra.mxu0 %v2448
      %v2560 = vpop.f32.mrf.mxu0
      %v2561 = vadd.f32 0.0, %v2560
      %2562 = vmatmul.f32.gmra.mxu0 %v2451
      %v2563 = vpop.f32.mrf.mxu0
      %v2564 = vadd.f32 0.0, %v2563
      %2565 = vmatmul.f32.gmra.mxu0 %v2454
      %v2566 = vpop.f32.mrf.mxu0
      %v2567 = vadd.f32 0.0, %v2566
      %2568 = vmatmul.f32.gmra.mxu0 %v2457
      %v2569 = vpop.f32.mrf.mxu0
      %v2570 = vadd.f32 0.0, %v2569
      %2571 = vmatmul.f32.gmra.mxu0 %v2460
      %v2572 = vpop.f32.mrf.mxu0
      %v2573 = vadd.f32 0.0, %v2572
      %2574 = vmatmul.f32.gmra.mxu0 %v2463
      %v2575 = vpop.f32.mrf.mxu0
      %v2576 = vadd.f32 0.0, %v2575
      %2577 = vmatmul.f32.gmra.mxu0 %v2466
      %v2578 = vpop.f32.mrf.mxu0
      %v2579 = vadd.f32 0.0, %v2578
      %2580 = vmatmul.f32.gmra.mxu0 %v2469
      %v2581 = vpop.f32.mrf.mxu0
      %v2582 = vadd.f32 0.0, %v2581
      %2583 = vmatmul.f32.gmra.mxu0 %v2472
      %v2584 = vpop.f32.mrf.mxu0
      %v2585 = vadd.f32 0.0, %v2584
      %2586 = vmatmul.f32.gmra.mxu0 %v2475
      %v2587 = vpop.f32.mrf.mxu0
      %v2588 = vadd.f32 0.0, %v2587
      %2589 = vmatmul.f32.gmra.mxu0 %v2478
      %v2590 = vpop.f32.mrf.mxu0
      %v2591 = vadd.f32 0.0, %v2590
      %2592 = vmatmul.f32.gmra.mxu0 %v2481
      %v2593 = vpop.f32.mrf.mxu0
      %v2594 = vadd.f32 0.0, %v2593
      %2595 = vmatmul.f32.gmra.mxu0 %v2484
      %v2596 = vpop.f32.mrf.mxu0
      %v2597 = vadd.f32 0.0, %v2596
      %2598 = vmatmul.f32.gmra.mxu0 %v2487
      %v2599 = vpop.f32.mrf.mxu0
      %v2600 = vadd.f32 0.0, %v2599
      %2601 = vmatmul.f32.gmra.mxu0 %v2490
      %v2602 = vpop.f32.mrf.mxu0
      %v2603 = vadd.f32 0.0, %v2602
      %2604 = vmatmul.f32.gmra.mxu0 %v2493
      %v2605 = vpop.f32.mrf.mxu0
      %v2606 = vadd.f32 0.0, %v2605
      %2607 = vmatmul.f32.gmra.mxu0 %v2496
      %v2608 = vpop.f32.mrf.mxu0
      %v2609 = vadd.f32 0.0, %v2608
      %2610 = vmatmul.f32.gmra.mxu0 %v2499
      %v2611 = vpop.f32.mrf.mxu0
      %v2612 = vadd.f32 0.0, %v2611
      %2613 = vmatmul.f32.gmra.mxu0 %v2502
      %v2614 = vpop.f32.mrf.mxu0
      %v2615 = vadd.f32 0.0, %v2614
      %2616 = vmatmul.f32.gmra.mxu0 %v2505
      %v2617 = vpop.f32.mrf.mxu0
      %v2618 = vadd.f32 0.0, %v2617
      %2619 = vmatmul.f32.gmra.mxu0 %v2508
      %v2620 = vpop.f32.mrf.mxu0
      %v2621 = vadd.f32 0.0, %v2620
      %2622 = vmatmul.f32.gmra.mxu0 %v2511
      %v2623 = vpop.f32.mrf.mxu0
      %v2624 = vadd.f32 0.0, %v2623
      %2625 = vmatmul.f32.gmra.mxu0 %v2514
      %v2626 = vpop.f32.mrf.mxu0
      %v2627 = vadd.f32 0.0, %v2626
      %2628 = vmatmul.f32.gmra.mxu0 %v2517
      %v2629 = vpop.f32.mrf.mxu0
      %v2630 = vadd.f32 0.0, %v2629
      %2631 = vdwg.mxu0
      %v2632 = vadd.f32 %v2355, %v2537
      %v2633 = vadd.f32 %v2356, %v2540
      %v2634 = vadd.f32 %v2357, %v2543
      %v2635 = vadd.f32 %v2358, %v2546
      %v2636 = vadd.f32 %v2359, %v2549
      %v2637 = vadd.f32 %v2360, %v2552
      %v2638 = vadd.f32 %v2361, %v2555
      %v2639 = vadd.f32 %v2362, %v2558
      %v2640 = vadd.f32 %v2363, %v2561
      %v2641 = vadd.f32 %v2364, %v2564
      %v2642 = vadd.f32 %v2365, %v2567
      %v2643 = vadd.f32 %v2366, %v2570
      %v2644 = vadd.f32 %v2367, %v2573
      %v2645 = vadd.f32 %v2368, %v2576
      %v2646 = vadd.f32 %v2369, %v2579
      %v2647 = vadd.f32 %v2370, %v2582
      %v2648 = vadd.f32 %v2371, %v2585
      %v2649 = vadd.f32 %v2372, %v2588
      %v2650 = vadd.f32 %v2373, %v2591
      %v2651 = vadd.f32 %v2374, %v2594
      %v2652 = vadd.f32 %v2375, %v2597
      %v2653 = vadd.f32 %v2376, %v2600
      %v2654 = vadd.f32 %v2377, %v2603
      %v2655 = vadd.f32 %v2378, %v2606
      %v2656 = vadd.f32 %v2379, %v2609
      %v2657 = vadd.f32 %v2380, %v2612
      %v2658 = vadd.f32 %v2381, %v2615
      %v2659 = vadd.f32 %v2382, %v2618
      %v2660 = vadd.f32 %v2383, %v2621
      %v2661 = vadd.f32 %v2384, %v2624
      %v2662 = vadd.f32 %v2385, %v2627
      %v2663 = vadd.f32 %v2386, %v2630
      %v2664 = vld [vmem:[#allocation2 + $0x19] sm:$0xff]
      %v2665 = vld [vmem:[#allocation2 + $0x21] sm:$0xff]
      %v2666 = vld [vmem:[#allocation2 + $0x29] sm:$0xff]
      %v2667 = vld [vmem:[#allocation2 + $0x31] sm:$0xff]
      %v2668 = vld [vmem:[#allocation2 + $0x39] sm:$0xff]
      %v2669 = vld [vmem:[#allocation2 + $0x41] sm:$0xff]
      %v2670 = vld [vmem:[#allocation2 + $0x49] sm:$0xff]
      %v2671 = vld [vmem:[#allocation2 + $0x51] sm:$0xff]
      %v2672 = vld [vmem:[#allocation2 + $0x59] sm:$0xff]
      %v2673 = vld [vmem:[#allocation2 + $0x61] sm:$0xff]
      %v2674 = vld [vmem:[#allocation2 + $0x69] sm:$0xff]
      %v2675 = vld [vmem:[#allocation2 + $0x71] sm:$0xff]
      %v2676 = vld [vmem:[#allocation2 + $0x79] sm:$0xff]
      %v2677 = vld [vmem:[#allocation2 + $0x81] sm:$0xff]
      %v2678 = vld [vmem:[#allocation2 + $0x89] sm:$0xff]
      %v2679 = vld [vmem:[#allocation2 + $0x91] sm:$0xff]
      %v2680 = vld [vmem:[#allocation2 + $0x99] sm:$0xff]
      %v2681 = vld [vmem:[#allocation2 + $0xa1] sm:$0xff]
      %v2682 = vld [vmem:[#allocation2 + $0xa9] sm:$0xff]
      %v2683 = vld [vmem:[#allocation2 + $0xb1] sm:$0xff]
      %v2684 = vld [vmem:[#allocation2 + $0xb9] sm:$0xff]
      %v2685 = vld [vmem:[#allocation2 + $0xc1] sm:$0xff]
      %v2686 = vld [vmem:[#allocation2 + $0xc9] sm:$0xff]
      %v2687 = vld [vmem:[#allocation2 + $0xd1] sm:$0xff]
      %v2688 = vld [vmem:[#allocation2 + $0xd9] sm:$0xff]
      %v2689 = vld [vmem:[#allocation2 + $0xe1] sm:$0xff]
      %v2690 = vld [vmem:[#allocation2 + $0xe9] sm:$0xff]
      %v2691 = vld [vmem:[#allocation2 + $0xf1] sm:$0xff]
      %v2692 = vld [vmem:[#allocation2 + $0xf9] sm:$0xff]
      %v2693 = vld [vmem:[#allocation2 + $0x101] sm:$0xff]
      %v2694 = vld [vmem:[#allocation2 + $0x109] sm:$0xff]
      %v2695 = vld [vmem:[#allocation2 + $0x111] sm:$0xff]
      %v2696 = vmul.f32 %v2664, %v1644
      %v2697 = vmul.f32 %v2665, %v1649
      %v2698 = vmul.f32 %v2666, %v1654
      %v2699 = vmul.f32 %v2667, %v1659
      %v2700 = vmul.f32 %v2668, %v1664
      %v2701 = vmul.f32 %v2669, %v1669
      %v2702 = vmul.f32 %v2670, %v1674
      %v2703 = vmul.f32 %v2671, %v1679
      %v2704 = vmul.f32 %v2672, %v1684
      %v2705 = vmul.f32 %v2673, %v1689
      %v2706 = vmul.f32 %v2674, %v1694
      %v2707 = vmul.f32 %v2675, %v1699
      %v2708 = vmul.f32 %v2676, %v1704
      %v2709 = vmul.f32 %v2677, %v1709
      %v2710 = vmul.f32 %v2678, %v1714
      %v2711 = vmul.f32 %v2679, %v1719
      %v2712 = vmul.f32 %v2680, %v1724
      %v2713 = vmul.f32 %v2681, %v1729
      %v2714 = vmul.f32 %v2682, %v1734
      %v2715 = vmul.f32 %v2683, %v1739
      %v2716 = vmul.f32 %v2684, %v1744
      %v2717 = vmul.f32 %v2685, %v1749
      %v2718 = vmul.f32 %v2686, %v1754
      %v2719 = vmul.f32 %v2687, %v1759
      %v2720 = vmul.f32 %v2688, %v1764
      %v2721 = vmul.f32 %v2689, %v1769
      %v2722 = vmul.f32 %v2690, %v1774
      %v2723 = vmul.f32 %v2691, %v1779
      %v2724 = vmul.f32 %v2692, %v1784
      %v2725 = vmul.f32 %v2693, %v1789
      %v2726 = vmul.f32 %v2694, %v1794
      %v2727 = vmul.f32 %v2695, %v1799
      %s2728 = scalar_lea.vmem %s4, 120
      %v2729 = vld [vmem:[%s2728] sm:$0xff]
      %v2730 = vld [vmem:[%s2728 + $0x8] sm:$0xff]
      %v2731 = vld [vmem:[%s2728 + $0x10] sm:$0xff]
      %v2733 = vsel %vm380, %v2696, 0
      %v2736 = vsel %vm380, %v2697, 0
      %v2739 = vsel %vm380, %v2698, 0
      %v2742 = vsel %vm380, %v2699, 0
      %v2745 = vsel %vm380, %v2700, 0
      %v2748 = vsel %vm380, %v2701, 0
      %v2751 = vsel %vm380, %v2702, 0
      %v2754 = vsel %vm380, %v2703, 0
      %v2757 = vsel %vm380, %v2704, 0
      %v2760 = vsel %vm380, %v2705, 0
      %v2763 = vsel %vm380, %v2706, 0
      %v2766 = vsel %vm380, %v2707, 0
      %v2769 = vsel %vm380, %v2708, 0
      %v2772 = vsel %vm380, %v2709, 0
      %v2775 = vsel %vm380, %v2710, 0
      %v2778 = vsel %vm380, %v2711, 0
      %v2781 = vsel %vm380, %v2712, 0
      %v2784 = vsel %vm380, %v2713, 0
      %v2787 = vsel %vm380, %v2714, 0
      %v2790 = vsel %vm380, %v2715, 0
      %v2793 = vsel %vm380, %v2716, 0
      %v2796 = vsel %vm380, %v2717, 0
      %v2799 = vsel %vm380, %v2718, 0
      %v2802 = vsel %vm380, %v2719, 0
      %v2805 = vsel %vm380, %v2720, 0
      %v2808 = vsel %vm380, %v2721, 0
      %v2811 = vsel %vm380, %v2722, 0
      %v2814 = vsel %vm380, %v2723, 0
      %v2817 = vsel %vm380, %v2724, 0
      %v2820 = vsel %vm380, %v2725, 0
      %v2823 = vsel %vm380, %v2726, 0
      %v2826 = vsel %vm380, %v2727, 0
      %2828 = vmatpush.msra.mxu0 0.0
      %2829 = vmatpush.msra.mxu0 0.0
      %2830 = vmatpush.msra.mxu0 0.0
      %2831 = vmatpush.msra.mxu0 0.0
      %2832 = vmatpush.msra.mxu0 0.0
      %2833 = vmatpush.msra.mxu0 0.0
      %2834 = vmatpush.msra.mxu0 0.0
      %2835 = vmatpush.msra.mxu0 0.0
      %2836 = vmatpush.msra.mxu0 0.0
      %2837 = vmatpush.msra.mxu0 0.0
      %2838 = vmatpush.msra.mxu0 0.0
      %2839 = vmatpush.msra.mxu0 0.0
      %2840 = vmatpush.msra.mxu0 0.0
      %2841 = vmatpush.msra.mxu0 %v2731
      %2842 = vmatpush.msra.mxu0 %v2730
      %2843 = vmatpush.msra.mxu0 %v2729
      %2844 = vmatmul.f32.gmra.mxu0 %v2733
      %v2845 = vpop.f32.mrf.mxu0
      %v2846 = vadd.f32 0.0, %v2845
      %2847 = vmatmul.f32.gmra.mxu0 %v2736
      %v2848 = vpop.f32.mrf.mxu0
      %v2849 = vadd.f32 0.0, %v2848
      %2850 = vmatmul.f32.gmra.mxu0 %v2739
      %v2851 = vpop.f32.mrf.mxu0
      %v2852 = vadd.f32 0.0, %v2851
      %2853 = vmatmul.f32.gmra.mxu0 %v2742
      %v2854 = vpop.f32.mrf.mxu0
      %v2855 = vadd.f32 0.0, %v2854
      %2856 = vmatmul.f32.gmra.mxu0 %v2745
      %v2857 = vpop.f32.mrf.mxu0
      %v2858 = vadd.f32 0.0, %v2857
      %2859 = vmatmul.f32.gmra.mxu0 %v2748
      %v2860 = vpop.f32.mrf.mxu0
      %v2861 = vadd.f32 0.0, %v2860
      %2862 = vmatmul.f32.gmra.mxu0 %v2751
      %v2863 = vpop.f32.mrf.mxu0
      %v2864 = vadd.f32 0.0, %v2863
      %2865 = vmatmul.f32.gmra.mxu0 %v2754
      %v2866 = vpop.f32.mrf.mxu0
      %v2867 = vadd.f32 0.0, %v2866
      %2868 = vmatmul.f32.gmra.mxu0 %v2757
      %v2869 = vpop.f32.mrf.mxu0
      %v2870 = vadd.f32 0.0, %v2869
      %2871 = vmatmul.f32.gmra.mxu0 %v2760
      %v2872 = vpop.f32.mrf.mxu0
      %v2873 = vadd.f32 0.0, %v2872
      %2874 = vmatmul.f32.gmra.mxu0 %v2763
      %v2875 = vpop.f32.mrf.mxu0
      %v2876 = vadd.f32 0.0, %v2875
      %2877 = vmatmul.f32.gmra.mxu0 %v2766
      %v2878 = vpop.f32.mrf.mxu0
      %v2879 = vadd.f32 0.0, %v2878
      %2880 = vmatmul.f32.gmra.mxu0 %v2769
      %v2881 = vpop.f32.mrf.mxu0
      %v2882 = vadd.f32 0.0, %v2881
      %2883 = vmatmul.f32.gmra.mxu0 %v2772
      %v2884 = vpop.f32.mrf.mxu0
      %v2885 = vadd.f32 0.0, %v2884
      %2886 = vmatmul.f32.gmra.mxu0 %v2775
      %v2887 = vpop.f32.mrf.mxu0
      %v2888 = vadd.f32 0.0, %v2887
      %2889 = vmatmul.f32.gmra.mxu0 %v2778
      %v2890 = vpop.f32.mrf.mxu0
      %v2891 = vadd.f32 0.0, %v2890
      %2892 = vmatmul.f32.gmra.mxu0 %v2781
      %v2893 = vpop.f32.mrf.mxu0
      %v2894 = vadd.f32 0.0, %v2893
      %2895 = vmatmul.f32.gmra.mxu0 %v2784
      %v2896 = vpop.f32.mrf.mxu0
      %v2897 = vadd.f32 0.0, %v2896
      %2898 = vmatmul.f32.gmra.mxu0 %v2787
      %v2899 = vpop.f32.mrf.mxu0
      %v2900 = vadd.f32 0.0, %v2899
      %2901 = vmatmul.f32.gmra.mxu0 %v2790
      %v2902 = vpop.f32.mrf.mxu0
      %v2903 = vadd.f32 0.0, %v2902
      %2904 = vmatmul.f32.gmra.mxu0 %v2793
      %v2905 = vpop.f32.mrf.mxu0
      %v2906 = vadd.f32 0.0, %v2905
      %2907 = vmatmul.f32.gmra.mxu0 %v2796
      %v2908 = vpop.f32.mrf.mxu0
      %v2909 = vadd.f32 0.0, %v2908
      %2910 = vmatmul.f32.gmra.mxu0 %v2799
      %v2911 = vpop.f32.mrf.mxu0
      %v2912 = vadd.f32 0.0, %v2911
      %2913 = vmatmul.f32.gmra.mxu0 %v2802
      %v2914 = vpop.f32.mrf.mxu0
      %v2915 = vadd.f32 0.0, %v2914
      %2916 = vmatmul.f32.gmra.mxu0 %v2805
      %v2917 = vpop.f32.mrf.mxu0
      %v2918 = vadd.f32 0.0, %v2917
      %2919 = vmatmul.f32.gmra.mxu0 %v2808
      %v2920 = vpop.f32.mrf.mxu0
      %v2921 = vadd.f32 0.0, %v2920
      %2922 = vmatmul.f32.gmra.mxu0 %v2811
      %v2923 = vpop.f32.mrf.mxu0
      %v2924 = vadd.f32 0.0, %v2923
      %2925 = vmatmul.f32.gmra.mxu0 %v2814
      %v2926 = vpop.f32.mrf.mxu0
      %v2927 = vadd.f32 0.0, %v2926
      %2928 = vmatmul.f32.gmra.mxu0 %v2817
      %v2929 = vpop.f32.mrf.mxu0
      %v2930 = vadd.f32 0.0, %v2929
      %2931 = vmatmul.f32.gmra.mxu0 %v2820
      %v2932 = vpop.f32.mrf.mxu0
      %v2933 = vadd.f32 0.0, %v2932
      %2934 = vmatmul.f32.gmra.mxu0 %v2823
      %v2935 = vpop.f32.mrf.mxu0
      %v2936 = vadd.f32 0.0, %v2935
      %2937 = vmatmul.f32.gmra.mxu0 %v2826
      %v2938 = vpop.f32.mrf.mxu0
      %v2939 = vadd.f32 0.0, %v2938
      %2940 = vdwg.mxu0
      %v2941 = vadd.f32 %v2632, %v2846
      %v2942 = vadd.f32 %v2633, %v2849
      %v2943 = vadd.f32 %v2634, %v2852
      %v2944 = vadd.f32 %v2635, %v2855
      %v2945 = vadd.f32 %v2636, %v2858
      %v2946 = vadd.f32 %v2637, %v2861
      %v2947 = vadd.f32 %v2638, %v2864
      %v2948 = vadd.f32 %v2639, %v2867
      %v2949 = vadd.f32 %v2640, %v2870
      %v2950 = vadd.f32 %v2641, %v2873
      %v2951 = vadd.f32 %v2642, %v2876
      %v2952 = vadd.f32 %v2643, %v2879
      %v2953 = vadd.f32 %v2644, %v2882
      %v2954 = vadd.f32 %v2645, %v2885
      %v2955 = vadd.f32 %v2646, %v2888
      %v2956 = vadd.f32 %v2647, %v2891
      %v2957 = vadd.f32 %v2648, %v2894
      %v2958 = vadd.f32 %v2649, %v2897
      %v2959 = vadd.f32 %v2650, %v2900
      %v2960 = vadd.f32 %v2651, %v2903
      %v2961 = vadd.f32 %v2652, %v2906
      %v2962 = vadd.f32 %v2653, %v2909
      %v2963 = vadd.f32 %v2654, %v2912
      %v2964 = vadd.f32 %v2655, %v2915
      %v2965 = vadd.f32 %v2656, %v2918
      %v2966 = vadd.f32 %v2657, %v2921
      %v2967 = vadd.f32 %v2658, %v2924
      %v2968 = vadd.f32 %v2659, %v2927
      %v2969 = vadd.f32 %v2660, %v2930
      %v2970 = vadd.f32 %v2661, %v2933
      %v2971 = vadd.f32 %v2662, %v2936
      %v2972 = vadd.f32 %v2663, %v2939
      %v2973 = vld [vmem:[#allocation2 + $0x27] sm:$0xff]
      %v2974 = vld [vmem:[#allocation2 + $0x2f] sm:$0xff]
      %v2975 = vld [vmem:[#allocation2 + $0x37] sm:$0xff]
      %v2976 = vld [vmem:[#allocation2 + $0x3f] sm:$0xff]
      %v2977 = vld [vmem:[#allocation2 + $0x47] sm:$0xff]
      %v2978 = vld [vmem:[#allocation2 + $0x4f] sm:$0xff]
      %v2979 = vld [vmem:[#allocation2 + $0x57] sm:$0xff]
      %v2980 = vld [vmem:[#allocation2 + $0x5f] sm:$0xff]
      %v2981 = vld [vmem:[#allocation2 + $0x67] sm:$0xff]
      %v2982 = vld [vmem:[#allocation2 + $0x6f] sm:$0xff]
      %v2983 = vld [vmem:[#allocation2 + $0x77] sm:$0xff]
      %v2984 = vld [vmem:[#allocation2 + $0x7f] sm:$0xff]
      %v2985 = vld [vmem:[#allocation2 + $0x87] sm:$0xff]
      %v2986 = vld [vmem:[#allocation2 + $0x8f] sm:$0xff]
      %v2987 = vld [vmem:[#allocation2 + $0x97] sm:$0xff]
      %v2988 = vld [vmem:[#allocation2 + $0x9f] sm:$0xff]
      %v2989 = vld [vmem:[#allocation2 + $0xa7] sm:$0xff]
      %v2990 = vld [vmem:[#allocation2 + $0xaf] sm:$0xff]
      %v2991 = vld [vmem:[#allocation2 + $0xb7] sm:$0xff]
      %v2992 = vld [vmem:[#allocation2 + $0xbf] sm:$0xff]
      %v2993 = vld [vmem:[#allocation2 + $0xc7] sm:$0xff]
      %v2994 = vld [vmem:[#allocation2 + $0xcf] sm:$0xff]
      %v2995 = vld [vmem:[#allocation2 + $0xd7] sm:$0xff]
      %v2996 = vld [vmem:[#allocation2 + $0xdf] sm:$0xff]
      %v2997 = vld [vmem:[#allocation2 + $0xe7] sm:$0xff]
      %v2998 = vld [vmem:[#allocation2 + $0xef] sm:$0xff]
      %v2999 = vld [vmem:[#allocation2 + $0xf7] sm:$0xff]
      %v3000 = vld [vmem:[#allocation2 + $0xff] sm:$0xff]
      %v3001 = vld [vmem:[#allocation2 + $0x107] sm:$0xff]
      %v3002 = vld [vmem:[#allocation2 + $0x10f] sm:$0xff]
      %v3003 = vld [vmem:[#allocation2 + $0x117] sm:$0xff]
      %v3004 = vld [vmem:[#allocation2 + $0x11f] sm:$0xff]
      %v3005 = vmul.f32 %v2973, %v930
      %v3006 = vmul.f32 %v2974, %v935
      %v3007 = vmul.f32 %v2975, %v940
      %v3008 = vmul.f32 %v2976, %v945
      %v3009 = vmul.f32 %v2977, %v950
      %v3010 = vmul.f32 %v2978, %v955
      %v3011 = vmul.f32 %v2979, %v960
      %v3012 = vmul.f32 %v2980, %v965
      %v3013 = vmul.f32 %v2981, %v970
      %v3014 = vmul.f32 %v2982, %v975
      %v3015 = vmul.f32 %v2983, %v980
      %v3016 = vmul.f32 %v2984, %v985
      %v3017 = vmul.f32 %v2985, %v990
      %v3018 = vmul.f32 %v2986, %v995
      %v3019 = vmul.f32 %v2987, %v1000
      %v3020 = vmul.f32 %v2988, %v1005
      %v3021 = vmul.f32 %v2989, %v1010
      %v3022 = vmul.f32 %v2990, %v1015
      %v3023 = vmul.f32 %v2991, %v1020
      %v3024 = vmul.f32 %v2992, %v1025
      %v3025 = vmul.f32 %v2993, %v1030
      %v3026 = vmul.f32 %v2994, %v1035
      %v3027 = vmul.f32 %v2995, %v1040
      %v3028 = vmul.f32 %v2996, %v1045
      %v3029 = vmul.f32 %v2997, %v1050
      %v3030 = vmul.f32 %v2998, %v1055
      %v3031 = vmul.f32 %v2999, %v1060
      %v3032 = vmul.f32 %v3000, %v1065
      %v3033 = vmul.f32 %v3001, %v1070
      %v3034 = vmul.f32 %v3002, %v1075
      %v3035 = vmul.f32 %v3003, %v1080
      %v3036 = vmul.f32 %v3004, %v1085
      %s3037 = scalar_lea.vmem %s4, 144
      %v3038 = vld [vmem:[%s3037] sm:$0xff]
      %v3039 = vld [vmem:[%s3037 + $0x8] sm:$0xff]
      %v3040 = vld [vmem:[%s3037 + $0x10] sm:$0xff]
      %v3042 = vsel %vm380, %v3005, 0
      %v3045 = vsel %vm380, %v3006, 0
      %v3048 = vsel %vm380, %v3007, 0
      %v3051 = vsel %vm380, %v3008, 0
      %v3054 = vsel %vm380, %v3009, 0
      %v3057 = vsel %vm380, %v3010, 0
      %v3060 = vsel %vm380, %v3011, 0
      %v3063 = vsel %vm380, %v3012, 0
      %v3066 = vsel %vm380, %v3013, 0
      %v3069 = vsel %vm380, %v3014, 0
      %v3072 = vsel %vm380, %v3015, 0
      %v3075 = vsel %vm380, %v3016, 0
      %v3078 = vsel %vm380, %v3017, 0
      %v3081 = vsel %vm380, %v3018, 0
      %v3084 = vsel %vm380, %v3019, 0
      %v3087 = vsel %vm380, %v3020, 0
      %v3090 = vsel %vm380, %v3021, 0
      %v3093 = vsel %vm380, %v3022, 0
      %v3096 = vsel %vm380, %v3023, 0
      %v3099 = vsel %vm380, %v3024, 0
      %v3102 = vsel %vm380, %v3025, 0
      %v3105 = vsel %vm380, %v3026, 0
      %v3108 = vsel %vm380, %v3027, 0
      %v3111 = vsel %vm380, %v3028, 0
      %v3114 = vsel %vm380, %v3029, 0
      %v3117 = vsel %vm380, %v3030, 0
      %v3120 = vsel %vm380, %v3031, 0
      %v3123 = vsel %vm380, %v3032, 0
      %v3126 = vsel %vm380, %v3033, 0
      %v3129 = vsel %vm380, %v3034, 0
      %v3132 = vsel %vm380, %v3035, 0
      %v3135 = vsel %vm380, %v3036, 0
      %3137 = vmatpush.msra.mxu0 0.0
      %3138 = vmatpush.msra.mxu0 0.0
      %3139 = vmatpush.msra.mxu0 0.0
      %3140 = vmatpush.msra.mxu0 0.0
      %3141 = vmatpush.msra.mxu0 0.0
      %3142 = vmatpush.msra.mxu0 0.0
      %3143 = vmatpush.msra.mxu0 0.0
      %3144 = vmatpush.msra.mxu0 0.0
      %3145 = vmatpush.msra.mxu0 0.0
      %3146 = vmatpush.msra.mxu0 0.0
      %3147 = vmatpush.msra.mxu0 0.0
      %3148 = vmatpush.msra.mxu0 0.0
      %3149 = vmatpush.msra.mxu0 0.0
      %3150 = vmatpush.msra.mxu0 %v3040
      %3151 = vmatpush.msra.mxu0 %v3039
      %3152 = vmatpush.msra.mxu0 %v3038
      %3153 = vmatmul.f32.gmra.mxu0 %v3042
      %v3154 = vpop.f32.mrf.mxu0
      %v3155 = vadd.f32 0.0, %v3154
      %3156 = vmatmul.f32.gmra.mxu0 %v3045
      %v3157 = vpop.f32.mrf.mxu0
      %v3158 = vadd.f32 0.0, %v3157
      %3159 = vmatmul.f32.gmra.mxu0 %v3048
      %v3160 = vpop.f32.mrf.mxu0
      %v3161 = vadd.f32 0.0, %v3160
      %3162 = vmatmul.f32.gmra.mxu0 %v3051
      %v3163 = vpop.f32.mrf.mxu0
      %v3164 = vadd.f32 0.0, %v3163
      %3165 = vmatmul.f32.gmra.mxu0 %v3054
      %v3166 = vpop.f32.mrf.mxu0
      %v3167 = vadd.f32 0.0, %v3166
      %3168 = vmatmul.f32.gmra.mxu0 %v3057
      %v3169 = vpop.f32.mrf.mxu0
      %v3170 = vadd.f32 0.0, %v3169
      %3171 = vmatmul.f32.gmra.mxu0 %v3060
      %v3172 = vpop.f32.mrf.mxu0
      %v3173 = vadd.f32 0.0, %v3172
      %3174 = vmatmul.f32.gmra.mxu0 %v3063
      %v3175 = vpop.f32.mrf.mxu0
      %v3176 = vadd.f32 0.0, %v3175
      %3177 = vmatmul.f32.gmra.mxu0 %v3066
      %v3178 = vpop.f32.mrf.mxu0
      %v3179 = vadd.f32 0.0, %v3178
      %3180 = vmatmul.f32.gmra.mxu0 %v3069
      %v3181 = vpop.f32.mrf.mxu0
      %v3182 = vadd.f32 0.0, %v3181
      %3183 = vmatmul.f32.gmra.mxu0 %v3072
      %v3184 = vpop.f32.mrf.mxu0
      %v3185 = vadd.f32 0.0, %v3184
      %3186 = vmatmul.f32.gmra.mxu0 %v3075
      %v3187 = vpop.f32.mrf.mxu0
      %v3188 = vadd.f32 0.0, %v3187
      %3189 = vmatmul.f32.gmra.mxu0 %v3078
      %v3190 = vpop.f32.mrf.mxu0
      %v3191 = vadd.f32 0.0, %v3190
      %3192 = vmatmul.f32.gmra.mxu0 %v3081
      %v3193 = vpop.f32.mrf.mxu0
      %v3194 = vadd.f32 0.0, %v3193
      %3195 = vmatmul.f32.gmra.mxu0 %v3084
      %v3196 = vpop.f32.mrf.mxu0
      %v3197 = vadd.f32 0.0, %v3196
      %3198 = vmatmul.f32.gmra.mxu0 %v3087
      %v3199 = vpop.f32.mrf.mxu0
      %v3200 = vadd.f32 0.0, %v3199
      %3201 = vmatmul.f32.gmra.mxu0 %v3090
      %v3202 = vpop.f32.mrf.mxu0
      %v3203 = vadd.f32 0.0, %v3202
      %3204 = vmatmul.f32.gmra.mxu0 %v3093
      %v3205 = vpop.f32.mrf.mxu0
      %v3206 = vadd.f32 0.0, %v3205
      %3207 = vmatmul.f32.gmra.mxu0 %v3096
      %v3208 = vpop.f32.mrf.mxu0
      %v3209 = vadd.f32 0.0, %v3208
      %3210 = vmatmul.f32.gmra.mxu0 %v3099
      %v3211 = vpop.f32.mrf.mxu0
      %v3212 = vadd.f32 0.0, %v3211
      %3213 = vmatmul.f32.gmra.mxu0 %v3102
      %v3214 = vpop.f32.mrf.mxu0
      %v3215 = vadd.f32 0.0, %v3214
      %3216 = vmatmul.f32.gmra.mxu0 %v3105
      %v3217 = vpop.f32.mrf.mxu0
      %v3218 = vadd.f32 0.0, %v3217
      %3219 = vmatmul.f32.gmra.mxu0 %v3108
      %v3220 = vpop.f32.mrf.mxu0
      %v3221 = vadd.f32 0.0, %v3220
      %3222 = vmatmul.f32.gmra.mxu0 %v3111
      %v3223 = vpop.f32.mrf.mxu0
      %v3224 = vadd.f32 0.0, %v3223
      %3225 = vmatmul.f32.gmra.mxu0 %v3114
      %v3226 = vpop.f32.mrf.mxu0
      %v3227 = vadd.f32 0.0, %v3226
      %3228 = vmatmul.f32.gmra.mxu0 %v3117
      %v3229 = vpop.f32.mrf.mxu0
      %v3230 = vadd.f32 0.0, %v3229
      %3231 = vmatmul.f32.gmra.mxu0 %v3120
      %v3232 = vpop.f32.mrf.mxu0
      %v3233 = vadd.f32 0.0, %v3232
      %3234 = vmatmul.f32.gmra.mxu0 %v3123
      %v3235 = vpop.f32.mrf.mxu0
      %v3236 = vadd.f32 0.0, %v3235
      %3237 = vmatmul.f32.gmra.mxu0 %v3126
      %v3238 = vpop.f32.mrf.mxu0
      %v3239 = vadd.f32 0.0, %v3238
      %3240 = vmatmul.f32.gmra.mxu0 %v3129
      %v3241 = vpop.f32.mrf.mxu0
      %v3242 = vadd.f32 0.0, %v3241
      %3243 = vmatmul.f32.gmra.mxu0 %v3132
      %v3244 = vpop.f32.mrf.mxu0
      %v3245 = vadd.f32 0.0, %v3244
      %3246 = vmatmul.f32.gmra.mxu0 %v3135
      %v3247 = vpop.f32.mrf.mxu0
      %v3248 = vadd.f32 0.0, %v3247
      %3249 = vdwg.mxu0
      %v3250 = vadd.f32 %v2941, %v3155
      %v3251 = vadd.f32 %v2942, %v3158
      %v3252 = vadd.f32 %v2943, %v3161
      %v3253 = vadd.f32 %v2944, %v3164
      %v3254 = vadd.f32 %v2945, %v3167
      %v3255 = vadd.f32 %v2946, %v3170
      %v3256 = vadd.f32 %v2947, %v3173
      %v3257 = vadd.f32 %v2948, %v3176
      %v3258 = vadd.f32 %v2949, %v3179
      %v3259 = vadd.f32 %v2950, %v3182
      %v3260 = vadd.f32 %v2951, %v3185
      %v3261 = vadd.f32 %v2952, %v3188
      %v3262 = vadd.f32 %v2953, %v3191
      %v3263 = vadd.f32 %v2954, %v3194
      %v3264 = vadd.f32 %v2955, %v3197
      %v3265 = vadd.f32 %v2956, %v3200
      %v3266 = vadd.f32 %v2957, %v3203
      %v3267 = vadd.f32 %v2958, %v3206
      %v3268 = vadd.f32 %v2959, %v3209
      %v3269 = vadd.f32 %v2960, %v3212
      %v3270 = vadd.f32 %v2961, %v3215
      %v3271 = vadd.f32 %v2962, %v3218
      %v3272 = vadd.f32 %v2963, %v3221
      %v3273 = vadd.f32 %v2964, %v3224
      %v3274 = vadd.f32 %v2965, %v3227
      %v3275 = vadd.f32 %v2966, %v3230
      %v3276 = vadd.f32 %v2967, %v3233
      %v3277 = vadd.f32 %v2968, %v3236
      %v3278 = vadd.f32 %v2969, %v3239
      %v3279 = vadd.f32 %v2970, %v3242
      %v3280 = vadd.f32 %v2971, %v3245
      %v3281 = vadd.f32 %v2972, %v3248
      %v3282 = vld [vmem:[#allocation2 + $0x28] sm:$0xff]
      %v3283 = vld [vmem:[#allocation2 + $0x30] sm:$0xff]
      %v3284 = vld [vmem:[#allocation2 + $0x38] sm:$0xff]
      %v3285 = vld [vmem:[#allocation2 + $0x40] sm:$0xff]
      %v3286 = vld [vmem:[#allocation2 + $0x48] sm:$0xff]
      %v3287 = vld [vmem:[#allocation2 + $0x50] sm:$0xff]
      %v3288 = vld [vmem:[#allocation2 + $0x58] sm:$0xff]
      %v3289 = vld [vmem:[#allocation2 + $0x60] sm:$0xff]
      %v3290 = vld [vmem:[#allocation2 + $0x68] sm:$0xff]
      %v3291 = vld [vmem:[#allocation2 + $0x70] sm:$0xff]
      %v3292 = vld [vmem:[#allocation2 + $0x78] sm:$0xff]
      %v3293 = vld [vmem:[#allocation2 + $0x80] sm:$0xff]
      %v3294 = vld [vmem:[#allocation2 + $0x88] sm:$0xff]
      %v3295 = vld [vmem:[#allocation2 + $0x90] sm:$0xff]
      %v3296 = vld [vmem:[#allocation2 + $0x98] sm:$0xff]
      %v3297 = vld [vmem:[#allocation2 + $0xa0] sm:$0xff]
      %v3298 = vld [vmem:[#allocation2 + $0xa8] sm:$0xff]
      %v3299 = vld [vmem:[#allocation2 + $0xb0] sm:$0xff]
      %v3300 = vld [vmem:[#allocation2 + $0xb8] sm:$0xff]
      %v3301 = vld [vmem:[#allocation2 + $0xc0] sm:$0xff]
      %v3302 = vld [vmem:[#allocation2 + $0xc8] sm:$0xff]
      %v3303 = vld [vmem:[#allocation2 + $0xd0] sm:$0xff]
      %v3304 = vld [vmem:[#allocation2 + $0xd8] sm:$0xff]
      %v3305 = vld [vmem:[#allocation2 + $0xe0] sm:$0xff]
      %v3306 = vld [vmem:[#allocation2 + $0xe8] sm:$0xff]
      %v3307 = vld [vmem:[#allocation2 + $0xf0] sm:$0xff]
      %v3308 = vld [vmem:[#allocation2 + $0xf8] sm:$0xff]
      %v3309 = vld [vmem:[#allocation2 + $0x100] sm:$0xff]
      %v3310 = vld [vmem:[#allocation2 + $0x108] sm:$0xff]
      %v3311 = vld [vmem:[#allocation2 + $0x110] sm:$0xff]
      %v3312 = vld [vmem:[#allocation2 + $0x118] sm:$0xff]
      %v3313 = vld [vmem:[#allocation2 + $0x120] sm:$0xff]
      %s3314 = scalar_lea.vmem %s4, 168
      %v3315 = vld [vmem:[%s3314] sm:$0xff]
      %v3316 = vld [vmem:[%s3314 + $0x8] sm:$0xff]
      %v3317 = vld [vmem:[%s3314 + $0x10] sm:$0xff]
      %v3319 = vsel %vm380, %v3282, 0
      %v3322 = vsel %vm380, %v3283, 0
      %v3325 = vsel %vm380, %v3284, 0
      %v3328 = vsel %vm380, %v3285, 0
      %v3331 = vsel %vm380, %v3286, 0
      %v3334 = vsel %vm380, %v3287, 0
      %v3337 = vsel %vm380, %v3288, 0
      %v3340 = vsel %vm380, %v3289, 0
      %v3343 = vsel %vm380, %v3290, 0
      %v3346 = vsel %vm380, %v3291, 0
      %v3349 = vsel %vm380, %v3292, 0
      %v3352 = vsel %vm380, %v3293, 0
      %v3355 = vsel %vm380, %v3294, 0
      %v3358 = vsel %vm380, %v3295, 0
      %v3361 = vsel %vm380, %v3296, 0
      %v3364 = vsel %vm380, %v3297, 0
      %v3367 = vsel %vm380, %v3298, 0
      %v3370 = vsel %vm380, %v3299, 0
      %v3373 = vsel %vm380, %v3300, 0
      %v3376 = vsel %vm380, %v3301, 0
      %v3379 = vsel %vm380, %v3302, 0
      %v3382 = vsel %vm380, %v3303, 0
      %v3385 = vsel %vm380, %v3304, 0
      %v3388 = vsel %vm380, %v3305, 0
      %v3391 = vsel %vm380, %v3306, 0
      %v3394 = vsel %vm380, %v3307, 0
      %v3397 = vsel %vm380, %v3308, 0
      %v3400 = vsel %vm380, %v3309, 0
      %v3403 = vsel %vm380, %v3310, 0
      %v3406 = vsel %vm380, %v3311, 0
      %v3409 = vsel %vm380, %v3312, 0
      %v3412 = vsel %vm380, %v3313, 0
      %3414 = vmatpush.msra.mxu0 0.0
      %3415 = vmatpush.msra.mxu0 0.0
      %3416 = vmatpush.msra.mxu0 0.0
      %3417 = vmatpush.msra.mxu0 0.0
      %3418 = vmatpush.msra.mxu0 0.0
      %3419 = vmatpush.msra.mxu0 0.0
      %3420 = vmatpush.msra.mxu0 0.0
      %3421 = vmatpush.msra.mxu0 0.0
      %3422 = vmatpush.msra.mxu0 0.0
      %3423 = vmatpush.msra.mxu0 0.0
      %3424 = vmatpush.msra.mxu0 0.0
      %3425 = vmatpush.msra.mxu0 0.0
      %3426 = vmatpush.msra.mxu0 0.0
      %3427 = vmatpush.msra.mxu0 %v3317
      %3428 = vmatpush.msra.mxu0 %v3316
      %3429 = vmatpush.msra.mxu0 %v3315
      %3430 = vmatmul.f32.gmra.mxu0 %v3319
      %v3431 = vpop.f32.mrf.mxu0
      %v3432 = vadd.f32 0.0, %v3431
      %3433 = vmatmul.f32.gmra.mxu0 %v3322
      %v3434 = vpop.f32.mrf.mxu0
      %v3435 = vadd.f32 0.0, %v3434
      %3436 = vmatmul.f32.gmra.mxu0 %v3325
      %v3437 = vpop.f32.mrf.mxu0
      %v3438 = vadd.f32 0.0, %v3437
      %3439 = vmatmul.f32.gmra.mxu0 %v3328
      %v3440 = vpop.f32.mrf.mxu0
      %v3441 = vadd.f32 0.0, %v3440
      %3442 = vmatmul.f32.gmra.mxu0 %v3331
      %v3443 = vpop.f32.mrf.mxu0
      %v3444 = vadd.f32 0.0, %v3443
      %3445 = vmatmul.f32.gmra.mxu0 %v3334
      %v3446 = vpop.f32.mrf.mxu0
      %v3447 = vadd.f32 0.0, %v3446
      %3448 = vmatmul.f32.gmra.mxu0 %v3337
      %v3449 = vpop.f32.mrf.mxu0
      %v3450 = vadd.f32 0.0, %v3449
      %3451 = vmatmul.f32.gmra.mxu0 %v3340
      %v3452 = vpop.f32.mrf.mxu0
      %v3453 = vadd.f32 0.0, %v3452
      %3454 = vmatmul.f32.gmra.mxu0 %v3343
      %v3455 = vpop.f32.mrf.mxu0
      %v3456 = vadd.f32 0.0, %v3455
      %3457 = vmatmul.f32.gmra.mxu0 %v3346
      %v3458 = vpop.f32.mrf.mxu0
      %v3459 = vadd.f32 0.0, %v3458
      %3460 = vmatmul.f32.gmra.mxu0 %v3349
      %v3461 = vpop.f32.mrf.mxu0
      %v3462 = vadd.f32 0.0, %v3461
      %3463 = vmatmul.f32.gmra.mxu0 %v3352
      %v3464 = vpop.f32.mrf.mxu0
      %v3465 = vadd.f32 0.0, %v3464
      %3466 = vmatmul.f32.gmra.mxu0 %v3355
      %v3467 = vpop.f32.mrf.mxu0
      %v3468 = vadd.f32 0.0, %v3467
      %3469 = vmatmul.f32.gmra.mxu0 %v3358
      %v3470 = vpop.f32.mrf.mxu0
      %v3471 = vadd.f32 0.0, %v3470
      %3472 = vmatmul.f32.gmra.mxu0 %v3361
      %v3473 = vpop.f32.mrf.mxu0
      %v3474 = vadd.f32 0.0, %v3473
      %3475 = vmatmul.f32.gmra.mxu0 %v3364
      %v3476 = vpop.f32.mrf.mxu0
      %v3477 = vadd.f32 0.0, %v3476
      %3478 = vmatmul.f32.gmra.mxu0 %v3367
      %v3479 = vpop.f32.mrf.mxu0
      %v3480 = vadd.f32 0.0, %v3479
      %3481 = vmatmul.f32.gmra.mxu0 %v3370
      %v3482 = vpop.f32.mrf.mxu0
      %v3483 = vadd.f32 0.0, %v3482
      %3484 = vmatmul.f32.gmra.mxu0 %v3373
      %v3485 = vpop.f32.mrf.mxu0
      %v3486 = vadd.f32 0.0, %v3485
      %3487 = vmatmul.f32.gmra.mxu0 %v3376
      %v3488 = vpop.f32.mrf.mxu0
      %v3489 = vadd.f32 0.0, %v3488
      %3490 = vmatmul.f32.gmra.mxu0 %v3379
      %v3491 = vpop.f32.mrf.mxu0
      %v3492 = vadd.f32 0.0, %v3491
      %3493 = vmatmul.f32.gmra.mxu0 %v3382
      %v3494 = vpop.f32.mrf.mxu0
      %v3495 = vadd.f32 0.0, %v3494
      %3496 = vmatmul.f32.gmra.mxu0 %v3385
      %v3497 = vpop.f32.mrf.mxu0
      %v3498 = vadd.f32 0.0, %v3497
      %3499 = vmatmul.f32.gmra.mxu0 %v3388
      %v3500 = vpop.f32.mrf.mxu0
      %v3501 = vadd.f32 0.0, %v3500
      %3502 = vmatmul.f32.gmra.mxu0 %v3391
      %v3503 = vpop.f32.mrf.mxu0
      %v3504 = vadd.f32 0.0, %v3503
      %3505 = vmatmul.f32.gmra.mxu0 %v3394
      %v3506 = vpop.f32.mrf.mxu0
      %v3507 = vadd.f32 0.0, %v3506
      %3508 = vmatmul.f32.gmra.mxu0 %v3397
      %v3509 = vpop.f32.mrf.mxu0
      %v3510 = vadd.f32 0.0, %v3509
      %3511 = vmatmul.f32.gmra.mxu0 %v3400
      %v3512 = vpop.f32.mrf.mxu0
      %v3513 = vadd.f32 0.0, %v3512
      %3514 = vmatmul.f32.gmra.mxu0 %v3403
      %v3515 = vpop.f32.mrf.mxu0
      %v3516 = vadd.f32 0.0, %v3515
      %3517 = vmatmul.f32.gmra.mxu0 %v3406
      %v3518 = vpop.f32.mrf.mxu0
      %v3519 = vadd.f32 0.0, %v3518
      %3520 = vmatmul.f32.gmra.mxu0 %v3409
      %v3521 = vpop.f32.mrf.mxu0
      %v3522 = vadd.f32 0.0, %v3521
      %3523 = vmatmul.f32.gmra.mxu0 %v3412
      %v3524 = vpop.f32.mrf.mxu0
      %v3525 = vadd.f32 0.0, %v3524
      %3526 = vdwg.mxu0
      %v3527 = vadd.f32 %v3250, %v3432
      %v3528 = vadd.f32 %v3251, %v3435
      %v3529 = vadd.f32 %v3252, %v3438
      %v3530 = vadd.f32 %v3253, %v3441
      %v3531 = vadd.f32 %v3254, %v3444
      %v3532 = vadd.f32 %v3255, %v3447
      %v3533 = vadd.f32 %v3256, %v3450
      %v3534 = vadd.f32 %v3257, %v3453
      %v3535 = vadd.f32 %v3258, %v3456
      %v3536 = vadd.f32 %v3259, %v3459
      %v3537 = vadd.f32 %v3260, %v3462
      %v3538 = vadd.f32 %v3261, %v3465
      %v3539 = vadd.f32 %v3262, %v3468
      %v3540 = vadd.f32 %v3263, %v3471
      %v3541 = vadd.f32 %v3264, %v3474
      %v3542 = vadd.f32 %v3265, %v3477
      %v3543 = vadd.f32 %v3266, %v3480
      %v3544 = vadd.f32 %v3267, %v3483
      %v3545 = vadd.f32 %v3268, %v3486
      %v3546 = vadd.f32 %v3269, %v3489
      %v3547 = vadd.f32 %v3270, %v3492
      %v3548 = vadd.f32 %v3271, %v3495
      %v3549 = vadd.f32 %v3272, %v3498
      %v3550 = vadd.f32 %v3273, %v3501
      %v3551 = vadd.f32 %v3274, %v3504
      %v3552 = vadd.f32 %v3275, %v3507
      %v3553 = vadd.f32 %v3276, %v3510
      %v3554 = vadd.f32 %v3277, %v3513
      %v3555 = vadd.f32 %v3278, %v3516
      %v3556 = vadd.f32 %v3279, %v3519
      %v3557 = vadd.f32 %v3280, %v3522
      %v3558 = vadd.f32 %v3281, %v3525
      %v3559 = vld [vmem:[#allocation2 + $0x29] sm:$0xff]
      %v3560 = vld [vmem:[#allocation2 + $0x31] sm:$0xff]
      %v3561 = vld [vmem:[#allocation2 + $0x39] sm:$0xff]
      %v3562 = vld [vmem:[#allocation2 + $0x41] sm:$0xff]
      %v3563 = vld [vmem:[#allocation2 + $0x49] sm:$0xff]
      %v3564 = vld [vmem:[#allocation2 + $0x51] sm:$0xff]
      %v3565 = vld [vmem:[#allocation2 + $0x59] sm:$0xff]
      %v3566 = vld [vmem:[#allocation2 + $0x61] sm:$0xff]
      %v3567 = vld [vmem:[#allocation2 + $0x69] sm:$0xff]
      %v3568 = vld [vmem:[#allocation2 + $0x71] sm:$0xff]
      %v3569 = vld [vmem:[#allocation2 + $0x79] sm:$0xff]
      %v3570 = vld [vmem:[#allocation2 + $0x81] sm:$0xff]
      %v3571 = vld [vmem:[#allocation2 + $0x89] sm:$0xff]
      %v3572 = vld [vmem:[#allocation2 + $0x91] sm:$0xff]
      %v3573 = vld [vmem:[#allocation2 + $0x99] sm:$0xff]
      %v3574 = vld [vmem:[#allocation2 + $0xa1] sm:$0xff]
      %v3575 = vld [vmem:[#allocation2 + $0xa9] sm:$0xff]
      %v3576 = vld [vmem:[#allocation2 + $0xb1] sm:$0xff]
      %v3577 = vld [vmem:[#allocation2 + $0xb9] sm:$0xff]
      %v3578 = vld [vmem:[#allocation2 + $0xc1] sm:$0xff]
      %v3579 = vld [vmem:[#allocation2 + $0xc9] sm:$0xff]
      %v3580 = vld [vmem:[#allocation2 + $0xd1] sm:$0xff]
      %v3581 = vld [vmem:[#allocation2 + $0xd9] sm:$0xff]
      %v3582 = vld [vmem:[#allocation2 + $0xe1] sm:$0xff]
      %v3583 = vld [vmem:[#allocation2 + $0xe9] sm:$0xff]
      %v3584 = vld [vmem:[#allocation2 + $0xf1] sm:$0xff]
      %v3585 = vld [vmem:[#allocation2 + $0xf9] sm:$0xff]
      %v3586 = vld [vmem:[#allocation2 + $0x101] sm:$0xff]
      %v3587 = vld [vmem:[#allocation2 + $0x109] sm:$0xff]
      %v3588 = vld [vmem:[#allocation2 + $0x111] sm:$0xff]
      %v3589 = vld [vmem:[#allocation2 + $0x119] sm:$0xff]
      %v3590 = vld [vmem:[#allocation2 + $0x121] sm:$0xff]
      %v3591 = vmul.f32 %v3559, %v1644
      %v3592 = vmul.f32 %v3560, %v1649
      %v3593 = vmul.f32 %v3561, %v1654
      %v3594 = vmul.f32 %v3562, %v1659
      %v3595 = vmul.f32 %v3563, %v1664
      %v3596 = vmul.f32 %v3564, %v1669
      %v3597 = vmul.f32 %v3565, %v1674
      %v3598 = vmul.f32 %v3566, %v1679
      %v3599 = vmul.f32 %v3567, %v1684
      %v3600 = vmul.f32 %v3568, %v1689
      %v3601 = vmul.f32 %v3569, %v1694
      %v3602 = vmul.f32 %v3570, %v1699
      %v3603 = vmul.f32 %v3571, %v1704
      %v3604 = vmul.f32 %v3572, %v1709
      %v3605 = vmul.f32 %v3573, %v1714
      %v3606 = vmul.f32 %v3574, %v1719
      %v3607 = vmul.f32 %v3575, %v1724
      %v3608 = vmul.f32 %v3576, %v1729
      %v3609 = vmul.f32 %v3577, %v1734
      %v3610 = vmul.f32 %v3578, %v1739
      %v3611 = vmul.f32 %v3579, %v1744
      %v3612 = vmul.f32 %v3580, %v1749
      %v3613 = vmul.f32 %v3581, %v1754
      %v3614 = vmul.f32 %v3582, %v1759
      %v3615 = vmul.f32 %v3583, %v1764
      %v3616 = vmul.f32 %v3584, %v1769
      %v3617 = vmul.f32 %v3585, %v1774
      %v3618 = vmul.f32 %v3586, %v1779
      %v3619 = vmul.f32 %v3587, %v1784
      %v3620 = vmul.f32 %v3588, %v1789
      %v3621 = vmul.f32 %v3589, %v1794
      %v3622 = vmul.f32 %v3590, %v1799
      %s3623 = scalar_lea.vmem %s4, 192
      %v3624 = vld [vmem:[%s3623] sm:$0xff]
      %v3625 = vld [vmem:[%s3623 + $0x8] sm:$0xff]
      %v3626 = vld [vmem:[%s3623 + $0x10] sm:$0xff]
      %v3628 = vsel %vm380, %v3591, 0
      %v3631 = vsel %vm380, %v3592, 0
      %v3634 = vsel %vm380, %v3593, 0
      %v3637 = vsel %vm380, %v3594, 0
      %v3640 = vsel %vm380, %v3595, 0
      %v3643 = vsel %vm380, %v3596, 0
      %v3646 = vsel %vm380, %v3597, 0
      %v3649 = vsel %vm380, %v3598, 0
      %v3652 = vsel %vm380, %v3599, 0
      %v3655 = vsel %vm380, %v3600, 0
      %v3658 = vsel %vm380, %v3601, 0
      %v3661 = vsel %vm380, %v3602, 0
      %v3664 = vsel %vm380, %v3603, 0
      %v3667 = vsel %vm380, %v3604, 0
      %v3670 = vsel %vm380, %v3605, 0
      %v3673 = vsel %vm380, %v3606, 0
      %v3676 = vsel %vm380, %v3607, 0
      %v3679 = vsel %vm380, %v3608, 0
      %v3682 = vsel %vm380, %v3609, 0
      %v3685 = vsel %vm380, %v3610, 0
      %v3688 = vsel %vm380, %v3611, 0
      %v3691 = vsel %vm380, %v3612, 0
      %v3694 = vsel %vm380, %v3613, 0
      %v3697 = vsel %vm380, %v3614, 0
      %v3700 = vsel %vm380, %v3615, 0
      %v3703 = vsel %vm380, %v3616, 0
      %v3706 = vsel %vm380, %v3617, 0
      %v3709 = vsel %vm380, %v3618, 0
      %v3712 = vsel %vm380, %v3619, 0
      %v3715 = vsel %vm380, %v3620, 0
      %v3718 = vsel %vm380, %v3621, 0
      %v3721 = vsel %vm380, %v3622, 0
      %3723 = vmatpush.msra.mxu0 0.0
      %3724 = vmatpush.msra.mxu0 0.0
      %3725 = vmatpush.msra.mxu0 0.0
      %3726 = vmatpush.msra.mxu0 0.0
      %3727 = vmatpush.msra.mxu0 0.0
      %3728 = vmatpush.msra.mxu0 0.0
      %3729 = vmatpush.msra.mxu0 0.0
      %3730 = vmatpush.msra.mxu0 0.0
      %3731 = vmatpush.msra.mxu0 0.0
      %3732 = vmatpush.msra.mxu0 0.0
      %3733 = vmatpush.msra.mxu0 0.0
      %3734 = vmatpush.msra.mxu0 0.0
      %3735 = vmatpush.msra.mxu0 0.0
      %3736 = vmatpush.msra.mxu0 %v3626
      %3737 = vmatpush.msra.mxu0 %v3625
      %3738 = vmatpush.msra.mxu0 %v3624
      %3739 = vmatmul.f32.gmra.mxu0 %v3628
      %v3740 = vpop.f32.mrf.mxu0
      %v3741 = vadd.f32 0.0, %v3740
      %3742 = vmatmul.f32.gmra.mxu0 %v3631
      %v3743 = vpop.f32.mrf.mxu0
      %v3744 = vadd.f32 0.0, %v3743
      %3745 = vmatmul.f32.gmra.mxu0 %v3634
      %v3746 = vpop.f32.mrf.mxu0
      %v3747 = vadd.f32 0.0, %v3746
      %3748 = vmatmul.f32.gmra.mxu0 %v3637
      %v3749 = vpop.f32.mrf.mxu0
      %v3750 = vadd.f32 0.0, %v3749
      %3751 = vmatmul.f32.gmra.mxu0 %v3640
      %v3752 = vpop.f32.mrf.mxu0
      %v3753 = vadd.f32 0.0, %v3752
      %3754 = vmatmul.f32.gmra.mxu0 %v3643
      %v3755 = vpop.f32.mrf.mxu0
      %v3756 = vadd.f32 0.0, %v3755
      %3757 = vmatmul.f32.gmra.mxu0 %v3646
      %v3758 = vpop.f32.mrf.mxu0
      %v3759 = vadd.f32 0.0, %v3758
      %3760 = vmatmul.f32.gmra.mxu0 %v3649
      %v3761 = vpop.f32.mrf.mxu0
      %v3762 = vadd.f32 0.0, %v3761
      %3763 = vmatmul.f32.gmra.mxu0 %v3652
      %v3764 = vpop.f32.mrf.mxu0
      %v3765 = vadd.f32 0.0, %v3764
      %3766 = vmatmul.f32.gmra.mxu0 %v3655
      %v3767 = vpop.f32.mrf.mxu0
      %v3768 = vadd.f32 0.0, %v3767
      %3769 = vmatmul.f32.gmra.mxu0 %v3658
      %v3770 = vpop.f32.mrf.mxu0
      %v3771 = vadd.f32 0.0, %v3770
      %3772 = vmatmul.f32.gmra.mxu0 %v3661
      %v3773 = vpop.f32.mrf.mxu0
      %v3774 = vadd.f32 0.0, %v3773
      %3775 = vmatmul.f32.gmra.mxu0 %v3664
      %v3776 = vpop.f32.mrf.mxu0
      %v3777 = vadd.f32 0.0, %v3776
      %3778 = vmatmul.f32.gmra.mxu0 %v3667
      %v3779 = vpop.f32.mrf.mxu0
      %v3780 = vadd.f32 0.0, %v3779
      %3781 = vmatmul.f32.gmra.mxu0 %v3670
      %v3782 = vpop.f32.mrf.mxu0
      %v3783 = vadd.f32 0.0, %v3782
      %3784 = vmatmul.f32.gmra.mxu0 %v3673
      %v3785 = vpop.f32.mrf.mxu0
      %v3786 = vadd.f32 0.0, %v3785
      %3787 = vmatmul.f32.gmra.mxu0 %v3676
      %v3788 = vpop.f32.mrf.mxu0
      %v3789 = vadd.f32 0.0, %v3788
      %3790 = vmatmul.f32.gmra.mxu0 %v3679
      %v3791 = vpop.f32.mrf.mxu0
      %v3792 = vadd.f32 0.0, %v3791
      %3793 = vmatmul.f32.gmra.mxu0 %v3682
      %v3794 = vpop.f32.mrf.mxu0
      %v3795 = vadd.f32 0.0, %v3794
      %3796 = vmatmul.f32.gmra.mxu0 %v3685
      %v3797 = vpop.f32.mrf.mxu0
      %v3798 = vadd.f32 0.0, %v3797
      %3799 = vmatmul.f32.gmra.mxu0 %v3688
      %v3800 = vpop.f32.mrf.mxu0
      %v3801 = vadd.f32 0.0, %v3800
      %3802 = vmatmul.f32.gmra.mxu0 %v3691
      %v3803 = vpop.f32.mrf.mxu0
      %v3804 = vadd.f32 0.0, %v3803
      %3805 = vmatmul.f32.gmra.mxu0 %v3694
      %v3806 = vpop.f32.mrf.mxu0
      %v3807 = vadd.f32 0.0, %v3806
      %3808 = vmatmul.f32.gmra.mxu0 %v3697
      %v3809 = vpop.f32.mrf.mxu0
      %v3810 = vadd.f32 0.0, %v3809
      %3811 = vmatmul.f32.gmra.mxu0 %v3700
      %v3812 = vpop.f32.mrf.mxu0
      %v3813 = vadd.f32 0.0, %v3812
      %3814 = vmatmul.f32.gmra.mxu0 %v3703
      %v3815 = vpop.f32.mrf.mxu0
      %v3816 = vadd.f32 0.0, %v3815
      %3817 = vmatmul.f32.gmra.mxu0 %v3706
      %v3818 = vpop.f32.mrf.mxu0
      %v3819 = vadd.f32 0.0, %v3818
      %3820 = vmatmul.f32.gmra.mxu0 %v3709
      %v3821 = vpop.f32.mrf.mxu0
      %v3822 = vadd.f32 0.0, %v3821
      %3823 = vmatmul.f32.gmra.mxu0 %v3712
      %v3824 = vpop.f32.mrf.mxu0
      %v3825 = vadd.f32 0.0, %v3824
      %3826 = vmatmul.f32.gmra.mxu0 %v3715
      %v3827 = vpop.f32.mrf.mxu0
      %v3828 = vadd.f32 0.0, %v3827
      %3829 = vmatmul.f32.gmra.mxu0 %v3718
      %v3830 = vpop.f32.mrf.mxu0
      %v3831 = vadd.f32 0.0, %v3830
      %3832 = vmatmul.f32.gmra.mxu0 %v3721
      %v3833 = vpop.f32.mrf.mxu0
      %v3834 = vadd.f32 0.0, %v3833
      %3835 = vdwg.mxu0
      %v3836 = vadd.f32 %v3527, %v3741
      %v3837 = vadd.f32 %v3528, %v3744
      %v3838 = vadd.f32 %v3529, %v3747
      %v3839 = vadd.f32 %v3530, %v3750
      %v3840 = vadd.f32 %v3531, %v3753
      %v3841 = vadd.f32 %v3532, %v3756
      %v3842 = vadd.f32 %v3533, %v3759
      %v3843 = vadd.f32 %v3534, %v3762
      %v3844 = vadd.f32 %v3535, %v3765
      %v3845 = vadd.f32 %v3536, %v3768
      %v3846 = vadd.f32 %v3537, %v3771
      %v3847 = vadd.f32 %v3538, %v3774
      %v3848 = vadd.f32 %v3539, %v3777
      %v3849 = vadd.f32 %v3540, %v3780
      %v3850 = vadd.f32 %v3541, %v3783
      %v3851 = vadd.f32 %v3542, %v3786
      %v3852 = vadd.f32 %v3543, %v3789
      %v3853 = vadd.f32 %v3544, %v3792
      %v3854 = vadd.f32 %v3545, %v3795
      %v3855 = vadd.f32 %v3546, %v3798
      %v3856 = vadd.f32 %v3547, %v3801
      %v3857 = vadd.f32 %v3548, %v3804
      %v3858 = vadd.f32 %v3549, %v3807
      %v3859 = vadd.f32 %v3550, %v3810
      %v3860 = vadd.f32 %v3551, %v3813
      %v3861 = vadd.f32 %v3552, %v3816
      %v3862 = vadd.f32 %v3553, %v3819
      %v3863 = vadd.f32 %v3554, %v3822
      %v3864 = vadd.f32 %v3555, %v3825
      %v3865 = vadd.f32 %v3556, %v3828
      %v3866 = vadd.f32 %v3557, %v3831
      %v3867 = vadd.f32 %v3558, %v3834
      %v3868 = vld [vmem:[%s5] sm:$0x1]
      %v3870 = vperm.slane %v3868, 0
      %v3872 = vmul.f32 %v3836, %v3870
      %v3873 = vmul.f32 %v3837, %v3870
      %v3874 = vmul.f32 %v3838, %v3870
      %v3875 = vmul.f32 %v3839, %v3870
      %v3876 = vmul.f32 %v3840, %v3870
      %v3877 = vmul.f32 %v3841, %v3870
      %v3878 = vmul.f32 %v3842, %v3870
      %v3879 = vmul.f32 %v3843, %v3870
      %v3880 = vmul.f32 %v3844, %v3870
      %v3881 = vmul.f32 %v3845, %v3870
      %v3882 = vmul.f32 %v3846, %v3870
      %v3883 = vmul.f32 %v3847, %v3870
      %v3884 = vmul.f32 %v3848, %v3870
      %v3885 = vmul.f32 %v3849, %v3870
      %v3886 = vmul.f32 %v3850, %v3870
      %v3887 = vmul.f32 %v3851, %v3870
      %v3888 = vmul.f32 %v3852, %v3870
      %v3889 = vmul.f32 %v3853, %v3870
      %v3890 = vmul.f32 %v3854, %v3870
      %v3891 = vmul.f32 %v3855, %v3870
      %v3892 = vmul.f32 %v3856, %v3870
      %v3893 = vmul.f32 %v3857, %v3870
      %v3894 = vmul.f32 %v3858, %v3870
      %v3895 = vmul.f32 %v3859, %v3870
      %v3896 = vmul.f32 %v3860, %v3870
      %v3897 = vmul.f32 %v3861, %v3870
      %v3898 = vmul.f32 %v3862, %v3870
      %v3899 = vmul.f32 %v3863, %v3870
      %v3900 = vmul.f32 %v3864, %v3870
      %v3901 = vmul.f32 %v3865, %v3870
      %v3902 = vmul.f32 %v3866, %v3870
      %v3903 = vmul.f32 %v3867, %v3870
      %v3904 = vld [vmem:[%s6] sm:$0x1]
      %v3906 = vperm.slane %v3904, 0
      %v3908 = vadd.f32 %v3872, %v3906
      %v3909 = vadd.f32 %v3873, %v3906
      %v3910 = vadd.f32 %v3874, %v3906
      %v3911 = vadd.f32 %v3875, %v3906
      %v3912 = vadd.f32 %v3876, %v3906
      %v3913 = vadd.f32 %v3877, %v3906
      %v3914 = vadd.f32 %v3878, %v3906
      %v3915 = vadd.f32 %v3879, %v3906
      %v3916 = vadd.f32 %v3880, %v3906
      %v3917 = vadd.f32 %v3881, %v3906
      %v3918 = vadd.f32 %v3882, %v3906
      %v3919 = vadd.f32 %v3883, %v3906
      %v3920 = vadd.f32 %v3884, %v3906
      %v3921 = vadd.f32 %v3885, %v3906
      %v3922 = vadd.f32 %v3886, %v3906
      %v3923 = vadd.f32 %v3887, %v3906
      %v3924 = vadd.f32 %v3888, %v3906
      %v3925 = vadd.f32 %v3889, %v3906
      %v3926 = vadd.f32 %v3890, %v3906
      %v3927 = vadd.f32 %v3891, %v3906
      %v3928 = vadd.f32 %v3892, %v3906
      %v3929 = vadd.f32 %v3893, %v3906
      %v3930 = vadd.f32 %v3894, %v3906
      %v3931 = vadd.f32 %v3895, %v3906
      %v3932 = vadd.f32 %v3896, %v3906
      %v3933 = vadd.f32 %v3897, %v3906
      %v3934 = vadd.f32 %v3898, %v3906
      %v3935 = vadd.f32 %v3899, %v3906
      %v3936 = vadd.f32 %v3900, %v3906
      %v3937 = vadd.f32 %v3901, %v3906
      %v3938 = vadd.f32 %v3902, %v3906
      %v3939 = vadd.f32 %v3903, %v3906
      %v3940 = vmax.f32 %v3908, 0.0
      %v3941 = vmax.f32 %v3909, 0.0
      %v3942 = vmax.f32 %v3910, 0.0
      %v3943 = vmax.f32 %v3911, 0.0
      %v3944 = vmax.f32 %v3912, 0.0
      %v3945 = vmax.f32 %v3913, 0.0
      %v3946 = vmax.f32 %v3914, 0.0
      %v3947 = vmax.f32 %v3915, 0.0
      %v3948 = vmax.f32 %v3916, 0.0
      %v3949 = vmax.f32 %v3917, 0.0
      %v3950 = vmax.f32 %v3918, 0.0
      %v3951 = vmax.f32 %v3919, 0.0
      %v3952 = vmax.f32 %v3920, 0.0
      %v3953 = vmax.f32 %v3921, 0.0
      %v3954 = vmax.f32 %v3922, 0.0
      %v3955 = vmax.f32 %v3923, 0.0
      %v3956 = vmax.f32 %v3924, 0.0
      %v3957 = vmax.f32 %v3925, 0.0
      %v3958 = vmax.f32 %v3926, 0.0
      %v3959 = vmax.f32 %v3927, 0.0
      %v3960 = vmax.f32 %v3928, 0.0
      %v3961 = vmax.f32 %v3929, 0.0
      %v3962 = vmax.f32 %v3930, 0.0
      %v3963 = vmax.f32 %v3931, 0.0
      %v3964 = vmax.f32 %v3932, 0.0
      %v3965 = vmax.f32 %v3933, 0.0
      %v3966 = vmax.f32 %v3934, 0.0
      %v3967 = vmax.f32 %v3935, 0.0
      %v3968 = vmax.f32 %v3936, 0.0
      %v3969 = vmax.f32 %v3937, 0.0
      %v3970 = vmax.f32 %v3938, 0.0
      %v3971 = vmax.f32 %v3939, 0.0
      %3972 = vst.msk [vmem:[#allocation2 + $0x18] sm:$0xff] %vm637, %v3940
      %3973 = vst.msk [vmem:[#allocation2 + $0x20] sm:$0xff] %vm637, %v3941
      %3974 = vst.msk [vmem:[#allocation2 + $0x28] sm:$0xff] %vm637, %v3942
      %3975 = vst.msk [vmem:[#allocation2 + $0x30] sm:$0xff] %vm637, %v3943
      %3976 = vst.msk [vmem:[#allocation2 + $0x38] sm:$0xff] %vm637, %v3944
      %3977 = vst.msk [vmem:[#allocation2 + $0x40] sm:$0xff] %vm637, %v3945
      %3978 = vst.msk [vmem:[#allocation2 + $0x48] sm:$0xff] %vm637, %v3946
      %3979 = vst.msk [vmem:[#allocation2 + $0x50] sm:$0xff] %vm637, %v3947
      %3980 = vst.msk [vmem:[#allocation2 + $0x58] sm:$0xff] %vm637, %v3948
      %3981 = vst.msk [vmem:[#allocation2 + $0x60] sm:$0xff] %vm637, %v3949
      %3982 = vst.msk [vmem:[#allocation2 + $0x68] sm:$0xff] %vm637, %v3950
      %3983 = vst.msk [vmem:[#allocation2 + $0x70] sm:$0xff] %vm637, %v3951
      %3984 = vst.msk [vmem:[#allocation2 + $0x78] sm:$0xff] %vm637, %v3952
      %3985 = vst.msk [vmem:[#allocation2 + $0x80] sm:$0xff] %vm637, %v3953
      %3986 = vst.msk [vmem:[#allocation2 + $0x88] sm:$0xff] %vm637, %v3954
      %3987 = vst.msk [vmem:[#allocation2 + $0x90] sm:$0xff] %vm637, %v3955
      %3988 = vst.msk [vmem:[#allocation2 + $0x98] sm:$0xff] %vm637, %v3956
      %3989 = vst.msk [vmem:[#allocation2 + $0xa0] sm:$0xff] %vm637, %v3957
      %3990 = vst.msk [vmem:[#allocation2 + $0xa8] sm:$0xff] %vm637, %v3958
      %3991 = vst.msk [vmem:[#allocation2 + $0xb0] sm:$0xff] %vm637, %v3959
      %3992 = vst.msk [vmem:[#allocation2 + $0xb8] sm:$0xff] %vm637, %v3960
      %3993 = vst.msk [vmem:[#allocation2 + $0xc0] sm:$0xff] %vm637, %v3961
      %3994 = vst.msk [vmem:[#allocation2 + $0xc8] sm:$0xff] %vm637, %v3962
      %3995 = vst.msk [vmem:[#allocation2 + $0xd0] sm:$0xff] %vm637, %v3963
      %3996 = vst.msk [vmem:[#allocation2 + $0xd8] sm:$0xff] %vm637, %v3964
      %3997 = vst.msk [vmem:[#allocation2 + $0xe0] sm:$0xff] %vm637, %v3965
      %3998 = vst.msk [vmem:[#allocation2 + $0xe8] sm:$0xff] %vm637, %v3966
      %3999 = vst.msk [vmem:[#allocation2 + $0xf0] sm:$0xff] %vm637, %v3967
      %4000 = vst.msk [vmem:[#allocation2 + $0xf8] sm:$0xff] %vm637, %v3968
      %4001 = vst.msk [vmem:[#allocation2 + $0x100] sm:$0xff] %vm637, %v3969
      %4002 = vst.msk [vmem:[#allocation2 + $0x108] sm:$0xff] %vm637, %v3970
      %4003 = vst.msk [vmem:[#allocation2 + $0x110] sm:$0xff] %vm637, %v3971
      %v4004 = vld [vmem:[#allocation2 + $0x7] sm:$0xff]
      %v4005 = vld [vmem:[#allocation2 + $0xf] sm:$0xff]
      %v4006 = vld [vmem:[#allocation2 + $0x17] sm:$0xff]
      %v4007 = vld [vmem:[#allocation2 + $0x1f] sm:$0xff]
      %v4008 = vld [vmem:[#allocation2 + $0x27] sm:$0xff]
      %v4009 = vld [vmem:[#allocation2 + $0x2f] sm:$0xff]
      %v4010 = vld [vmem:[#allocation2 + $0x37] sm:$0xff]
      %v4011 = vld [vmem:[#allocation2 + $0x3f] sm:$0xff]
      %v4012 = vld [vmem:[#allocation2 + $0x47] sm:$0xff]
      %v4013 = vld [vmem:[#allocation2 + $0x4f] sm:$0xff]
      %v4014 = vld [vmem:[#allocation2 + $0x57] sm:$0xff]
      %v4015 = vld [vmem:[#allocation2 + $0x5f] sm:$0xff]
      %v4016 = vld [vmem:[#allocation2 + $0x67] sm:$0xff]
      %v4017 = vld [vmem:[#allocation2 + $0x6f] sm:$0xff]
      %v4018 = vld [vmem:[#allocation2 + $0x77] sm:$0xff]
      %v4019 = vld [vmem:[#allocation2 + $0x7f] sm:$0xff]
      %v4020 = vld [vmem:[#allocation2 + $0x87] sm:$0xff]
      %v4021 = vld [vmem:[#allocation2 + $0x8f] sm:$0xff]
      %v4022 = vld [vmem:[#allocation2 + $0x97] sm:$0xff]
      %v4023 = vld [vmem:[#allocation2 + $0x9f] sm:$0xff]
      %v4024 = vld [vmem:[#allocation2 + $0xa7] sm:$0xff]
      %v4025 = vld [vmem:[#allocation2 + $0xaf] sm:$0xff]
      %v4026 = vld [vmem:[#allocation2 + $0xb7] sm:$0xff]
      %v4027 = vld [vmem:[#allocation2 + $0xbf] sm:$0xff]
      %v4028 = vld [vmem:[#allocation2 + $0xc7] sm:$0xff]
      %v4029 = vld [vmem:[#allocation2 + $0xcf] sm:$0xff]
      %v4030 = vld [vmem:[#allocation2 + $0xd7] sm:$0xff]
      %v4031 = vld [vmem:[#allocation2 + $0xdf] sm:$0xff]
      %v4032 = vld [vmem:[#allocation2 + $0xe7] sm:$0xff]
      %v4033 = vld [vmem:[#allocation2 + $0xef] sm:$0xff]
      %v4034 = vld [vmem:[#allocation2 + $0xf7] sm:$0xff]
      %v4035 = vld [vmem:[#allocation2 + $0xff] sm:$0xff]
      %v4036 = vld [vmem:[%s3] sm:$0xff]
      %v4037 = vld [vmem:[%s3 + $0x8] sm:$0xff]
      %v4038 = vld [vmem:[%s3 + $0x10] sm:$0xff]
      %v4039 = vld [vmem:[%s3 + $0x18] sm:$0xff]
      %v4040 = vld [vmem:[%s3 + $0x20] sm:$0xff]
      %v4041 = vld [vmem:[%s3 + $0x28] sm:$0xff]
      %v4042 = vld [vmem:[%s3 + $0x30] sm:$0xff]
      %v4043 = vld [vmem:[%s3 + $0x38] sm:$0xff]
      %v4044 = vld [vmem:[%s3 + $0x40] sm:$0xff]
      %v4045 = vld [vmem:[%s3 + $0x48] sm:$0xff]
      %v4046 = vld [vmem:[%s3 + $0x50] sm:$0xff]
      %v4047 = vld [vmem:[%s3 + $0x58] sm:$0xff]
      %v4048 = vld [vmem:[%s3 + $0x60] sm:$0xff]
      %v4049 = vld [vmem:[%s3 + $0x68] sm:$0xff]
      %v4050 = vld [vmem:[%s3 + $0x70] sm:$0xff]
      %v4051 = vld [vmem:[%s3 + $0x78] sm:$0xff]
      %v4052 = vld [vmem:[%s3 + $0x80] sm:$0xff]
      %v4053 = vld [vmem:[%s3 + $0x88] sm:$0xff]
      %v4054 = vld [vmem:[%s3 + $0x90] sm:$0xff]
      %v4055 = vld [vmem:[%s3 + $0x98] sm:$0xff]
      %v4056 = vld [vmem:[%s3 + $0xa0] sm:$0xff]
      %v4057 = vld [vmem:[%s3 + $0xa8] sm:$0xff]
      %v4058 = vld [vmem:[%s3 + $0xb0] sm:$0xff]
      %v4059 = vld [vmem:[%s3 + $0xb8] sm:$0xff]
      %v4060 = vld [vmem:[%s3 + $0xc0] sm:$0xff]
      %v4061 = vld [vmem:[%s3 + $0xc8] sm:$0xff]
      %v4062 = vld [vmem:[%s3 + $0xd0] sm:$0xff]
      %v4063 = vld [vmem:[%s3 + $0xd8] sm:$0xff]
      %v4064 = vld [vmem:[%s3 + $0xe0] sm:$0xff]
      %v4065 = vld [vmem:[%s3 + $0xe8] sm:$0xff]
      %v4066 = vld [vmem:[%s3 + $0xf0] sm:$0xff]
      %v4067 = vld [vmem:[%s3 + $0xf8] sm:$0xff]
      %4069 = vset.pattern.permute.xlu0 0
      %4070 = vperm.xlu0 %4069, %v4036
      %v4071 = vpop.permute.xlu0 %4070
      %4074 = vset.pattern.permute.xlu0 0
      %4075 = vperm.xlu0 %4074, %v4037
      %v4076 = vpop.permute.xlu0 %4075
      %4079 = vset.pattern.permute.xlu0 0
      %4080 = vperm.xlu0 %4079, %v4038
      %v4081 = vpop.permute.xlu0 %4080
      %4084 = vset.pattern.permute.xlu0 0
      %4085 = vperm.xlu0 %4084, %v4039
      %v4086 = vpop.permute.xlu0 %4085
      %4089 = vset.pattern.permute.xlu0 0
      %4090 = vperm.xlu0 %4089, %v4040
      %v4091 = vpop.permute.xlu0 %4090
      %4094 = vset.pattern.permute.xlu0 0
      %4095 = vperm.xlu0 %4094, %v4041
      %v4096 = vpop.permute.xlu0 %4095
      %4099 = vset.pattern.permute.xlu0 0
      %4100 = vperm.xlu0 %4099, %v4042
      %v4101 = vpop.permute.xlu0 %4100
      %4104 = vset.pattern.permute.xlu0 0
      %4105 = vperm.xlu0 %4104, %v4043
      %v4106 = vpop.permute.xlu0 %4105
      %4109 = vset.pattern.permute.xlu0 0
      %4110 = vperm.xlu0 %4109, %v4044
      %v4111 = vpop.permute.xlu0 %4110
      %4114 = vset.pattern.permute.xlu0 0
      %4115 = vperm.xlu0 %4114, %v4045
      %v4116 = vpop.permute.xlu0 %4115
      %4119 = vset.pattern.permute.xlu0 0
      %4120 = vperm.xlu0 %4119, %v4046
      %v4121 = vpop.permute.xlu0 %4120
      %4124 = vset.pattern.permute.xlu0 0
      %4125 = vperm.xlu0 %4124, %v4047
      %v4126 = vpop.permute.xlu0 %4125
      %4129 = vset.pattern.permute.xlu0 0
      %4130 = vperm.xlu0 %4129, %v4048
      %v4131 = vpop.permute.xlu0 %4130
      %4134 = vset.pattern.permute.xlu0 0
      %4135 = vperm.xlu0 %4134, %v4049
      %v4136 = vpop.permute.xlu0 %4135
      %4139 = vset.pattern.permute.xlu0 0
      %4140 = vperm.xlu0 %4139, %v4050
      %v4141 = vpop.permute.xlu0 %4140
      %4144 = vset.pattern.permute.xlu0 0
      %4145 = vperm.xlu0 %4144, %v4051
      %v4146 = vpop.permute.xlu0 %4145
      %4149 = vset.pattern.permute.xlu0 0
      %4150 = vperm.xlu0 %4149, %v4052
      %v4151 = vpop.permute.xlu0 %4150
      %4154 = vset.pattern.permute.xlu0 0
      %4155 = vperm.xlu0 %4154, %v4053
      %v4156 = vpop.permute.xlu0 %4155
      %4159 = vset.pattern.permute.xlu0 0
      %4160 = vperm.xlu0 %4159, %v4054
      %v4161 = vpop.permute.xlu0 %4160
      %4164 = vset.pattern.permute.xlu0 0
      %4165 = vperm.xlu0 %4164, %v4055
      %v4166 = vpop.permute.xlu0 %4165
      %4169 = vset.pattern.permute.xlu0 0
      %4170 = vperm.xlu0 %4169, %v4056
      %v4171 = vpop.permute.xlu0 %4170
      %4174 = vset.pattern.permute.xlu0 0
      %4175 = vperm.xlu0 %4174, %v4057
      %v4176 = vpop.permute.xlu0 %4175
      %4179 = vset.pattern.permute.xlu0 0
      %4180 = vperm.xlu0 %4179, %v4058
      %v4181 = vpop.permute.xlu0 %4180
      %4184 = vset.pattern.permute.xlu0 0
      %4185 = vperm.xlu0 %4184, %v4059
      %v4186 = vpop.permute.xlu0 %4185
      %4189 = vset.pattern.permute.xlu0 0
      %4190 = vperm.xlu0 %4189, %v4060
      %v4191 = vpop.permute.xlu0 %4190
      %4194 = vset.pattern.permute.xlu0 0
      %4195 = vperm.xlu0 %4194, %v4061
      %v4196 = vpop.permute.xlu0 %4195
      %4199 = vset.pattern.permute.xlu0 0
      %4200 = vperm.xlu0 %4199, %v4062
      %v4201 = vpop.permute.xlu0 %4200
      %4204 = vset.pattern.permute.xlu0 0
      %4205 = vperm.xlu0 %4204, %v4063
      %v4206 = vpop.permute.xlu0 %4205
      %4209 = vset.pattern.permute.xlu0 0
      %4210 = vperm.xlu0 %4209, %v4064
      %v4211 = vpop.permute.xlu0 %4210
      %4214 = vset.pattern.permute.xlu0 0
      %4215 = vperm.xlu0 %4214, %v4065
      %v4216 = vpop.permute.xlu0 %4215
      %4219 = vset.pattern.permute.xlu0 0
      %4220 = vperm.xlu0 %4219, %v4066
      %v4221 = vpop.permute.xlu0 %4220
      %4224 = vset.pattern.permute.xlu0 0
      %4225 = vperm.xlu0 %4224, %v4067
      %v4226 = vpop.permute.xlu0 %4225
      %v4228 = vmul.f32 %v4004, %v4071
      %v4229 = vmul.f32 %v4005, %v4076
      %v4230 = vmul.f32 %v4006, %v4081
      %v4231 = vmul.f32 %v4007, %v4086
      %v4232 = vmul.f32 %v4008, %v4091
      %v4233 = vmul.f32 %v4009, %v4096
      %v4234 = vmul.f32 %v4010, %v4101
      %v4235 = vmul.f32 %v4011, %v4106
      %v4236 = vmul.f32 %v4012, %v4111
      %v4237 = vmul.f32 %v4013, %v4116
      %v4238 = vmul.f32 %v4014, %v4121
      %v4239 = vmul.f32 %v4015, %v4126
      %v4240 = vmul.f32 %v4016, %v4131
      %v4241 = vmul.f32 %v4017, %v4136
      %v4242 = vmul.f32 %v4018, %v4141
      %v4243 = vmul.f32 %v4019, %v4146
      %v4244 = vmul.f32 %v4020, %v4151
      %v4245 = vmul.f32 %v4021, %v4156
      %v4246 = vmul.f32 %v4022, %v4161
      %v4247 = vmul.f32 %v4023, %v4166
      %v4248 = vmul.f32 %v4024, %v4171
      %v4249 = vmul.f32 %v4025, %v4176
      %v4250 = vmul.f32 %v4026, %v4181
      %v4251 = vmul.f32 %v4027, %v4186
      %v4252 = vmul.f32 %v4028, %v4191
      %v4253 = vmul.f32 %v4029, %v4196
      %v4254 = vmul.f32 %v4030, %v4201
      %v4255 = vmul.f32 %v4031, %v4206
      %v4256 = vmul.f32 %v4032, %v4211
      %v4257 = vmul.f32 %v4033, %v4216
      %v4258 = vmul.f32 %v4034, %v4221
      %v4259 = vmul.f32 %v4035, %v4226
      %v4260 = vld [vmem:[%s7] sm:$0xff]
      %v4261 = vld [vmem:[#allocation2 + $0x8] sm:$0xff]
      %v4262 = vld [vmem:[#allocation2 + $0x10] sm:$0xff]
      %v4263 = vld [vmem:[#allocation2 + $0x18] sm:$0xff]
      %v4264 = vld [vmem:[#allocation2 + $0x20] sm:$0xff]
      %v4265 = vld [vmem:[#allocation2 + $0x28] sm:$0xff]
      %v4266 = vld [vmem:[#allocation2 + $0x30] sm:$0xff]
      %v4267 = vld [vmem:[#allocation2 + $0x38] sm:$0xff]
      %v4268 = vld [vmem:[#allocation2 + $0x40] sm:$0xff]
      %v4269 = vld [vmem:[#allocation2 + $0x48] sm:$0xff]
      %v4270 = vld [vmem:[#allocation2 + $0x50] sm:$0xff]
      %v4271 = vld [vmem:[#allocation2 + $0x58] sm:$0xff]
      %v4272 = vld [vmem:[#allocation2 + $0x60] sm:$0xff]
      %v4273 = vld [vmem:[#allocation2 + $0x68] sm:$0xff]
      %v4274 = vld [vmem:[#allocation2 + $0x70] sm:$0xff]
      %v4275 = vld [vmem:[#allocation2 + $0x78] sm:$0xff]
      %v4276 = vld [vmem:[#allocation2 + $0x80] sm:$0xff]
      %v4277 = vld [vmem:[#allocation2 + $0x88] sm:$0xff]
      %v4278 = vld [vmem:[#allocation2 + $0x90] sm:$0xff]
      %v4279 = vld [vmem:[#allocation2 + $0x98] sm:$0xff]
      %v4280 = vld [vmem:[#allocation2 + $0xa0] sm:$0xff]
      %v4281 = vld [vmem:[#allocation2 + $0xa8] sm:$0xff]
      %v4282 = vld [vmem:[#allocation2 + $0xb0] sm:$0xff]
      %v4283 = vld [vmem:[#allocation2 + $0xb8] sm:$0xff]
      %v4284 = vld [vmem:[#allocation2 + $0xc0] sm:$0xff]
      %v4285 = vld [vmem:[#allocation2 + $0xc8] sm:$0xff]
      %v4286 = vld [vmem:[#allocation2 + $0xd0] sm:$0xff]
      %v4287 = vld [vmem:[#allocation2 + $0xd8] sm:$0xff]
      %v4288 = vld [vmem:[#allocation2 + $0xe0] sm:$0xff]
      %v4289 = vld [vmem:[#allocation2 + $0xe8] sm:$0xff]
      %v4290 = vld [vmem:[#allocation2 + $0xf0] sm:$0xff]
      %v4291 = vld [vmem:[#allocation2 + $0xf8] sm:$0xff]
      %v4292 = vld [vmem:[#allocation2 + $0x100] sm:$0xff]
      %s4293 = scalar_lea.vmem %s7, 8
      %v4294 = vld [vmem:[%s4293] sm:$0xff]
      %v4296 = vsel %vm637, %v4294, 0
      %v4299 = vsel %vm637, %v4261, 0
      %v4302 = vsel %vm637, %v4262, 0
      %v4305 = vsel %vm637, %v4263, 0
      %v4308 = vsel %vm637, %v4264, 0
      %v4311 = vsel %vm637, %v4265, 0
      %v4314 = vsel %vm637, %v4266, 0
      %v4317 = vsel %vm637, %v4267, 0
      %v4320 = vsel %vm637, %v4268, 0
      %v4323 = vsel %vm637, %v4269, 0
      %v4326 = vsel %vm637, %v4270, 0
      %v4329 = vsel %vm637, %v4271, 0
      %v4332 = vsel %vm637, %v4272, 0
      %v4335 = vsel %vm637, %v4273, 0
      %v4338 = vsel %vm637, %v4274, 0
      %v4341 = vsel %vm637, %v4275, 0
      %v4344 = vsel %vm637, %v4276, 0
      %v4347 = vsel %vm637, %v4277, 0
      %v4350 = vsel %vm637, %v4278, 0
      %v4353 = vsel %vm637, %v4279, 0
      %v4356 = vsel %vm637, %v4280, 0
      %v4359 = vsel %vm637, %v4281, 0
      %v4362 = vsel %vm637, %v4282, 0
      %v4365 = vsel %vm637, %v4283, 0
      %v4368 = vsel %vm637, %v4284, 0
      %v4371 = vsel %vm637, %v4285, 0
      %v4374 = vsel %vm637, %v4286, 0
      %v4377 = vsel %vm637, %v4287, 0
      %v4380 = vsel %vm637, %v4288, 0
      %v4383 = vsel %vm637, %v4289, 0
      %v4386 = vsel %vm637, %v4290, 0
      %v4389 = vsel %vm637, %v4291, 0
      %v4392 = vsel %vm637, %v4292, 0
      %4394 = vmatpush.xpose.msra.mxu0 %v4344
      %4395 = vmatpush.xpose.msra.mxu0 %v4341
      %4396 = vmatpush.xpose.msra.mxu0 %v4338
      %4397 = vmatpush.xpose.msra.mxu0 %v4335
      %4398 = vmatpush.xpose.msra.mxu0 %v4332
      %4399 = vmatpush.xpose.msra.mxu0 %v4329
      %4400 = vmatpush.xpose.msra.mxu0 %v4326
      %4401 = vmatpush.xpose.msra.mxu0 %v4323
      %4402 = vmatpush.xpose.msra.mxu0 %v4320
      %4403 = vmatpush.xpose.msra.mxu0 %v4317
      %4404 = vmatpush.xpose.msra.mxu0 %v4314
      %4405 = vmatpush.xpose.msra.mxu0 %v4311
      %4406 = vmatpush.xpose.msra.mxu0 %v4308
      %4407 = vmatpush.xpose.msra.mxu0 %v4305
      %4408 = vmatpush.xpose.msra.mxu0 %v4302
      %4409 = vmatpush.xpose.msra.mxu0 %v4299
      %4410 = vmatmul.f32.gmra.mxu0 %v4296
      %v4411 = vpop.f32.mrf.mxu0
      %v4412 = vadd.f32 0.0, %v4411
      %4413 = vdwg.mxu0
      %4414 = vmatpush.xpose.msra.mxu0 %v4392
      %4415 = vmatpush.xpose.msra.mxu0 %v4389
      %4416 = vmatpush.xpose.msra.mxu0 %v4386
      %4417 = vmatpush.xpose.msra.mxu0 %v4383
      %4418 = vmatpush.xpose.msra.mxu0 %v4380
      %4419 = vmatpush.xpose.msra.mxu0 %v4377
      %4420 = vmatpush.xpose.msra.mxu0 %v4374
      %4421 = vmatpush.xpose.msra.mxu0 %v4371
      %4422 = vmatpush.xpose.msra.mxu0 %v4368
      %4423 = vmatpush.xpose.msra.mxu0 %v4365
      %4424 = vmatpush.xpose.msra.mxu0 %v4362
      %4425 = vmatpush.xpose.msra.mxu0 %v4359
      %4426 = vmatpush.xpose.msra.mxu0 %v4356
      %4427 = vmatpush.xpose.msra.mxu0 %v4353
      %4428 = vmatpush.xpose.msra.mxu0 %v4350
      %4429 = vmatpush.xpose.msra.mxu0 %v4347
      %4430 = vmatmul.f32.gmra.mxu0 %v4296
      %v4431 = vpop.f32.mrf.mxu0
      %v4432 = vadd.f32 0.0, %v4431
      %4433 = vdwg.mxu0
      %v4435 = vsel %vm637, %v4260, 0
      %v4438 = vsel %vm637, %v4228, 0
      %v4441 = vsel %vm637, %v4229, 0
      %v4444 = vsel %vm637, %v4230, 0
      %v4447 = vsel %vm637, %v4231, 0
      %v4450 = vsel %vm637, %v4232, 0
      %v4453 = vsel %vm637, %v4233, 0
      %v4456 = vsel %vm637, %v4234, 0
      %v4459 = vsel %vm637, %v4235, 0
      %v4462 = vsel %vm637, %v4236, 0
      %v4465 = vsel %vm637, %v4237, 0
      %v4468 = vsel %vm637, %v4238, 0
      %v4471 = vsel %vm637, %v4239, 0
      %v4474 = vsel %vm637, %v4240, 0
      %v4477 = vsel %vm637, %v4241, 0
      %v4480 = vsel %vm637, %v4242, 0
      %v4483 = vsel %vm637, %v4243, 0
      %v4486 = vsel %vm637, %v4244, 0
      %v4489 = vsel %vm637, %v4245, 0
      %v4492 = vsel %vm637, %v4246, 0
      %v4495 = vsel %vm637, %v4247, 0
      %v4498 = vsel %vm637, %v4248, 0
      %v4501 = vsel %vm637, %v4249, 0
      %v4504 = vsel %vm637, %v4250, 0
      %v4507 = vsel %vm637, %v4251, 0
      %v4510 = vsel %vm637, %v4252, 0
      %v4513 = vsel %vm637, %v4253, 0
      %v4516 = vsel %vm637, %v4254, 0
      %v4519 = vsel %vm637, %v4255, 0
      %v4522 = vsel %vm637, %v4256, 0
      %v4525 = vsel %vm637, %v4257, 0
      %v4528 = vsel %vm637, %v4258, 0
      %v4531 = vsel %vm637, %v4259, 0
      %4533 = vmatpush.xpose.msra.mxu0 %v4483
      %4534 = vmatpush.xpose.msra.mxu0 %v4480
      %4535 = vmatpush.xpose.msra.mxu0 %v4477
      %4536 = vmatpush.xpose.msra.mxu0 %v4474
      %4537 = vmatpush.xpose.msra.mxu0 %v4471
      %4538 = vmatpush.xpose.msra.mxu0 %v4468
      %4539 = vmatpush.xpose.msra.mxu0 %v4465
      %4540 = vmatpush.xpose.msra.mxu0 %v4462
      %4541 = vmatpush.xpose.msra.mxu0 %v4459
      %4542 = vmatpush.xpose.msra.mxu0 %v4456
      %4543 = vmatpush.xpose.msra.mxu0 %v4453
      %4544 = vmatpush.xpose.msra.mxu0 %v4450
      %4545 = vmatpush.xpose.msra.mxu0 %v4447
      %4546 = vmatpush.xpose.msra.mxu0 %v4444
      %4547 = vmatpush.xpose.msra.mxu0 %v4441
      %4548 = vmatpush.xpose.msra.mxu0 %v4438
      %4549 = vmatmul.f32.gmra.mxu0 %v4435
      %v4550 = vpop.f32.mrf.mxu0
      %v4551 = vadd.f32 %v4412, %v4550
      %4552 = vdwg.mxu0
      %4553 = vmatpush.xpose.msra.mxu0 %v4531
      %4554 = vmatpush.xpose.msra.mxu0 %v4528
      %4555 = vmatpush.xpose.msra.mxu0 %v4525
      %4556 = vmatpush.xpose.msra.mxu0 %v4522
      %4557 = vmatpush.xpose.msra.mxu0 %v4519
      %4558 = vmatpush.xpose.msra.mxu0 %v4516
      %4559 = vmatpush.xpose.msra.mxu0 %v4513
      %4560 = vmatpush.xpose.msra.mxu0 %v4510
      %4561 = vmatpush.xpose.msra.mxu0 %v4507
      %4562 = vmatpush.xpose.msra.mxu0 %v4504
      %4563 = vmatpush.xpose.msra.mxu0 %v4501
      %4564 = vmatpush.xpose.msra.mxu0 %v4498
      %4565 = vmatpush.xpose.msra.mxu0 %v4495
      %4566 = vmatpush.xpose.msra.mxu0 %v4492
      %4567 = vmatpush.xpose.msra.mxu0 %v4489
      %4568 = vmatpush.xpose.msra.mxu0 %v4486
      %4569 = vmatmul.f32.gmra.mxu0 %v4435
      %v4570 = vpop.f32.mrf.mxu0
      %v4571 = vadd.f32 %v4432, %v4570
      %4572 = vdwg.mxu0
      %v4573 = vld [vmem:[#allocation2 + $0x9] sm:$0xff]
      %v4574 = vld [vmem:[#allocation2 + $0x11] sm:$0xff]
      %v4575 = vld [vmem:[#allocation2 + $0x19] sm:$0xff]
      %v4576 = vld [vmem:[#allocation2 + $0x21] sm:$0xff]
      %v4577 = vld [vmem:[#allocation2 + $0x29] sm:$0xff]
      %v4578 = vld [vmem:[#allocation2 + $0x31] sm:$0xff]
      %v4579 = vld [vmem:[#allocation2 + $0x39] sm:$0xff]
      %v4580 = vld [vmem:[#allocation2 + $0x41] sm:$0xff]
      %v4581 = vld [vmem:[#allocation2 + $0x49] sm:$0xff]
      %v4582 = vld [vmem:[#allocation2 + $0x51] sm:$0xff]
      %v4583 = vld [vmem:[#allocation2 + $0x59] sm:$0xff]
      %v4584 = vld [vmem:[#allocation2 + $0x61] sm:$0xff]
      %v4585 = vld [vmem:[#allocation2 + $0x69] sm:$0xff]
      %v4586 = vld [vmem:[#allocation2 + $0x71] sm:$0xff]
      %v4587 = vld [vmem:[#allocation2 + $0x79] sm:$0xff]
      %v4588 = vld [vmem:[#allocation2 + $0x81] sm:$0xff]
      %v4589 = vld [vmem:[#allocation2 + $0x89] sm:$0xff]
      %v4590 = vld [vmem:[#allocation2 + $0x91] sm:$0xff]
      %v4591 = vld [vmem:[#allocation2 + $0x99] sm:$0xff]
      %v4592 = vld [vmem:[#allocation2 + $0xa1] sm:$0xff]
      %v4593 = vld [vmem:[#allocation2 + $0xa9] sm:$0xff]
      %v4594 = vld [vmem:[#allocation2 + $0xb1] sm:$0xff]
      %v4595 = vld [vmem:[#allocation2 + $0xb9] sm:$0xff]
      %v4596 = vld [vmem:[#allocation2 + $0xc1] sm:$0xff]
      %v4597 = vld [vmem:[#allocation2 + $0xc9] sm:$0xff]
      %v4598 = vld [vmem:[#allocation2 + $0xd1] sm:$0xff]
      %v4599 = vld [vmem:[#allocation2 + $0xd9] sm:$0xff]
      %v4600 = vld [vmem:[#allocation2 + $0xe1] sm:$0xff]
      %v4601 = vld [vmem:[#allocation2 + $0xe9] sm:$0xff]
      %v4602 = vld [vmem:[#allocation2 + $0xf1] sm:$0xff]
      %v4603 = vld [vmem:[#allocation2 + $0xf9] sm:$0xff]
      %v4604 = vld [vmem:[#allocation2 + $0x101] sm:$0xff]
      %v4605 = vld [vmem:[%s1608] sm:$0xff]
      %v4606 = vld [vmem:[%s1608 + $0x8] sm:$0xff]
      %v4607 = vld [vmem:[%s1608 + $0x10] sm:$0xff]
      %v4608 = vld [vmem:[%s1608 + $0x18] sm:$0xff]
      %v4609 = vld [vmem:[%s1608 + $0x20] sm:$0xff]
      %v4610 = vld [vmem:[%s1608 + $0x28] sm:$0xff]
      %v4611 = vld [vmem:[%s1608 + $0x30] sm:$0xff]
      %v4612 = vld [vmem:[%s1608 + $0x38] sm:$0xff]
      %v4613 = vld [vmem:[%s1608 + $0x40] sm:$0xff]
      %v4614 = vld [vmem:[%s1608 + $0x48] sm:$0xff]
      %v4615 = vld [vmem:[%s1608 + $0x50] sm:$0xff]
      %v4616 = vld [vmem:[%s1608 + $0x58] sm:$0xff]
      %v4617 = vld [vmem:[%s1608 + $0x60] sm:$0xff]
      %v4618 = vld [vmem:[%s1608 + $0x68] sm:$0xff]
      %v4619 = vld [vmem:[%s1608 + $0x70] sm:$0xff]
      %v4620 = vld [vmem:[%s1608 + $0x78] sm:$0xff]
      %v4621 = vld [vmem:[%s1608 + $0x80] sm:$0xff]
      %v4622 = vld [vmem:[%s1608 + $0x88] sm:$0xff]
      %v4623 = vld [vmem:[%s1608 + $0x90] sm:$0xff]
      %v4624 = vld [vmem:[%s1608 + $0x98] sm:$0xff]
      %v4625 = vld [vmem:[%s1608 + $0xa0] sm:$0xff]
      %v4626 = vld [vmem:[%s1608 + $0xa8] sm:$0xff]
      %v4627 = vld [vmem:[%s1608 + $0xb0] sm:$0xff]
      %v4628 = vld [vmem:[%s1608 + $0xb8] sm:$0xff]
      %v4629 = vld [vmem:[%s1608 + $0xc0] sm:$0xff]
      %v4630 = vld [vmem:[%s1608 + $0xc8] sm:$0xff]
      %v4631 = vld [vmem:[%s1608 + $0xd0] sm:$0xff]
      %v4632 = vld [vmem:[%s1608 + $0xd8] sm:$0xff]
      %v4633 = vld [vmem:[%s1608 + $0xe0] sm:$0xff]
      %v4634 = vld [vmem:[%s1608 + $0xe8] sm:$0xff]
      %v4635 = vld [vmem:[%s1608 + $0xf0] sm:$0xff]
      %v4636 = vld [vmem:[%s1608 + $0xf8] sm:$0xff]
      %4638 = vset.pattern.permute.xlu0 0
      %4639 = vperm.xlu0 %4638, %v4605
      %v4640 = vpop.permute.xlu0 %4639
      %4643 = vset.pattern.permute.xlu0 0
      %4644 = vperm.xlu0 %4643, %v4606
      %v4645 = vpop.permute.xlu0 %4644
      %4648 = vset.pattern.permute.xlu0 0
      %4649 = vperm.xlu0 %4648, %v4607
      %v4650 = vpop.permute.xlu0 %4649
      %4653 = vset.pattern.permute.xlu0 0
      %4654 = vperm.xlu0 %4653, %v4608
      %v4655 = vpop.permute.xlu0 %4654
      %4658 = vset.pattern.permute.xlu0 0
      %4659 = vperm.xlu0 %4658, %v4609
      %v4660 = vpop.permute.xlu0 %4659
      %4663 = vset.pattern.permute.xlu0 0
      %4664 = vperm.xlu0 %4663, %v4610
      %v4665 = vpop.permute.xlu0 %4664
      %4668 = vset.pattern.permute.xlu0 0
      %4669 = vperm.xlu0 %4668, %v4611
      %v4670 = vpop.permute.xlu0 %4669
      %4673 = vset.pattern.permute.xlu0 0
      %4674 = vperm.xlu0 %4673, %v4612
      %v4675 = vpop.permute.xlu0 %4674
      %4678 = vset.pattern.permute.xlu0 0
      %4679 = vperm.xlu0 %4678, %v4613
      %v4680 = vpop.permute.xlu0 %4679
      %4683 = vset.pattern.permute.xlu0 0
      %4684 = vperm.xlu0 %4683, %v4614
      %v4685 = vpop.permute.xlu0 %4684
      %4688 = vset.pattern.permute.xlu0 0
      %4689 = vperm.xlu0 %4688, %v4615
      %v4690 = vpop.permute.xlu0 %4689
      %4693 = vset.pattern.permute.xlu0 0
      %4694 = vperm.xlu0 %4693, %v4616
      %v4695 = vpop.permute.xlu0 %4694
      %4698 = vset.pattern.permute.xlu0 0
      %4699 = vperm.xlu0 %4698, %v4617
      %v4700 = vpop.permute.xlu0 %4699
      %4703 = vset.pattern.permute.xlu0 0
      %4704 = vperm.xlu0 %4703, %v4618
      %v4705 = vpop.permute.xlu0 %4704
      %4708 = vset.pattern.permute.xlu0 0
      %4709 = vperm.xlu0 %4708, %v4619
      %v4710 = vpop.permute.xlu0 %4709
      %4713 = vset.pattern.permute.xlu0 0
      %4714 = vperm.xlu0 %4713, %v4620
      %v4715 = vpop.permute.xlu0 %4714
      %4718 = vset.pattern.permute.xlu0 0
      %4719 = vperm.xlu0 %4718, %v4621
      %v4720 = vpop.permute.xlu0 %4719
      %4723 = vset.pattern.permute.xlu0 0
      %4724 = vperm.xlu0 %4723, %v4622
      %v4725 = vpop.permute.xlu0 %4724
      %4728 = vset.pattern.permute.xlu0 0
      %4729 = vperm.xlu0 %4728, %v4623
      %v4730 = vpop.permute.xlu0 %4729
      %4733 = vset.pattern.permute.xlu0 0
      %4734 = vperm.xlu0 %4733, %v4624
      %v4735 = vpop.permute.xlu0 %4734
      %4738 = vset.pattern.permute.xlu0 0
      %4739 = vperm.xlu0 %4738, %v4625
      %v4740 = vpop.permute.xlu0 %4739
      %4743 = vset.pattern.permute.xlu0 0
      %4744 = vperm.xlu0 %4743, %v4626
      %v4745 = vpop.permute.xlu0 %4744
      %4748 = vset.pattern.permute.xlu0 0
      %4749 = vperm.xlu0 %4748, %v4627
      %v4750 = vpop.permute.xlu0 %4749
      %4753 = vset.pattern.permute.xlu0 0
      %4754 = vperm.xlu0 %4753, %v4628
      %v4755 = vpop.permute.xlu0 %4754
      %4758 = vset.pattern.permute.xlu0 0
      %4759 = vperm.xlu0 %4758, %v4629
      %v4760 = vpop.permute.xlu0 %4759
      %4763 = vset.pattern.permute.xlu0 0
      %4764 = vperm.xlu0 %4763, %v4630
      %v4765 = vpop.permute.xlu0 %4764
      %4768 = vset.pattern.permute.xlu0 0
      %4769 = vperm.xlu0 %4768, %v4631
      %v4770 = vpop.permute.xlu0 %4769
      %4773 = vset.pattern.permute.xlu0 0
      %4774 = vperm.xlu0 %4773, %v4632
      %v4775 = vpop.permute.xlu0 %4774
      %4778 = vset.pattern.permute.xlu0 0
      %4779 = vperm.xlu0 %4778, %v4633
      %v4780 = vpop.permute.xlu0 %4779
      %4783 = vset.pattern.permute.xlu0 0
      %4784 = vperm.xlu0 %4783, %v4634
      %v4785 = vpop.permute.xlu0 %4784
      %4788 = vset.pattern.permute.xlu0 0
      %4789 = vperm.xlu0 %4788, %v4635
      %v4790 = vpop.permute.xlu0 %4789
      %4793 = vset.pattern.permute.xlu0 0
      %4794 = vperm.xlu0 %4793, %v4636
      %v4795 = vpop.permute.xlu0 %4794
      %v4797 = vmul.f32 %v4573, %v4640
      %v4798 = vmul.f32 %v4574, %v4645
      %v4799 = vmul.f32 %v4575, %v4650
      %v4800 = vmul.f32 %v4576, %v4655
      %v4801 = vmul.f32 %v4577, %v4660
      %v4802 = vmul.f32 %v4578, %v4665
      %v4803 = vmul.f32 %v4579, %v4670
      %v4804 = vmul.f32 %v4580, %v4675
      %v4805 = vmul.f32 %v4581, %v4680
      %v4806 = vmul.f32 %v4582, %v4685
      %v4807 = vmul.f32 %v4583, %v4690
      %v4808 = vmul.f32 %v4584, %v4695
      %v4809 = vmul.f32 %v4585, %v4700
      %v4810 = vmul.f32 %v4586, %v4705
      %v4811 = vmul.f32 %v4587, %v4710
      %v4812 = vmul.f32 %v4588, %v4715
      %v4813 = vmul.f32 %v4589, %v4720
      %v4814 = vmul.f32 %v4590, %v4725
      %v4815 = vmul.f32 %v4591, %v4730
      %v4816 = vmul.f32 %v4592, %v4735
      %v4817 = vmul.f32 %v4593, %v4740
      %v4818 = vmul.f32 %v4594, %v4745
      %v4819 = vmul.f32 %v4595, %v4750
      %v4820 = vmul.f32 %v4596, %v4755
      %v4821 = vmul.f32 %v4597, %v4760
      %v4822 = vmul.f32 %v4598, %v4765
      %v4823 = vmul.f32 %v4599, %v4770
      %v4824 = vmul.f32 %v4600, %v4775
      %v4825 = vmul.f32 %v4601, %v4780
      %v4826 = vmul.f32 %v4602, %v4785
      %v4827 = vmul.f32 %v4603, %v4790
      %v4828 = vmul.f32 %v4604, %v4795
      %s4829 = scalar_lea.vmem %s7, 16
      %v4830 = vld [vmem:[%s4829] sm:$0xff]
      %v4832 = vsel %vm637, %v4830, 0
      %v4835 = vsel %vm637, %v4797, 0
      %v4838 = vsel %vm637, %v4798, 0
      %v4841 = vsel %vm637, %v4799, 0
      %v4844 = vsel %vm637, %v4800, 0
      %v4847 = vsel %vm637, %v4801, 0
      %v4850 = vsel %vm637, %v4802, 0
      %v4853 = vsel %vm637, %v4803, 0
      %v4856 = vsel %vm637, %v4804, 0
      %v4859 = vsel %vm637, %v4805, 0
      %v4862 = vsel %vm637, %v4806, 0
      %v4865 = vsel %vm637, %v4807, 0
      %v4868 = vsel %vm637, %v4808, 0
      %v4871 = vsel %vm637, %v4809, 0
      %v4874 = vsel %vm637, %v4810, 0
      %v4877 = vsel %vm637, %v4811, 0
      %v4880 = vsel %vm637, %v4812, 0
      %v4883 = vsel %vm637, %v4813, 0
      %v4886 = vsel %vm637, %v4814, 0
      %v4889 = vsel %vm637, %v4815, 0
      %v4892 = vsel %vm637, %v4816, 0
      %v4895 = vsel %vm637, %v4817, 0
      %v4898 = vsel %vm637, %v4818, 0
      %v4901 = vsel %vm637, %v4819, 0
      %v4904 = vsel %vm637, %v4820, 0
      %v4907 = vsel %vm637, %v4821, 0
      %v4910 = vsel %vm637, %v4822, 0
      %v4913 = vsel %vm637, %v4823, 0
      %v4916 = vsel %vm637, %v4824, 0
      %v4919 = vsel %vm637, %v4825, 0
      %v4922 = vsel %vm637, %v4826, 0
      %v4925 = vsel %vm637, %v4827, 0
      %v4928 = vsel %vm637, %v4828, 0
      %4930 = vmatpush.xpose.msra.mxu0 %v4880
      %4931 = vmatpush.xpose.msra.mxu0 %v4877
      %4932 = vmatpush.xpose.msra.mxu0 %v4874
      %4933 = vmatpush.xpose.msra.mxu0 %v4871
      %4934 = vmatpush.xpose.msra.mxu0 %v4868
      %4935 = vmatpush.xpose.msra.mxu0 %v4865
      %4936 = vmatpush.xpose.msra.mxu0 %v4862
      %4937 = vmatpush.xpose.msra.mxu0 %v4859
      %4938 = vmatpush.xpose.msra.mxu0 %v4856
      %4939 = vmatpush.xpose.msra.mxu0 %v4853
      %4940 = vmatpush.xpose.msra.mxu0 %v4850
      %4941 = vmatpush.xpose.msra.mxu0 %v4847
      %4942 = vmatpush.xpose.msra.mxu0 %v4844
      %4943 = vmatpush.xpose.msra.mxu0 %v4841
      %4944 = vmatpush.xpose.msra.mxu0 %v4838
      %4945 = vmatpush.xpose.msra.mxu0 %v4835
      %4946 = vmatmul.f32.gmra.mxu0 %v4832
      %v4947 = vpop.f32.mrf.mxu0
      %v4948 = vadd.f32 0.0, %v4947
      %4949 = vdwg.mxu0
      %4950 = vmatpush.xpose.msra.mxu0 %v4928
      %4951 = vmatpush.xpose.msra.mxu0 %v4925
      %4952 = vmatpush.xpose.msra.mxu0 %v4922
      %4953 = vmatpush.xpose.msra.mxu0 %v4919
      %4954 = vmatpush.xpose.msra.mxu0 %v4916
      %4955 = vmatpush.xpose.msra.mxu0 %v4913
      %4956 = vmatpush.xpose.msra.mxu0 %v4910
      %4957 = vmatpush.xpose.msra.mxu0 %v4907
      %4958 = vmatpush.xpose.msra.mxu0 %v4904
      %4959 = vmatpush.xpose.msra.mxu0 %v4901
      %4960 = vmatpush.xpose.msra.mxu0 %v4898
      %4961 = vmatpush.xpose.msra.mxu0 %v4895
      %4962 = vmatpush.xpose.msra.mxu0 %v4892
      %4963 = vmatpush.xpose.msra.mxu0 %v4889
      %4964 = vmatpush.xpose.msra.mxu0 %v4886
      %4965 = vmatpush.xpose.msra.mxu0 %v4883
      %4966 = vmatmul.f32.gmra.mxu0 %v4832
      %v4967 = vpop.f32.mrf.mxu0
      %v4968 = vadd.f32 0.0, %v4967
      %4969 = vdwg.mxu0
      %v4970 = vadd.f32 %v4551, %v4948
      %v4971 = vadd.f32 %v4571, %v4968
      %v4972 = vld [vmem:[#allocation2 + $0x17] sm:$0xff]
      %v4973 = vld [vmem:[#allocation2 + $0x1f] sm:$0xff]
      %v4974 = vld [vmem:[#allocation2 + $0x27] sm:$0xff]
      %v4975 = vld [vmem:[#allocation2 + $0x2f] sm:$0xff]
      %v4976 = vld [vmem:[#allocation2 + $0x37] sm:$0xff]
      %v4977 = vld [vmem:[#allocation2 + $0x3f] sm:$0xff]
      %v4978 = vld [vmem:[#allocation2 + $0x47] sm:$0xff]
      %v4979 = vld [vmem:[#allocation2 + $0x4f] sm:$0xff]
      %v4980 = vld [vmem:[#allocation2 + $0x57] sm:$0xff]
      %v4981 = vld [vmem:[#allocation2 + $0x5f] sm:$0xff]
      %v4982 = vld [vmem:[#allocation2 + $0x67] sm:$0xff]
      %v4983 = vld [vmem:[#allocation2 + $0x6f] sm:$0xff]
      %v4984 = vld [vmem:[#allocation2 + $0x77] sm:$0xff]
      %v4985 = vld [vmem:[#allocation2 + $0x7f] sm:$0xff]
      %v4986 = vld [vmem:[#allocation2 + $0x87] sm:$0xff]
      %v4987 = vld [vmem:[#allocation2 + $0x8f] sm:$0xff]
      %v4988 = vld [vmem:[#allocation2 + $0x97] sm:$0xff]
      %v4989 = vld [vmem:[#allocation2 + $0x9f] sm:$0xff]
      %v4990 = vld [vmem:[#allocation2 + $0xa7] sm:$0xff]
      %v4991 = vld [vmem:[#allocation2 + $0xaf] sm:$0xff]
      %v4992 = vld [vmem:[#allocation2 + $0xb7] sm:$0xff]
      %v4993 = vld [vmem:[#allocation2 + $0xbf] sm:$0xff]
      %v4994 = vld [vmem:[#allocation2 + $0xc7] sm:$0xff]
      %v4995 = vld [vmem:[#allocation2 + $0xcf] sm:$0xff]
      %v4996 = vld [vmem:[#allocation2 + $0xd7] sm:$0xff]
      %v4997 = vld [vmem:[#allocation2 + $0xdf] sm:$0xff]
      %v4998 = vld [vmem:[#allocation2 + $0xe7] sm:$0xff]
      %v4999 = vld [vmem:[#allocation2 + $0xef] sm:$0xff]
      %v5000 = vld [vmem:[#allocation2 + $0xf7] sm:$0xff]
      %v5001 = vld [vmem:[#allocation2 + $0xff] sm:$0xff]
      %v5002 = vld [vmem:[#allocation2 + $0x107] sm:$0xff]
      %v5003 = vld [vmem:[#allocation2 + $0x10f] sm:$0xff]
      %v5004 = vmul.f32 %v4972, %v4071
      %v5005 = vmul.f32 %v4973, %v4076
      %v5006 = vmul.f32 %v4974, %v4081
      %v5007 = vmul.f32 %v4975, %v4086
      %v5008 = vmul.f32 %v4976, %v4091
      %v5009 = vmul.f32 %v4977, %v4096
      %v5010 = vmul.f32 %v4978, %v4101
      %v5011 = vmul.f32 %v4979, %v4106
      %v5012 = vmul.f32 %v4980, %v4111
      %v5013 = vmul.f32 %v4981, %v4116
      %v5014 = vmul.f32 %v4982, %v4121
      %v5015 = vmul.f32 %v4983, %v4126
      %v5016 = vmul.f32 %v4984, %v4131
      %v5017 = vmul.f32 %v4985, %v4136
      %v5018 = vmul.f32 %v4986, %v4141
      %v5019 = vmul.f32 %v4987, %v4146
      %v5020 = vmul.f32 %v4988, %v4151
      %v5021 = vmul.f32 %v4989, %v4156
      %v5022 = vmul.f32 %v4990, %v4161
      %v5023 = vmul.f32 %v4991, %v4166
      %v5024 = vmul.f32 %v4992, %v4171
      %v5025 = vmul.f32 %v4993, %v4176
      %v5026 = vmul.f32 %v4994, %v4181
      %v5027 = vmul.f32 %v4995, %v4186
      %v5028 = vmul.f32 %v4996, %v4191
      %v5029 = vmul.f32 %v4997, %v4196
      %v5030 = vmul.f32 %v4998, %v4201
      %v5031 = vmul.f32 %v4999, %v4206
      %v5032 = vmul.f32 %v5000, %v4211
      %v5033 = vmul.f32 %v5001, %v4216
      %v5034 = vmul.f32 %v5002, %v4221
      %v5035 = vmul.f32 %v5003, %v4226
      %s5036 = scalar_lea.vmem %s7, 24
      %v5037 = vld [vmem:[%s5036] sm:$0xff]
      %v5039 = vsel %vm637, %v5037, 0
      %v5042 = vsel %vm637, %v5004, 0
      %v5045 = vsel %vm637, %v5005, 0
      %v5048 = vsel %vm637, %v5006, 0
      %v5051 = vsel %vm637, %v5007, 0
      %v5054 = vsel %vm637, %v5008, 0
      %v5057 = vsel %vm637, %v5009, 0
      %v5060 = vsel %vm637, %v5010, 0
      %v5063 = vsel %vm637, %v5011, 0
      %v5066 = vsel %vm637, %v5012, 0
      %v5069 = vsel %vm637, %v5013, 0
      %v5072 = vsel %vm637, %v5014, 0
      %v5075 = vsel %vm637, %v5015, 0
      %v5078 = vsel %vm637, %v5016, 0
      %v5081 = vsel %vm637, %v5017, 0
      %v5084 = vsel %vm637, %v5018, 0
      %v5087 = vsel %vm637, %v5019, 0
      %v5090 = vsel %vm637, %v5020, 0
      %v5093 = vsel %vm637, %v5021, 0
      %v5096 = vsel %vm637, %v5022, 0
      %v5099 = vsel %vm637, %v5023, 0
      %v5102 = vsel %vm637, %v5024, 0
      %v5105 = vsel %vm637, %v5025, 0
      %v5108 = vsel %vm637, %v5026, 0
      %v5111 = vsel %vm637, %v5027, 0
      %v5114 = vsel %vm637, %v5028, 0
      %v5117 = vsel %vm637, %v5029, 0
      %v5120 = vsel %vm637, %v5030, 0
      %v5123 = vsel %vm637, %v5031, 0
      %v5126 = vsel %vm637, %v5032, 0
      %v5129 = vsel %vm637, %v5033, 0
      %v5132 = vsel %vm637, %v5034, 0
      %v5135 = vsel %vm637, %v5035, 0
      %5137 = vmatpush.xpose.msra.mxu0 %v5087
      %5138 = vmatpush.xpose.msra.mxu0 %v5084
      %5139 = vmatpush.xpose.msra.mxu0 %v5081
      %5140 = vmatpush.xpose.msra.mxu0 %v5078
      %5141 = vmatpush.xpose.msra.mxu0 %v5075
      %5142 = vmatpush.xpose.msra.mxu0 %v5072
      %5143 = vmatpush.xpose.msra.mxu0 %v5069
      %5144 = vmatpush.xpose.msra.mxu0 %v5066
      %5145 = vmatpush.xpose.msra.mxu0 %v5063
      %5146 = vmatpush.xpose.msra.mxu0 %v5060
      %5147 = vmatpush.xpose.msra.mxu0 %v5057
      %5148 = vmatpush.xpose.msra.mxu0 %v5054
      %5149 = vmatpush.xpose.msra.mxu0 %v5051
      %5150 = vmatpush.xpose.msra.mxu0 %v5048
      %5151 = vmatpush.xpose.msra.mxu0 %v5045
      %5152 = vmatpush.xpose.msra.mxu0 %v5042
      %5153 = vmatmul.f32.gmra.mxu0 %v5039
      %v5154 = vpop.f32.mrf.mxu0
      %v5155 = vadd.f32 0.0, %v5154
      %5156 = vdwg.mxu0
      %5157 = vmatpush.xpose.msra.mxu0 %v5135
      %5158 = vmatpush.xpose.msra.mxu0 %v5132
      %5159 = vmatpush.xpose.msra.mxu0 %v5129
      %5160 = vmatpush.xpose.msra.mxu0 %v5126
      %5161 = vmatpush.xpose.msra.mxu0 %v5123
      %5162 = vmatpush.xpose.msra.mxu0 %v5120
      %5163 = vmatpush.xpose.msra.mxu0 %v5117
      %5164 = vmatpush.xpose.msra.mxu0 %v5114
      %5165 = vmatpush.xpose.msra.mxu0 %v5111
      %5166 = vmatpush.xpose.msra.mxu0 %v5108
      %5167 = vmatpush.xpose.msra.mxu0 %v5105
      %5168 = vmatpush.xpose.msra.mxu0 %v5102
      %5169 = vmatpush.xpose.msra.mxu0 %v5099
      %5170 = vmatpush.xpose.msra.mxu0 %v5096
      %5171 = vmatpush.xpose.msra.mxu0 %v5093
      %5172 = vmatpush.xpose.msra.mxu0 %v5090
      %5173 = vmatmul.f32.gmra.mxu0 %v5039
      %v5174 = vpop.f32.mrf.mxu0
      %v5175 = vadd.f32 0.0, %v5174
      %5176 = vdwg.mxu0
      %v5177 = vadd.f32 %v4970, %v5155
      %v5178 = vadd.f32 %v4971, %v5175
      %v5179 = vld [vmem:[#allocation2 + $0x18] sm:$0xff]
      %v5180 = vld [vmem:[#allocation2 + $0x20] sm:$0xff]
      %v5181 = vld [vmem:[#allocation2 + $0x28] sm:$0xff]
      %v5182 = vld [vmem:[#allocation2 + $0x30] sm:$0xff]
      %v5183 = vld [vmem:[#allocation2 + $0x38] sm:$0xff]
      %v5184 = vld [vmem:[#allocation2 + $0x40] sm:$0xff]
      %v5185 = vld [vmem:[#allocation2 + $0x48] sm:$0xff]
      %v5186 = vld [vmem:[#allocation2 + $0x50] sm:$0xff]
      %v5187 = vld [vmem:[#allocation2 + $0x58] sm:$0xff]
      %v5188 = vld [vmem:[#allocation2 + $0x60] sm:$0xff]
      %v5189 = vld [vmem:[#allocation2 + $0x68] sm:$0xff]
      %v5190 = vld [vmem:[#allocation2 + $0x70] sm:$0xff]
      %v5191 = vld [vmem:[#allocation2 + $0x78] sm:$0xff]
      %v5192 = vld [vmem:[#allocation2 + $0x80] sm:$0xff]
      %v5193 = vld [vmem:[#allocation2 + $0x88] sm:$0xff]
      %v5194 = vld [vmem:[#allocation2 + $0x90] sm:$0xff]
      %v5195 = vld [vmem:[#allocation2 + $0x98] sm:$0xff]
      %v5196 = vld [vmem:[#allocation2 + $0xa0] sm:$0xff]
      %v5197 = vld [vmem:[#allocation2 + $0xa8] sm:$0xff]
      %v5198 = vld [vmem:[#allocation2 + $0xb0] sm:$0xff]
      %v5199 = vld [vmem:[#allocation2 + $0xb8] sm:$0xff]
      %v5200 = vld [vmem:[#allocation2 + $0xc0] sm:$0xff]
      %v5201 = vld [vmem:[#allocation2 + $0xc8] sm:$0xff]
      %v5202 = vld [vmem:[#allocation2 + $0xd0] sm:$0xff]
      %v5203 = vld [vmem:[#allocation2 + $0xd8] sm:$0xff]
      %v5204 = vld [vmem:[#allocation2 + $0xe0] sm:$0xff]
      %v5205 = vld [vmem:[#allocation2 + $0xe8] sm:$0xff]
      %v5206 = vld [vmem:[#allocation2 + $0xf0] sm:$0xff]
      %v5207 = vld [vmem:[#allocation2 + $0xf8] sm:$0xff]
      %v5208 = vld [vmem:[#allocation2 + $0x100] sm:$0xff]
      %v5209 = vld [vmem:[#allocation2 + $0x108] sm:$0xff]
      %v5210 = vld [vmem:[#allocation2 + $0x110] sm:$0xff]
      %s5211 = scalar_lea.vmem %s7, 32
      %v5212 = vld [vmem:[%s5211] sm:$0xff]
      %v5214 = vsel %vm637, %v5212, 0
      %v5217 = vsel %vm637, %v5179, 0
      %v5220 = vsel %vm637, %v5180, 0
      %v5223 = vsel %vm637, %v5181, 0
      %v5226 = vsel %vm637, %v5182, 0
      %v5229 = vsel %vm637, %v5183, 0
      %v5232 = vsel %vm637, %v5184, 0
      %v5235 = vsel %vm637, %v5185, 0
      %v5238 = vsel %vm637, %v5186, 0
      %v5241 = vsel %vm637, %v5187, 0
      %v5244 = vsel %vm637, %v5188, 0
      %v5247 = vsel %vm637, %v5189, 0
      %v5250 = vsel %vm637, %v5190, 0
      %v5253 = vsel %vm637, %v5191, 0
      %v5256 = vsel %vm637, %v5192, 0
      %v5259 = vsel %vm637, %v5193, 0
      %v5262 = vsel %vm637, %v5194, 0
      %v5265 = vsel %vm637, %v5195, 0
      %v5268 = vsel %vm637, %v5196, 0
      %v5271 = vsel %vm637, %v5197, 0
      %v5274 = vsel %vm637, %v5198, 0
      %v5277 = vsel %vm637, %v5199, 0
      %v5280 = vsel %vm637, %v5200, 0
      %v5283 = vsel %vm637, %v5201, 0
      %v5286 = vsel %vm637, %v5202, 0
      %v5289 = vsel %vm637, %v5203, 0
      %v5292 = vsel %vm637, %v5204, 0
      %v5295 = vsel %vm637, %v5205, 0
      %v5298 = vsel %vm637, %v5206, 0
      %v5301 = vsel %vm637, %v5207, 0
      %v5304 = vsel %vm637, %v5208, 0
      %v5307 = vsel %vm637, %v5209, 0
      %v5310 = vsel %vm637, %v5210, 0
      %5312 = vmatpush.xpose.msra.mxu0 %v5262
      %5313 = vmatpush.xpose.msra.mxu0 %v5259
      %5314 = vmatpush.xpose.msra.mxu0 %v5256
      %5315 = vmatpush.xpose.msra.mxu0 %v5253
      %5316 = vmatpush.xpose.msra.mxu0 %v5250
      %5317 = vmatpush.xpose.msra.mxu0 %v5247
      %5318 = vmatpush.xpose.msra.mxu0 %v5244
      %5319 = vmatpush.xpose.msra.mxu0 %v5241
      %5320 = vmatpush.xpose.msra.mxu0 %v5238
      %5321 = vmatpush.xpose.msra.mxu0 %v5235
      %5322 = vmatpush.xpose.msra.mxu0 %v5232
      %5323 = vmatpush.xpose.msra.mxu0 %v5229
      %5324 = vmatpush.xpose.msra.mxu0 %v5226
      %5325 = vmatpush.xpose.msra.mxu0 %v5223
      %5326 = vmatpush.xpose.msra.mxu0 %v5220
      %5327 = vmatpush.xpose.msra.mxu0 %v5217
      %5328 = vmatmul.f32.gmra.mxu0 %v5214
      %v5329 = vpop.f32.mrf.mxu0
      %v5330 = vadd.f32 0.0, %v5329
      %5331 = vdwg.mxu0
      %5332 = vmatpush.xpose.msra.mxu0 %v5310
      %5333 = vmatpush.xpose.msra.mxu0 %v5307
      %5334 = vmatpush.xpose.msra.mxu0 %v5304
      %5335 = vmatpush.xpose.msra.mxu0 %v5301
      %5336 = vmatpush.xpose.msra.mxu0 %v5298
      %5337 = vmatpush.xpose.msra.mxu0 %v5295
      %5338 = vmatpush.xpose.msra.mxu0 %v5292
      %5339 = vmatpush.xpose.msra.mxu0 %v5289
      %5340 = vmatpush.xpose.msra.mxu0 %v5286
      %5341 = vmatpush.xpose.msra.mxu0 %v5283
      %5342 = vmatpush.xpose.msra.mxu0 %v5280
      %5343 = vmatpush.xpose.msra.mxu0 %v5277
      %5344 = vmatpush.xpose.msra.mxu0 %v5274
      %5345 = vmatpush.xpose.msra.mxu0 %v5271
      %5346 = vmatpush.xpose.msra.mxu0 %v5268
      %5347 = vmatpush.xpose.msra.mxu0 %v5265
      %5348 = vmatmul.f32.gmra.mxu0 %v5214
      %v5349 = vpop.f32.mrf.mxu0
      %v5350 = vadd.f32 0.0, %v5349
      %5351 = vdwg.mxu0
      %v5352 = vadd.f32 %v5177, %v5330
      %v5353 = vadd.f32 %v5178, %v5350
      %v5354 = vld [vmem:[#allocation2 + $0x19] sm:$0xff]
      %v5355 = vld [vmem:[#allocation2 + $0x21] sm:$0xff]
      %v5356 = vld [vmem:[#allocation2 + $0x29] sm:$0xff]
      %v5357 = vld [vmem:[#allocation2 + $0x31] sm:$0xff]
      %v5358 = vld [vmem:[#allocation2 + $0x39] sm:$0xff]
      %v5359 = vld [vmem:[#allocation2 + $0x41] sm:$0xff]
      %v5360 = vld [vmem:[#allocation2 + $0x49] sm:$0xff]
      %v5361 = vld [vmem:[#allocation2 + $0x51] sm:$0xff]
      %v5362 = vld [vmem:[#allocation2 + $0x59] sm:$0xff]
      %v5363 = vld [vmem:[#allocation2 + $0x61] sm:$0xff]
      %v5364 = vld [vmem:[#allocation2 + $0x69] sm:$0xff]
      %v5365 = vld [vmem:[#allocation2 + $0x71] sm:$0xff]
      %v5366 = vld [vmem:[#allocation2 + $0x79] sm:$0xff]
      %v5367 = vld [vmem:[#allocation2 + $0x81] sm:$0xff]
      %v5368 = vld [vmem:[#allocation2 + $0x89] sm:$0xff]
      %v5369 = vld [vmem:[#allocation2 + $0x91] sm:$0xff]
      %v5370 = vld [vmem:[#allocation2 + $0x99] sm:$0xff]
      %v5371 = vld [vmem:[#allocation2 + $0xa1] sm:$0xff]
      %v5372 = vld [vmem:[#allocation2 + $0xa9] sm:$0xff]
      %v5373 = vld [vmem:[#allocation2 + $0xb1] sm:$0xff]
      %v5374 = vld [vmem:[#allocation2 + $0xb9] sm:$0xff]
      %v5375 = vld [vmem:[#allocation2 + $0xc1] sm:$0xff]
      %v5376 = vld [vmem:[#allocation2 + $0xc9] sm:$0xff]
      %v5377 = vld [vmem:[#allocation2 + $0xd1] sm:$0xff]
      %v5378 = vld [vmem:[#allocation2 + $0xd9] sm:$0xff]
      %v5379 = vld [vmem:[#allocation2 + $0xe1] sm:$0xff]
      %v5380 = vld [vmem:[#allocation2 + $0xe9] sm:$0xff]
      %v5381 = vld [vmem:[#allocation2 + $0xf1] sm:$0xff]
      %v5382 = vld [vmem:[#allocation2 + $0xf9] sm:$0xff]
      %v5383 = vld [vmem:[#allocation2 + $0x101] sm:$0xff]
      %v5384 = vld [vmem:[#allocation2 + $0x109] sm:$0xff]
      %v5385 = vld [vmem:[#allocation2 + $0x111] sm:$0xff]
      %v5386 = vmul.f32 %v5354, %v4640
      %v5387 = vmul.f32 %v5355, %v4645
      %v5388 = vmul.f32 %v5356, %v4650
      %v5389 = vmul.f32 %v5357, %v4655
      %v5390 = vmul.f32 %v5358, %v4660
      %v5391 = vmul.f32 %v5359, %v4665
      %v5392 = vmul.f32 %v5360, %v4670
      %v5393 = vmul.f32 %v5361, %v4675
      %v5394 = vmul.f32 %v5362, %v4680
      %v5395 = vmul.f32 %v5363, %v4685
      %v5396 = vmul.f32 %v5364, %v4690
      %v5397 = vmul.f32 %v5365, %v4695
      %v5398 = vmul.f32 %v5366, %v4700
      %v5399 = vmul.f32 %v5367, %v4705
      %v5400 = vmul.f32 %v5368, %v4710
      %v5401 = vmul.f32 %v5369, %v4715
      %v5402 = vmul.f32 %v5370, %v4720
      %v5403 = vmul.f32 %v5371, %v4725
      %v5404 = vmul.f32 %v5372, %v4730
      %v5405 = vmul.f32 %v5373, %v4735
      %v5406 = vmul.f32 %v5374, %v4740
      %v5407 = vmul.f32 %v5375, %v4745
      %v5408 = vmul.f32 %v5376, %v4750
      %v5409 = vmul.f32 %v5377, %v4755
      %v5410 = vmul.f32 %v5378, %v4760
      %v5411 = vmul.f32 %v5379, %v4765
      %v5412 = vmul.f32 %v5380, %v4770
      %v5413 = vmul.f32 %v5381, %v4775
      %v5414 = vmul.f32 %v5382, %v4780
      %v5415 = vmul.f32 %v5383, %v4785
      %v5416 = vmul.f32 %v5384, %v4790
      %v5417 = vmul.f32 %v5385, %v4795
      %s5418 = scalar_lea.vmem %s7, 40
      %v5419 = vld [vmem:[%s5418] sm:$0xff]
      %v5421 = vsel %vm637, %v5419, 0
      %v5424 = vsel %vm637, %v5386, 0
      %v5427 = vsel %vm637, %v5387, 0
      %v5430 = vsel %vm637, %v5388, 0
      %v5433 = vsel %vm637, %v5389, 0
      %v5436 = vsel %vm637, %v5390, 0
      %v5439 = vsel %vm637, %v5391, 0
      %v5442 = vsel %vm637, %v5392, 0
      %v5445 = vsel %vm637, %v5393, 0
      %v5448 = vsel %vm637, %v5394, 0
      %v5451 = vsel %vm637, %v5395, 0
      %v5454 = vsel %vm637, %v5396, 0
      %v5457 = vsel %vm637, %v5397, 0
      %v5460 = vsel %vm637, %v5398, 0
      %v5463 = vsel %vm637, %v5399, 0
      %v5466 = vsel %vm637, %v5400, 0
      %v5469 = vsel %vm637, %v5401, 0
      %v5472 = vsel %vm637, %v5402, 0
      %v5475 = vsel %vm637, %v5403, 0
      %v5478 = vsel %vm637, %v5404, 0
      %v5481 = vsel %vm637, %v5405, 0
      %v5484 = vsel %vm637, %v5406, 0
      %v5487 = vsel %vm637, %v5407, 0
      %v5490 = vsel %vm637, %v5408, 0
      %v5493 = vsel %vm637, %v5409, 0
      %v5496 = vsel %vm637, %v5410, 0
      %v5499 = vsel %vm637, %v5411, 0
      %v5502 = vsel %vm637, %v5412, 0
      %v5505 = vsel %vm637, %v5413, 0
      %v5508 = vsel %vm637, %v5414, 0
      %v5511 = vsel %vm637, %v5415, 0
      %v5514 = vsel %vm637, %v5416, 0
      %v5517 = vsel %vm637, %v5417, 0
      %5519 = vmatpush.xpose.msra.mxu0 %v5469
      %5520 = vmatpush.xpose.msra.mxu0 %v5466
      %5521 = vmatpush.xpose.msra.mxu0 %v5463
      %5522 = vmatpush.xpose.msra.mxu0 %v5460
      %5523 = vmatpush.xpose.msra.mxu0 %v5457
      %5524 = vmatpush.xpose.msra.mxu0 %v5454
      %5525 = vmatpush.xpose.msra.mxu0 %v5451
      %5526 = vmatpush.xpose.msra.mxu0 %v5448
      %5527 = vmatpush.xpose.msra.mxu0 %v5445
      %5528 = vmatpush.xpose.msra.mxu0 %v5442
      %5529 = vmatpush.xpose.msra.mxu0 %v5439
      %5530 = vmatpush.xpose.msra.mxu0 %v5436
      %5531 = vmatpush.xpose.msra.mxu0 %v5433
      %5532 = vmatpush.xpose.msra.mxu0 %v5430
      %5533 = vmatpush.xpose.msra.mxu0 %v5427
      %5534 = vmatpush.xpose.msra.mxu0 %v5424
      %5535 = vmatmul.f32.gmra.mxu0 %v5421
      %v5536 = vpop.f32.mrf.mxu0
      %v5537 = vadd.f32 0.0, %v5536
      %5538 = vdwg.mxu0
      %5539 = vmatpush.xpose.msra.mxu0 %v5517
      %5540 = vmatpush.xpose.msra.mxu0 %v5514
      %5541 = vmatpush.xpose.msra.mxu0 %v5511
      %5542 = vmatpush.xpose.msra.mxu0 %v5508
      %5543 = vmatpush.xpose.msra.mxu0 %v5505
      %5544 = vmatpush.xpose.msra.mxu0 %v5502
      %5545 = vmatpush.xpose.msra.mxu0 %v5499
      %5546 = vmatpush.xpose.msra.mxu0 %v5496
      %5547 = vmatpush.xpose.msra.mxu0 %v5493
      %5548 = vmatpush.xpose.msra.mxu0 %v5490
      %5549 = vmatpush.xpose.msra.mxu0 %v5487
      %5550 = vmatpush.xpose.msra.mxu0 %v5484
      %5551 = vmatpush.xpose.msra.mxu0 %v5481
      %5552 = vmatpush.xpose.msra.mxu0 %v5478
      %5553 = vmatpush.xpose.msra.mxu0 %v5475
      %5554 = vmatpush.xpose.msra.mxu0 %v5472
      %5555 = vmatmul.f32.gmra.mxu0 %v5421
      %v5556 = vpop.f32.mrf.mxu0
      %v5557 = vadd.f32 0.0, %v5556
      %5558 = vdwg.mxu0
      %v5559 = vadd.f32 %v5352, %v5537
      %v5560 = vadd.f32 %v5353, %v5557
      %v5561 = vld [vmem:[#allocation2 + $0x27] sm:$0xff]
      %v5562 = vld [vmem:[#allocation2 + $0x2f] sm:$0xff]
      %v5563 = vld [vmem:[#allocation2 + $0x37] sm:$0xff]
      %v5564 = vld [vmem:[#allocation2 + $0x3f] sm:$0xff]
      %v5565 = vld [vmem:[#allocation2 + $0x47] sm:$0xff]
      %v5566 = vld [vmem:[#allocation2 + $0x4f] sm:$0xff]
      %v5567 = vld [vmem:[#allocation2 + $0x57] sm:$0xff]
      %v5568 = vld [vmem:[#allocation2 + $0x5f] sm:$0xff]
      %v5569 = vld [vmem:[#allocation2 + $0x67] sm:$0xff]
      %v5570 = vld [vmem:[#allocation2 + $0x6f] sm:$0xff]
      %v5571 = vld [vmem:[#allocation2 + $0x77] sm:$0xff]
      %v5572 = vld [vmem:[#allocation2 + $0x7f] sm:$0xff]
      %v5573 = vld [vmem:[#allocation2 + $0x87] sm:$0xff]
      %v5574 = vld [vmem:[#allocation2 + $0x8f] sm:$0xff]
      %v5575 = vld [vmem:[#allocation2 + $0x97] sm:$0xff]
      %v5576 = vld [vmem:[#allocation2 + $0x9f] sm:$0xff]
      %v5577 = vld [vmem:[#allocation2 + $0xa7] sm:$0xff]
      %v5578 = vld [vmem:[#allocation2 + $0xaf] sm:$0xff]
      %v5579 = vld [vmem:[#allocation2 + $0xb7] sm:$0xff]
      %v5580 = vld [vmem:[#allocation2 + $0xbf] sm:$0xff]
      %v5581 = vld [vmem:[#allocation2 + $0xc7] sm:$0xff]
      %v5582 = vld [vmem:[#allocation2 + $0xcf] sm:$0xff]
      %v5583 = vld [vmem:[#allocation2 + $0xd7] sm:$0xff]
      %v5584 = vld [vmem:[#allocation2 + $0xdf] sm:$0xff]
      %v5585 = vld [vmem:[#allocation2 + $0xe7] sm:$0xff]
      %v5586 = vld [vmem:[#allocation2 + $0xef] sm:$0xff]
      %v5587 = vld [vmem:[#allocation2 + $0xf7] sm:$0xff]
      %v5588 = vld [vmem:[#allocation2 + $0xff] sm:$0xff]
      %v5589 = vld [vmem:[#allocation2 + $0x107] sm:$0xff]
      %v5590 = vld [vmem:[#allocation2 + $0x10f] sm:$0xff]
      %v5591 = vld [vmem:[#allocation2 + $0x117] sm:$0xff]
      %v5592 = vld [vmem:[#allocation2 + $0x11f] sm:$0xff]
      %v5593 = vmul.f32 %v5561, %v4071
      %v5594 = vmul.f32 %v5562, %v4076
      %v5595 = vmul.f32 %v5563, %v4081
      %v5596 = vmul.f32 %v5564, %v4086
      %v5597 = vmul.f32 %v5565, %v4091
      %v5598 = vmul.f32 %v5566, %v4096
      %v5599 = vmul.f32 %v5567, %v4101
      %v5600 = vmul.f32 %v5568, %v4106
      %v5601 = vmul.f32 %v5569, %v4111
      %v5602 = vmul.f32 %v5570, %v4116
      %v5603 = vmul.f32 %v5571, %v4121
      %v5604 = vmul.f32 %v5572, %v4126
      %v5605 = vmul.f32 %v5573, %v4131
      %v5606 = vmul.f32 %v5574, %v4136
      %v5607 = vmul.f32 %v5575, %v4141
      %v5608 = vmul.f32 %v5576, %v4146
      %v5609 = vmul.f32 %v5577, %v4151
      %v5610 = vmul.f32 %v5578, %v4156
      %v5611 = vmul.f32 %v5579, %v4161
      %v5612 = vmul.f32 %v5580, %v4166
      %v5613 = vmul.f32 %v5581, %v4171
      %v5614 = vmul.f32 %v5582, %v4176
      %v5615 = vmul.f32 %v5583, %v4181
      %v5616 = vmul.f32 %v5584, %v4186
      %v5617 = vmul.f32 %v5585, %v4191
      %v5618 = vmul.f32 %v5586, %v4196
      %v5619 = vmul.f32 %v5587, %v4201
      %v5620 = vmul.f32 %v5588, %v4206
      %v5621 = vmul.f32 %v5589, %v4211
      %v5622 = vmul.f32 %v5590, %v4216
      %v5623 = vmul.f32 %v5591, %v4221
      %v5624 = vmul.f32 %v5592, %v4226
      %s5625 = scalar_lea.vmem %s7, 48
      %v5626 = vld [vmem:[%s5625] sm:$0xff]
      %v5628 = vsel %vm637, %v5626, 0
      %v5631 = vsel %vm637, %v5593, 0
      %v5634 = vsel %vm637, %v5594, 0
      %v5637 = vsel %vm637, %v5595, 0
      %v5640 = vsel %vm637, %v5596, 0
      %v5643 = vsel %vm637, %v5597, 0
      %v5646 = vsel %vm637, %v5598, 0
      %v5649 = vsel %vm637, %v5599, 0
      %v5652 = vsel %vm637, %v5600, 0
      %v5655 = vsel %vm637, %v5601, 0
      %v5658 = vsel %vm637, %v5602, 0
      %v5661 = vsel %vm637, %v5603, 0
      %v5664 = vsel %vm637, %v5604, 0
      %v5667 = vsel %vm637, %v5605, 0
      %v5670 = vsel %vm637, %v5606, 0
      %v5673 = vsel %vm637, %v5607, 0
      %v5676 = vsel %vm637, %v5608, 0
      %v5679 = vsel %vm637, %v5609, 0
      %v5682 = vsel %vm637, %v5610, 0
      %v5685 = vsel %vm637, %v5611, 0
      %v5688 = vsel %vm637, %v5612, 0
      %v5691 = vsel %vm637, %v5613, 0
      %v5694 = vsel %vm637, %v5614, 0
      %v5697 = vsel %vm637, %v5615, 0
      %v5700 = vsel %vm637, %v5616, 0
      %v5703 = vsel %vm637, %v5617, 0
      %v5706 = vsel %vm637, %v5618, 0
      %v5709 = vsel %vm637, %v5619, 0
      %v5712 = vsel %vm637, %v5620, 0
      %v5715 = vsel %vm637, %v5621, 0
      %v5718 = vsel %vm637, %v5622, 0
      %v5721 = vsel %vm637, %v5623, 0
      %v5724 = vsel %vm637, %v5624, 0
      %5726 = vmatpush.xpose.msra.mxu0 %v5676
      %5727 = vmatpush.xpose.msra.mxu0 %v5673
      %5728 = vmatpush.xpose.msra.mxu0 %v5670
      %5729 = vmatpush.xpose.msra.mxu0 %v5667
      %5730 = vmatpush.xpose.msra.mxu0 %v5664
      %5731 = vmatpush.xpose.msra.mxu0 %v5661
      %5732 = vmatpush.xpose.msra.mxu0 %v5658
      %5733 = vmatpush.xpose.msra.mxu0 %v5655
      %5734 = vmatpush.xpose.msra.mxu0 %v5652
      %5735 = vmatpush.xpose.msra.mxu0 %v5649
      %5736 = vmatpush.xpose.msra.mxu0 %v5646
      %5737 = vmatpush.xpose.msra.mxu0 %v5643
      %5738 = vmatpush.xpose.msra.mxu0 %v5640
      %5739 = vmatpush.xpose.msra.mxu0 %v5637
      %5740 = vmatpush.xpose.msra.mxu0 %v5634
      %5741 = vmatpush.xpose.msra.mxu0 %v5631
      %5742 = vmatmul.f32.gmra.mxu0 %v5628
      %v5743 = vpop.f32.mrf.mxu0
      %v5744 = vadd.f32 0.0, %v5743
      %5745 = vdwg.mxu0
      %5746 = vmatpush.xpose.msra.mxu0 %v5724
      %5747 = vmatpush.xpose.msra.mxu0 %v5721
      %5748 = vmatpush.xpose.msra.mxu0 %v5718
      %5749 = vmatpush.xpose.msra.mxu0 %v5715
      %5750 = vmatpush.xpose.msra.mxu0 %v5712
      %5751 = vmatpush.xpose.msra.mxu0 %v5709
      %5752 = vmatpush.xpose.msra.mxu0 %v5706
      %5753 = vmatpush.xpose.msra.mxu0 %v5703
      %5754 = vmatpush.xpose.msra.mxu0 %v5700
      %5755 = vmatpush.xpose.msra.mxu0 %v5697
      %5756 = vmatpush.xpose.msra.mxu0 %v5694
      %5757 = vmatpush.xpose.msra.mxu0 %v5691
      %5758 = vmatpush.xpose.msra.mxu0 %v5688
      %5759 = vmatpush.xpose.msra.mxu0 %v5685
      %5760 = vmatpush.xpose.msra.mxu0 %v5682
      %5761 = vmatpush.xpose.msra.mxu0 %v5679
      %5762 = vmatmul.f32.gmra.mxu0 %v5628
      %v5763 = vpop.f32.mrf.mxu0
      %v5764 = vadd.f32 0.0, %v5763
      %5765 = vdwg.mxu0
      %v5766 = vadd.f32 %v5559, %v5744
      %v5767 = vadd.f32 %v5560, %v5764
      %v5768 = vld [vmem:[#allocation2 + $0x28] sm:$0xff]
      %v5769 = vld [vmem:[#allocation2 + $0x30] sm:$0xff]
      %v5770 = vld [vmem:[#allocation2 + $0x38] sm:$0xff]
      %v5771 = vld [vmem:[#allocation2 + $0x40] sm:$0xff]
      %v5772 = vld [vmem:[#allocation2 + $0x48] sm:$0xff]
      %v5773 = vld [vmem:[#allocation2 + $0x50] sm:$0xff]
      %v5774 = vld [vmem:[#allocation2 + $0x58] sm:$0xff]
      %v5775 = vld [vmem:[#allocation2 + $0x60] sm:$0xff]
      %v5776 = vld [vmem:[#allocation2 + $0x68] sm:$0xff]
      %v5777 = vld [vmem:[#allocation2 + $0x70] sm:$0xff]
      %v5778 = vld [vmem:[#allocation2 + $0x78] sm:$0xff]
      %v5779 = vld [vmem:[#allocation2 + $0x80] sm:$0xff]
      %v5780 = vld [vmem:[#allocation2 + $0x88] sm:$0xff]
      %v5781 = vld [vmem:[#allocation2 + $0x90] sm:$0xff]
      %v5782 = vld [vmem:[#allocation2 + $0x98] sm:$0xff]
      %v5783 = vld [vmem:[#allocation2 + $0xa0] sm:$0xff]
      %v5784 = vld [vmem:[#allocation2 + $0xa8] sm:$0xff]
      %v5785 = vld [vmem:[#allocation2 + $0xb0] sm:$0xff]
      %v5786 = vld [vmem:[#allocation2 + $0xb8] sm:$0xff]
      %v5787 = vld [vmem:[#allocation2 + $0xc0] sm:$0xff]
      %v5788 = vld [vmem:[#allocation2 + $0xc8] sm:$0xff]
      %v5789 = vld [vmem:[#allocation2 + $0xd0] sm:$0xff]
      %v5790 = vld [vmem:[#allocation2 + $0xd8] sm:$0xff]
      %v5791 = vld [vmem:[#allocation2 + $0xe0] sm:$0xff]
      %v5792 = vld [vmem:[#allocation2 + $0xe8] sm:$0xff]
      %v5793 = vld [vmem:[#allocation2 + $0xf0] sm:$0xff]
      %v5794 = vld [vmem:[#allocation2 + $0xf8] sm:$0xff]
      %v5795 = vld [vmem:[#allocation2 + $0x100] sm:$0xff]
      %v5796 = vld [vmem:[#allocation2 + $0x108] sm:$0xff]
      %v5797 = vld [vmem:[#allocation2 + $0x110] sm:$0xff]
      %v5798 = vld [vmem:[#allocation2 + $0x118] sm:$0xff]
      %v5799 = vld [vmem:[#allocation2 + $0x120] sm:$0xff]
      %s5800 = scalar_lea.vmem %s7, 56
      %v5801 = vld [vmem:[%s5800] sm:$0xff]
      %v5803 = vsel %vm637, %v5801, 0
      %v5806 = vsel %vm637, %v5768, 0
      %v5809 = vsel %vm637, %v5769, 0
      %v5812 = vsel %vm637, %v5770, 0
      %v5815 = vsel %vm637, %v5771, 0
      %v5818 = vsel %vm637, %v5772, 0
      %v5821 = vsel %vm637, %v5773, 0
      %v5824 = vsel %vm637, %v5774, 0
      %v5827 = vsel %vm637, %v5775, 0
      %v5830 = vsel %vm637, %v5776, 0
      %v5833 = vsel %vm637, %v5777, 0
      %v5836 = vsel %vm637, %v5778, 0
      %v5839 = vsel %vm637, %v5779, 0
      %v5842 = vsel %vm637, %v5780, 0
      %v5845 = vsel %vm637, %v5781, 0
      %v5848 = vsel %vm637, %v5782, 0
      %v5851 = vsel %vm637, %v5783, 0
      %v5854 = vsel %vm637, %v5784, 0
      %v5857 = vsel %vm637, %v5785, 0
      %v5860 = vsel %vm637, %v5786, 0
      %v5863 = vsel %vm637, %v5787, 0
      %v5866 = vsel %vm637, %v5788, 0
      %v5869 = vsel %vm637, %v5789, 0
      %v5872 = vsel %vm637, %v5790, 0
      %v5875 = vsel %vm637, %v5791, 0
      %v5878 = vsel %vm637, %v5792, 0
      %v5881 = vsel %vm637, %v5793, 0
      %v5884 = vsel %vm637, %v5794, 0
      %v5887 = vsel %vm637, %v5795, 0
      %v5890 = vsel %vm637, %v5796, 0
      %v5893 = vsel %vm637, %v5797, 0
      %v5896 = vsel %vm637, %v5798, 0
      %v5899 = vsel %vm637, %v5799, 0
      %5901 = vmatpush.xpose.msra.mxu0 %v5851
      %5902 = vmatpush.xpose.msra.mxu0 %v5848
      %5903 = vmatpush.xpose.msra.mxu0 %v5845
      %5904 = vmatpush.xpose.msra.mxu0 %v5842
      %5905 = vmatpush.xpose.msra.mxu0 %v5839
      %5906 = vmatpush.xpose.msra.mxu0 %v5836
      %5907 = vmatpush.xpose.msra.mxu0 %v5833
      %5908 = vmatpush.xpose.msra.mxu0 %v5830
      %5909 = vmatpush.xpose.msra.mxu0 %v5827
      %5910 = vmatpush.xpose.msra.mxu0 %v5824
      %5911 = vmatpush.xpose.msra.mxu0 %v5821
      %5912 = vmatpush.xpose.msra.mxu0 %v5818
      %5913 = vmatpush.xpose.msra.mxu0 %v5815
      %5914 = vmatpush.xpose.msra.mxu0 %v5812
      %5915 = vmatpush.xpose.msra.mxu0 %v5809
      %5916 = vmatpush.xpose.msra.mxu0 %v5806
      %5917 = vmatmul.f32.gmra.mxu0 %v5803
      %v5918 = vpop.f32.mrf.mxu0
      %v5919 = vadd.f32 0.0, %v5918
      %5920 = vdwg.mxu0
      %5921 = vmatpush.xpose.msra.mxu0 %v5899
      %5922 = vmatpush.xpose.msra.mxu0 %v5896
      %5923 = vmatpush.xpose.msra.mxu0 %v5893
      %5924 = vmatpush.xpose.msra.mxu0 %v5890
      %5925 = vmatpush.xpose.msra.mxu0 %v5887
      %5926 = vmatpush.xpose.msra.mxu0 %v5884
      %5927 = vmatpush.xpose.msra.mxu0 %v5881
      %5928 = vmatpush.xpose.msra.mxu0 %v5878
      %5929 = vmatpush.xpose.msra.mxu0 %v5875
      %5930 = vmatpush.xpose.msra.mxu0 %v5872
      %5931 = vmatpush.xpose.msra.mxu0 %v5869
      %5932 = vmatpush.xpose.msra.mxu0 %v5866
      %5933 = vmatpush.xpose.msra.mxu0 %v5863
      %5934 = vmatpush.xpose.msra.mxu0 %v5860
      %5935 = vmatpush.xpose.msra.mxu0 %v5857
      %5936 = vmatpush.xpose.msra.mxu0 %v5854
      %5937 = vmatmul.f32.gmra.mxu0 %v5803
      %v5938 = vpop.f32.mrf.mxu0
      %v5939 = vadd.f32 0.0, %v5938
      %5940 = vdwg.mxu0
      %v5941 = vadd.f32 %v5766, %v5919
      %v5942 = vadd.f32 %v5767, %v5939
      %v5943 = vld [vmem:[#allocation2 + $0x29] sm:$0xff]
      %v5944 = vld [vmem:[#allocation2 + $0x31] sm:$0xff]
      %v5945 = vld [vmem:[#allocation2 + $0x39] sm:$0xff]
      %v5946 = vld [vmem:[#allocation2 + $0x41] sm:$0xff]
      %v5947 = vld [vmem:[#allocation2 + $0x49] sm:$0xff]
      %v5948 = vld [vmem:[#allocation2 + $0x51] sm:$0xff]
      %v5949 = vld [vmem:[#allocation2 + $0x59] sm:$0xff]
      %v5950 = vld [vmem:[#allocation2 + $0x61] sm:$0xff]
      %v5951 = vld [vmem:[#allocation2 + $0x69] sm:$0xff]
      %v5952 = vld [vmem:[#allocation2 + $0x71] sm:$0xff]
      %v5953 = vld [vmem:[#allocation2 + $0x79] sm:$0xff]
      %v5954 = vld [vmem:[#allocation2 + $0x81] sm:$0xff]
      %v5955 = vld [vmem:[#allocation2 + $0x89] sm:$0xff]
      %v5956 = vld [vmem:[#allocation2 + $0x91] sm:$0xff]
      %v5957 = vld [vmem:[#allocation2 + $0x99] sm:$0xff]
      %v5958 = vld [vmem:[#allocation2 + $0xa1] sm:$0xff]
      %v5959 = vld [vmem:[#allocation2 + $0xa9] sm:$0xff]
      %v5960 = vld [vmem:[#allocation2 + $0xb1] sm:$0xff]
      %v5961 = vld [vmem:[#allocation2 + $0xb9] sm:$0xff]
      %v5962 = vld [vmem:[#allocation2 + $0xc1] sm:$0xff]
      %v5963 = vld [vmem:[#allocation2 + $0xc9] sm:$0xff]
      %v5964 = vld [vmem:[#allocation2 + $0xd1] sm:$0xff]
      %v5965 = vld [vmem:[#allocation2 + $0xd9] sm:$0xff]
      %v5966 = vld [vmem:[#allocation2 + $0xe1] sm:$0xff]
      %v5967 = vld [vmem:[#allocation2 + $0xe9] sm:$0xff]
      %v5968 = vld [vmem:[#allocation2 + $0xf1] sm:$0xff]
      %v5969 = vld [vmem:[#allocation2 + $0xf9] sm:$0xff]
      %v5970 = vld [vmem:[#allocation2 + $0x101] sm:$0xff]
      %v5971 = vld [vmem:[#allocation2 + $0x109] sm:$0xff]
      %v5972 = vld [vmem:[#allocation2 + $0x111] sm:$0xff]
      %v5973 = vld [vmem:[#allocation2 + $0x119] sm:$0xff]
      %v5974 = vld [vmem:[#allocation2 + $0x121] sm:$0xff]
      %v5975 = vmul.f32 %v5943, %v4640
      %v5976 = vmul.f32 %v5944, %v4645
      %v5977 = vmul.f32 %v5945, %v4650
      %v5978 = vmul.f32 %v5946, %v4655
      %v5979 = vmul.f32 %v5947, %v4660
      %v5980 = vmul.f32 %v5948, %v4665
      %v5981 = vmul.f32 %v5949, %v4670
      %v5982 = vmul.f32 %v5950, %v4675
      %v5983 = vmul.f32 %v5951, %v4680
      %v5984 = vmul.f32 %v5952, %v4685
      %v5985 = vmul.f32 %v5953, %v4690
      %v5986 = vmul.f32 %v5954, %v4695
      %v5987 = vmul.f32 %v5955, %v4700
      %v5988 = vmul.f32 %v5956, %v4705
      %v5989 = vmul.f32 %v5957, %v4710
      %v5990 = vmul.f32 %v5958, %v4715
      %v5991 = vmul.f32 %v5959, %v4720
      %v5992 = vmul.f32 %v5960, %v4725
      %v5993 = vmul.f32 %v5961, %v4730
      %v5994 = vmul.f32 %v5962, %v4735
      %v5995 = vmul.f32 %v5963, %v4740
      %v5996 = vmul.f32 %v5964, %v4745
      %v5997 = vmul.f32 %v5965, %v4750
      %v5998 = vmul.f32 %v5966, %v4755
      %v5999 = vmul.f32 %v5967, %v4760
      %v6000 = vmul.f32 %v5968, %v4765
      %v6001 = vmul.f32 %v5969, %v4770
      %v6002 = vmul.f32 %v5970, %v4775
      %v6003 = vmul.f32 %v5971, %v4780
      %v6004 = vmul.f32 %v5972, %v4785
      %v6005 = vmul.f32 %v5973, %v4790
      %v6006 = vmul.f32 %v5974, %v4795
      %s6007 = scalar_lea.vmem %s7, 64
      %v6008 = vld [vmem:[%s6007] sm:$0xff]
      %v6010 = vsel %vm637, %v6008, 0
      %v6013 = vsel %vm637, %v5975, 0
      %v6016 = vsel %vm637, %v5976, 0
      %v6019 = vsel %vm637, %v5977, 0
      %v6022 = vsel %vm637, %v5978, 0
      %v6025 = vsel %vm637, %v5979, 0
      %v6028 = vsel %vm637, %v5980, 0
      %v6031 = vsel %vm637, %v5981, 0
      %v6034 = vsel %vm637, %v5982, 0
      %v6037 = vsel %vm637, %v5983, 0
      %v6040 = vsel %vm637, %v5984, 0
      %v6043 = vsel %vm637, %v5985, 0
      %v6046 = vsel %vm637, %v5986, 0
      %v6049 = vsel %vm637, %v5987, 0
      %v6052 = vsel %vm637, %v5988, 0
      %v6055 = vsel %vm637, %v5989, 0
      %v6058 = vsel %vm637, %v5990, 0
      %v6061 = vsel %vm637, %v5991, 0
      %v6064 = vsel %vm637, %v5992, 0
      %v6067 = vsel %vm637, %v5993, 0
      %v6070 = vsel %vm637, %v5994, 0
      %v6073 = vsel %vm637, %v5995, 0
      %v6076 = vsel %vm637, %v5996, 0
      %v6079 = vsel %vm637, %v5997, 0
      %v6082 = vsel %vm637, %v5998, 0
      %v6085 = vsel %vm637, %v5999, 0
      %v6088 = vsel %vm637, %v6000, 0
      %v6091 = vsel %vm637, %v6001, 0
      %v6094 = vsel %vm637, %v6002, 0
      %v6097 = vsel %vm637, %v6003, 0
      %v6100 = vsel %vm637, %v6004, 0
      %v6103 = vsel %vm637, %v6005, 0
      %v6106 = vsel %vm637, %v6006, 0
      %6108 = vmatpush.xpose.msra.mxu0 %v6058
      %6109 = vmatpush.xpose.msra.mxu0 %v6055
      %6110 = vmatpush.xpose.msra.mxu0 %v6052
      %6111 = vmatpush.xpose.msra.mxu0 %v6049
      %6112 = vmatpush.xpose.msra.mxu0 %v6046
      %6113 = vmatpush.xpose.msra.mxu0 %v6043
      %6114 = vmatpush.xpose.msra.mxu0 %v6040
      %6115 = vmatpush.xpose.msra.mxu0 %v6037
      %6116 = vmatpush.xpose.msra.mxu0 %v6034
      %6117 = vmatpush.xpose.msra.mxu0 %v6031
      %6118 = vmatpush.xpose.msra.mxu0 %v6028
      %6119 = vmatpush.xpose.msra.mxu0 %v6025
      %6120 = vmatpush.xpose.msra.mxu0 %v6022
      %6121 = vmatpush.xpose.msra.mxu0 %v6019
      %6122 = vmatpush.xpose.msra.mxu0 %v6016
      %6123 = vmatpush.xpose.msra.mxu0 %v6013
      %6124 = vmatmul.f32.gmra.mxu0 %v6010
      %v6125 = vpop.f32.mrf.mxu0
      %v6126 = vadd.f32 0.0, %v6125
      %6127 = vdwg.mxu0
      %6128 = vmatpush.xpose.msra.mxu0 %v6106
      %6129 = vmatpush.xpose.msra.mxu0 %v6103
      %6130 = vmatpush.xpose.msra.mxu0 %v6100
      %6131 = vmatpush.xpose.msra.mxu0 %v6097
      %6132 = vmatpush.xpose.msra.mxu0 %v6094
      %6133 = vmatpush.xpose.msra.mxu0 %v6091
      %6134 = vmatpush.xpose.msra.mxu0 %v6088
      %6135 = vmatpush.xpose.msra.mxu0 %v6085
      %6136 = vmatpush.xpose.msra.mxu0 %v6082
      %6137 = vmatpush.xpose.msra.mxu0 %v6079
      %6138 = vmatpush.xpose.msra.mxu0 %v6076
      %6139 = vmatpush.xpose.msra.mxu0 %v6073
      %6140 = vmatpush.xpose.msra.mxu0 %v6070
      %6141 = vmatpush.xpose.msra.mxu0 %v6067
      %6142 = vmatpush.xpose.msra.mxu0 %v6064
      %6143 = vmatpush.xpose.msra.mxu0 %v6061
      %6144 = vmatmul.f32.gmra.mxu0 %v6010
      %v6145 = vpop.f32.mrf.mxu0
      %v6146 = vadd.f32 0.0, %v6145
      %6147 = vdwg.mxu0
      %v6148 = vadd.f32 %v5941, %v6126
      %v6149 = vadd.f32 %v5942, %v6146
      %v6150 = vld [vmem:[%s8] sm:$0xff]
      %6152 = vset.pattern.permute.xlu0 0
      %6153 = vperm.xlu0 %6152, %v6150
      %v6154 = vpop.permute.xlu0 %6153
      %v6156 = vmul.f32 %v6148, %v6154
      %v6157 = vmul.f32 %v6149, %v6154
      %v6158 = vld [vmem:[%s9] sm:$0xff]
      %6160 = vset.pattern.permute.xlu0 0
      %6161 = vperm.xlu0 %6160, %v6158
      %v6162 = vpop.permute.xlu0 %6161
      %v6164 = vadd.f32 %v6156, %v6162
      %v6165 = vadd.f32 %v6157, %v6162
      %v6166 = vmax.f32 %v6164, 0.0
      %v6167 = vmax.f32 %v6165, 0.0
      %6168 = vst [vmem:[%s379] sm:$0xff] %v6166
      %6169 = vst [vmem:[%s379 + $0x8] sm:$0xff] %v6167
      %p6170 = scmp.lt.s32.totalorder %s21, 1
      %s6171 = scalar_select %p6170, %s21, 1
      %s6172 = smul.addr %s6171, 2
      %s6173 = smul.addr %s6172, 8
      %s6174 = scalar_lea.vmem %s10, %s6173
      // Predicated region
      $region61: #{upsample_forward.1} parent=59 // pred_check
        %p6175 = pneg %p259
      $region62: #{upsample_forward.1} parent=59 // pred_check_branch
        %6177 = sbr.rel (%p6175) target = $region64
      $region63: #{upsample_forward.1} parent=59 // pred_region
        _
      $region64: #{upsample_forward.1} parent=59 // pred_fallthru
        _
    $region60: #{upsample_forward.1} parent=5 // pred_fallthru
      _
    %p6178 = scmp.le.s32.totalorder 2, %s16
    // Predicated region
    $region65: #{upsample_forward.1} parent=5 // pred_check
      %p6179 = pneg %p6178
    $region66: #{upsample_forward.1} parent=5 // pred_check_branch
      %6181 = sbr.rel (%p6179) target = $region68
    $region67: #{upsample_forward.1} parent=5 // pred_region
      %s6182 = ssub.s32 %s16, 2
      // Predicated region
      $region69: #{upsample_forward.1} parent=67 // pred_check
        %p6183 = pneg %p265
      $region70: #{upsample_forward.1} parent=67 // pred_check_branch
        %6185 = sbr.rel (%p6183) target = $region72
      $region71: #{upsample_forward.1} parent=67 // pred_region
        %p6186 = scmp.lt.s32.totalorder %s22, 1
        %s6187 = scalar_select %p6186, %s22, 1
        %s6188 = smul.addr %s6187, 2
        %s6189 = smul.addr %s6188, 8
        %s6190 = scalar_lea.vmem %s10, %s6189
      $region72: #{upsample_forward.1} parent=67 // pred_fallthru
        _
    $region68: #{upsample_forward.1} parent=5 // pred_fallthru
      _
  $region6: #{upsample_forward.1} parent=0 // loop_footer
    %s20 = sadd.s32 1, %s16
  $region7: #{upsample_forward.1} parent=0 // loop_footer_branch
    %15 = sbr.rel target = $region3
  $region8: #{upsample_forward.1} parent=0 // loop_exit
    _

</llo_original>
